<compile_context>
chip_gen: v7x
topology: tpu7x:2x2x1
jax: 0.10.0
libtpu: 0.0.40
codegen_flags: <defaults>
</compile_context>

<pallas_src>
import jax
import jax.numpy as jnp
from jax.experimental import pallas as pl
from jax.experimental.pallas import tpu as pltpu


def _cnn1d_kernel(x_ref, w1_ref, t1_ref, w2_ref, t2_ref, w3_ref, t3_ref,
                  fc1w_ref, fc1b_ref, outw_ref, outb_ref,
                  o_ref, p2_ref, p3_ref):
    f32 = jnp.float32
    bf16 = jnp.bfloat16

    TB = x_ref.shape[0]
    L = x_ref.shape[1] - 2                      # wrapper pre-pads length by 1 on each side
    L1, L2, L3 = L // 2, L // 4, L // 8

    # ---------- layer 1: Conv1d(1->32, k=3, p=1) + folded BN + ReLU + MaxPool(2) ----------
    # Cin == 1 -> pure VPU broadcast multiplies.
    xp = x_ref[...].reshape(TB, L + 2, 1)       # channels-last; borders already zero
    w1 = w1_ref[...]                            # (3, 32) f32, BN scale folded in
    C1 = w1.shape[1]
    y = (xp[:, 0:L, :]       * w1[0:1, :].reshape(1, 1, C1)
         + xp[:, 1:L + 1, :] * w1[1:2, :].reshape(1, 1, C1)
         + xp[:, 2:L + 2, :] * w1[2:3, :].reshape(1, 1, C1)
         + t1_ref[...].reshape(1, 1, C1))
    y = jnp.maximum(y, 0.0)
    r = y.reshape(TB, L1, 2, C1)
    h = jnp.maximum(r[:, :, 0:1, :], r[:, :, 1:2, :]).reshape(TB, L1, C1)

    # pooled activations go straight into a zero-padded scratch (border rows = conv padding)
    p2_ref[:, 0:1, :] = jnp.zeros((TB, 1, C1), f32)
    p2_ref[:, L1 + 1:L1 + 2, :] = jnp.zeros((TB, 1, C1), f32)
    p2_ref[:, 1:L1 + 1, :] = h

    def conv_bn_relu_pool(pad_ref, Lk, w_ref, t_ref):
        cin = pad_ref.shape[2]
        cout = w_ref.shape[1]
        # im2col from three static shifted views of the padded scratch -> one fused MXU matmul.
        # Cast each slice to bf16 before the lane-axis concat (half the cross-lane traffic).
        xcol = jnp.concatenate([pad_ref[:, 0:Lk, :].astype(bf16),
                                pad_ref[:, 1:Lk + 1, :].astype(bf16),
                                pad_ref[:, 2:Lk + 2, :].astype(bf16)],
                               axis=-1)                                      # (TB, Lk, 3*cin)
        yk = jnp.dot(xcol.reshape(TB * Lk, 3 * cin), w_ref[...],
                     preferred_element_type=f32).reshape(TB, Lk, cout)
        yk = jnp.maximum(yk + t_ref[...].reshape(1, 1, cout), 0.0)
        rk = yk.reshape(TB, Lk // 2, 2, cout)
        return jnp.maximum(rk[:, :, 0:1, :], rk[:, :, 1:2, :]).reshape(TB, Lk // 2, cout)

    # ---------- layer 2: Conv1d(32->64) + BN + ReLU + MaxPool ----------
    h = conv_bn_relu_pool(p2_ref, L1, w2_ref, t2_ref)                        # (TB, L2, 64)
    C2 = h.shape[2]
    p3_ref[:, 0:1, :] = jnp.zeros((TB, 1, C2), f32)
    p3_ref[:, L2 + 1:L2 + 2, :] = jnp.zeros((TB, 1, C2), f32)
    p3_ref[:, 1:L2 + 1, :] = h

    # ---------- layer 3: Conv1d(64->128) + BN + ReLU + MaxPool ----------
    h = conv_bn_relu_pool(p3_ref, L2, w3_ref, t3_ref)                        # (TB, L3, 128)
    C3 = h.shape[2]

    # ---------- fc1: contract over (L3, 128) without flattening ----------
    # Seed the accumulator with the bias (saves one add pass).
    z = jnp.broadcast_to(fc1b_ref[...], (TB, fc1b_ref.shape[1])).astype(f32)
    for l in range(L3):                                                      # static, small
        hl = h[:, l:l + 1, :].reshape(TB, C3).astype(bf16)
        z = z + jnp.dot(hl, fc1w_ref[l], preferred_element_type=f32)
    z = jnp.maximum(z, 0.0)                                                  # (TB, 64)
    # TODO(synk): Dropout(p=0.3) is identity in inference mode; training-mode masking not implemented.

    # ---------- out: classes lane-padded to 128 so the final store is lane-dense ----------
    o_ref[...] = jnp.dot(z.astype(bf16), outw_ref[...],
                         preferred_element_type=f32) + outb_ref[...]


def _pick_batch_tile(B):
    return 8 if B % 8 == 0 else B


def cnn1d_forward(x, params, num_classes):
    """x: (B, input_dim) float32.  params: kernel-layout arrays from make_params."""
    B, L = x.shape
    assert L % 8 == 0, "input_dim must be divisible by 8 (three /2 maxpools)"
    TB = _pick_batch_tile(B)
    L1, L2 = L // 2, L // 4
    C1 = params["w1"].shape[1]
    C2 = params["t2"].shape[1]
    NP = params["out_w"].shape[1]                       # lane-padded class count (128)

    xp = jnp.pad(x, ((0, 0), (1, 1)))                   # zero padding for conv1 (padding=1)

    args = (xp,
            params["w1"], params["t1"],
            params["w2"], params["t2"],
            params["w3"], params["t3"],
            params["fc1_w"], params["fc1_b"],
            params["out_w"], params["out_b"])

    in_specs = [pl.BlockSpec((TB, L + 2), lambda b: (b, 0))]
    # weights: full-array blocks, constant index_map -> fetched once, replicated across the grid
    in_specs += [pl.BlockSpec(a.shape, lambda b, n=a.ndim: (0,) * n) for a in args[1:]]

    grid_spec = pltpu.PrefetchScalarGridSpec(
        num_scalar_prefetch=0,
        grid=(B // TB,),
        in_specs=in_specs,
        out_specs=pl.BlockSpec((TB, NP), lambda b: (b, 0)),
        scratch_shapes=[pltpu.VMEM((TB, L1 + 2, C1), jnp.float32),   # padded layer-2 input
                        pltpu.VMEM((TB, L2 + 2, C2), jnp.float32)])  # padded layer-3 input

    out = pl.pallas_call(
        _cnn1d_kernel,
        out_shape=jax.ShapeDtypeStruct((B, NP), jnp.float32),
        grid_spec=grid_spec,
        compiler_params=pltpu.CompilerParams(
            dimension_semantics=("parallel",),          # batch axis -> megacore sharding
            vmem_limit_bytes=32 * 1024 * 1024),         # double-buffered tiles + headroom, v7x-safe
    )(*args)
    return out[:, :num_classes]


def make_params(key, input_dim, num_classes=1):
    """Deterministic synthetic params: PyTorch layout (for the reference) + kernel layout."""
    ks = jax.random.split(key, 32)
    eps = 1e-5
    p_torch = {}

    def conv_layer(i, cin, cout, k0):
        w = jax.random.normal(ks[k0], (cout, cin, 3), jnp.float32) * 0.1      # PyTorch (Cout,Cin,K)
        b = jax.random.normal(ks[k0 + 1], (cout,), jnp.float32) * 0.1
        g = 1.0 + 0.1 * jax.random.normal(ks[k0 + 2], (cout,), jnp.float32)   # bn gamma
        beta = 0.1 * jax.random.normal(ks[k0 + 3], (cout,), jnp.float32)      # bn beta
        mean = 0.1 * jax.random.normal(ks[k0 + 4], (cout,), jnp.float32)      # running_mean
        var = jax.random.uniform(ks[k0 + 5], (cout,), jnp.float32, 0.5, 1.5)  # running_var
        p_torch[f"conv{i}"] = (w, b, g, beta, mean, var)

    conv_layer(1, 1, 32, 0)
    conv_layer(2, 32, 64, 6)
    conv_layer(3, 64, 128, 12)

    Lp = input_dim // 8
    C = 128
    fc1_w = jax.random.normal(ks[18], (64, C * Lp), jnp.float32) * 0.05       # PyTorch (out,in)
    fc1_b = jax.random.normal(ks[19], (64,), jnp.float32) * 0.05
    out_w = jax.random.normal(ks[20], (num_classes, 64), jnp.float32) * 0.05
    out_b = jax.random.normal(ks[21], (num_classes,), jnp.float32) * 0.05
    p_torch["fc1"] = (fc1_w, fc1_b)
    p_torch["out"] = (out_w, out_b)

    # ---- convert to kernel layout (BN folded, bf16 matmul weights, lane-padded classes) ----
    pk = {}
    for i, cin in ((1, 1), (2, 32), (3, 64)):
        w, b, g, beta, mean, var = p_torch[f"conv{i}"]
        scale = g / jnp.sqrt(var + eps)                                       # (Cout,)
        wf = w * scale[:, None, None]                                         # fold BN into conv
        tf = (b - mean) * scale + beta                                        # folded bias/shift
        wk = jnp.transpose(wf, (2, 1, 0))                                     # (3, Cin, Cout)
        if i == 1:
            pk["w1"] = wk.reshape(3, -1)                                      # (3, 32) f32 (VPU)
        else:
            pk[f"w{i}"] = wk.reshape(3 * cin, -1).astype(jnp.bfloat16)        # (3*Cin, Cout)
        pk[f"t{i}"] = tf.reshape(1, -1)                                       # f32
    # PyTorch flatten index = c*Lp + l; kernel contracts (l, c) directly -> (Lp, C, 64) weight.
    pk["fc1_w"] = jnp.transpose(fc1_w.reshape(64, C, Lp), (2, 1, 0)).astype(jnp.bfloat16)
    pk["fc1_b"] = fc1_b.reshape(1, -1)
    NP = max(128, ((num_classes + 127) // 128) * 128)                         # lane-dense output
    pk["out_w"] = (jnp.zeros((64, NP), jnp.float32)
                   .at[:, :num_classes].set(out_w.T)).astype(jnp.bfloat16)
    pk["out_b"] = jnp.zeros((1, NP), jnp.float32).at[:, :num_classes].set(out_b.reshape(1, -1))
    return p_torch, pk


def torch_semantics_ref(x, p_torch):
    """Pure-JAX reference following PyTorch NCW semantics exactly (eval mode, f32)."""
    eps = 1e-5
    h = x[:, None, :]                                         # (B, 1, L)
    for i in (1, 2, 3):
        w, b, g, beta, mean, var = p_torch[f"conv{i}"]
        y = jax.lax.conv_general_dilated(
            h, w, window_strides=(1,), padding=((1, 1),),
            dimension_numbers=("NCH", "OIH", "NCH"))
        y = y + b[None, :, None]
        y = (y - mean[None, :, None]) / jnp.sqrt(var[None, :, None] + eps)
        y = y * g[None, :, None] + beta[None, :, None]
        y = jnp.maximum(y, 0.0)
        B_, C_, Lh = y.shape
        h = jnp.max(y.reshape(B_, C_, Lh // 2, 2), axis=3)
    hf = h.reshape(h.shape[0], -1)                            # channel-major flatten
    fc1_w, fc1_b = p_torch["fc1"]
    out_w, out_b = p_torch["out"]
    z = jnp.maximum(hf @ fc1_w.T + fc1_b, 0.0)
    return z @ out_w.T + out_b


if __name__ == "__main__":
    B, INPUT_DIM, NUM_CLASSES = 16, 16, 1
    key = jax.random.PRNGKey(0)
    kx, kp = jax.random.split(key)
    x = jax.random.normal(kx, (B, INPUT_DIM), jnp.float32)

    p_torch, p_kernel = make_params(kp, INPUT_DIM, NUM_CLASSES)

    y = cnn1d_forward(x, p_kernel, NUM_CLASSES)
    y = jax.block_until_ready(y)

    y_ref = torch_semantics_ref(x, p_torch)
    assert y.shape == (B, NUM_CLASSES)
    max_err = float(jnp.max(jnp.abs(y - y_ref)))
    # bf16 MXU matmuls with f32 accumulation -> compare with a bf16-appropriate tolerance
    assert jnp.allclose(y, y_ref, atol=2e-2, rtol=2e-2), (max_err, y, y_ref)

    print("KERNEL_OK")
</pallas_src>

<mosaic_0001>
module attributes {stable_mosaic.version = 11 : i64} {
  func.func @_cnn1d_kernel(%arg0: i32, %arg1: memref<8x18xf32, #tpu.memory_space<vmem>>, %arg2: memref<3x32xf32, #tpu.memory_space<vmem>>, %arg3: memref<1x32xf32, #tpu.memory_space<vmem>>, %arg4: memref<96x64xbf16, #tpu.memory_space<vmem>>, %arg5: memref<1x64xf32, #tpu.memory_space<vmem>>, %arg6: memref<192x128xbf16, #tpu.memory_space<vmem>>, %arg7: memref<1x128xf32, #tpu.memory_space<vmem>>, %arg8: memref<2x128x64xbf16, #tpu.memory_space<vmem>>, %arg9: memref<1x64xf32, #tpu.memory_space<vmem>>, %arg10: memref<64x128xbf16, #tpu.memory_space<vmem>>, %arg11: memref<1x128xf32, #tpu.memory_space<vmem>>, %arg12: memref<8x128xf32, #tpu.memory_space<vmem>>, %arg13: memref<8x10x32xf32, #tpu.memory_space<vmem>>, %arg14: memref<8x6x64xf32, #tpu.memory_space<vmem>>) attributes {dimension_semantics = [#tpu.dimension_semantics<parallel>], iteration_bounds = array<i64: 2>, scalar_prefetch = 0 : i64, scratch_operands = 2 : i64, tpu.core_type = #tpu.core_type<tc>, window_params = [{transform_indices = @transform_0, window_bounds = array<i64: 8, 18>}, {pipeline_mode = #tpu.pipeline_mode<synchronous>, transform_indices = @transform_1, window_bounds = array<i64: 3, 32>}, {pipeline_mode = #tpu.pipeline_mode<synchronous>, transform_indices = @transform_2, window_bounds = array<i64: 1, 32>}, {pipeline_mode = #tpu.pipeline_mode<synchronous>, transform_indices = @transform_3, window_bounds = array<i64: 96, 64>}, {pipeline_mode = #tpu.pipeline_mode<synchronous>, transform_indices = @transform_4, window_bounds = array<i64: 1, 64>}, {pipeline_mode = #tpu.pipeline_mode<synchronous>, transform_indices = @transform_5, window_bounds = array<i64: 192, 128>}, {pipeline_mode = #tpu.pipeline_mode<synchronous>, transform_indices = @transform_6, window_bounds = array<i64: 1, 128>}, {pipeline_mode = #tpu.pipeline_mode<synchronous>, transform_indices = @transform_7, window_bounds = array<i64: 2, 128, 64>}, {pipeline_mode = #tpu.pipeline_mode<synchronous>, transform_indices = @transform_8, window_bounds = array<i64: 1, 64>}, {pipeline_mode = #tpu.pipeline_mode<synchronous>, transform_indices = @transform_9, window_bounds = array<i64: 64, 128>}, {pipeline_mode = #tpu.pipeline_mode<synchronous>, transform_indices = @transform_10, window_bounds = array<i64: 1, 128>}, {transform_indices = @transform_11, window_bounds = array<i64: 8, 128>}]} {
    %c0 = arith.constant 0 : index
    %c0_0 = arith.constant 0 : index
    %0 = vector.load %arg1[%c0, %c0_0] : memref<8x18xf32, #tpu.memory_space<vmem>>, vector<8x18xf32>
    %1 = vector.shape_cast %0 : vector<8x18xf32> to vector<8x18x1xf32>
    %c0_1 = arith.constant 0 : index
    %c0_2 = arith.constant 0 : index
    %2 = vector.load %arg2[%c0_1, %c0_2] : memref<3x32xf32, #tpu.memory_space<vmem>>, vector<3x32xf32>
    %3 = vector.extract_strided_slice %1 {offsets = [0, 0, 0], sizes = [8, 16, 1], strides = [1, 1, 1]} : vector<8x18x1xf32> to vector<8x16x1xf32>
    %4 = vector.extract_strided_slice %2 {offsets = [0, 0], sizes = [1, 32], strides = [1, 1]} : vector<3x32xf32> to vector<1x32xf32>
    %5 = vector.shape_cast %4 : vector<1x32xf32> to vector<1x1x32xf32>
    %6 = vector.broadcast %3 : vector<8x16x1xf32> to vector<8x16x32xf32>
    %7 = vector.broadcast %5 : vector<1x1x32xf32> to vector<8x16x32xf32>
    %8 = arith.mulf %6, %7 : vector<8x16x32xf32>
    %9 = vector.extract_strided_slice %1 {offsets = [0, 1, 0], sizes = [8, 16, 1], strides = [1, 1, 1]} : vector<8x18x1xf32> to vector<8x16x1xf32>
    %10 = vector.extract_strided_slice %2 {offsets = [1, 0], sizes = [1, 32], strides = [1, 1]} : vector<3x32xf32> to vector<1x32xf32>
    %11 = vector.shape_cast %10 : vector<1x32xf32> to vector<1x1x32xf32>
    %12 = vector.broadcast %9 : vector<8x16x1xf32> to vector<8x16x32xf32>
    %13 = vector.broadcast %11 : vector<1x1x32xf32> to vector<8x16x32xf32>
    %14 = arith.mulf %12, %13 : vector<8x16x32xf32>
    %15 = arith.addf %8, %14 : vector<8x16x32xf32>
    %16 = vector.extract_strided_slice %1 {offsets = [0, 2, 0], sizes = [8, 16, 1], strides = [1, 1, 1]} : vector<8x18x1xf32> to vector<8x16x1xf32>
    %17 = vector.extract_strided_slice %2 {offsets = [2, 0], sizes = [1, 32], strides = [1, 1]} : vector<3x32xf32> to vector<1x32xf32>
    %18 = vector.shape_cast %17 : vector<1x32xf32> to vector<1x1x32xf32>
    %19 = vector.broadcast %16 : vector<8x16x1xf32> to vector<8x16x32xf32>
    %20 = vector.broadcast %18 : vector<1x1x32xf32> to vector<8x16x32xf32>
    %21 = arith.mulf %19, %20 : vector<8x16x32xf32>
    %22 = arith.addf %15, %21 : vector<8x16x32xf32>
    %c0_3 = arith.constant 0 : index
    %c0_4 = arith.constant 0 : index
    %23 = vector.load %arg3[%c0_3, %c0_4] : memref<1x32xf32, #tpu.memory_space<vmem>>, vector<1x32xf32>
    %24 = vector.shape_cast %23 : vector<1x32xf32> to vector<1x1x32xf32>
    %25 = vector.broadcast %24 : vector<1x1x32xf32> to vector<8x16x32xf32>
    %26 = arith.addf %22, %25 : vector<8x16x32xf32>
    %cst = arith.constant 0.000000e+00 : f32
    %27 = vector.broadcast %cst : f32 to vector<8x16x32xf32>
    %28 = arith.maximumf %26, %27 : vector<8x16x32xf32>
    %29 = vector.shape_cast %28 : vector<8x16x32xf32> to vector<8x8x2x32xf32>
    %30 = vector.extract_strided_slice %29 {offsets = [0, 0, 0, 0], sizes = [8, 8, 1, 32], strides = [1, 1, 1, 1]} : vector<8x8x2x32xf32> to vector<8x8x1x32xf32>
    %31 = vector.extract_strided_slice %29 {offsets = [0, 0, 1, 0], sizes = [8, 8, 1, 32], strides = [1, 1, 1, 1]} : vector<8x8x2x32xf32> to vector<8x8x1x32xf32>
    %32 = arith.maximumf %30, %31 : vector<8x8x1x32xf32>
    %33 = vector.shape_cast %32 : vector<8x8x1x32xf32> to vector<8x8x32xf32>
    %cst_5 = arith.constant 0.000000e+00 : f32
    %34 = vector.broadcast %cst_5 : f32 to vector<8x1x32xf32>
    %c0_6 = arith.constant 0 : index
    %c0_7 = arith.constant 0 : index
    %c0_8 = arith.constant 0 : index
    %35 = vector.load %arg13[%c0_6, %c0_7, %c0_8] : memref<8x10x32xf32, #tpu.memory_space<vmem>>, vector<8x1x32xf32>
    tpu.vector_store %arg13[%c0_6, %c0_7, %c0_8], %34 {strides = array<i32>} : memref<8x10x32xf32, #tpu.memory_space<vmem>>, vector<8x1x32xf32>,
    %cst_9 = arith.constant 0.000000e+00 : f32
    %36 = vector.broadcast %cst_9 : f32 to vector<8x1x32xf32>
    %c0_10 = arith.constant 0 : index
    %c9 = arith.constant 9 : index
    %c0_11 = arith.constant 0 : index
    %37 = vector.load %arg13[%c0_10, %c9, %c0_11] : memref<8x10x32xf32, #tpu.memory_space<vmem>>, vector<8x1x32xf32>
    tpu.vector_store %arg13[%c0_10, %c9, %c0_11], %36 {strides = array<i32>} : memref<8x10x32xf32, #tpu.memory_space<vmem>>, vector<8x1x32xf32>,
    %c0_12 = arith.constant 0 : index
    %c1 = arith.constant 1 : index
    %c0_13 = arith.constant 0 : index
    %38 = vector.load %arg13[%c0_12, %c1, %c0_13] : memref<8x10x32xf32, #tpu.memory_space<vmem>>, vector<8x8x32xf32>
    tpu.vector_store %arg13[%c0_12, %c1, %c0_13], %33 {strides = array<i32>} : memref<8x10x32xf32, #tpu.memory_space<vmem>>, vector<8x8x32xf32>,
    %c0_14 = arith.constant 0 : index
    %c0_15 = arith.constant 0 : index
    %c0_16 = arith.constant 0 : index
    %39 = vector.load %arg13[%c0_14, %c0_15, %c0_16] : memref<8x10x32xf32, #tpu.memory_space<vmem>>, vector<8x8x32xf32>
    %40 = arith.truncf %39 : vector<8x8x32xf32> to vector<8x8x32xbf16>
    %c0_17 = arith.constant 0 : index
    %c1_18 = arith.constant 1 : index
    %c0_19 = arith.constant 0 : index
    %41 = vector.load %arg13[%c0_17, %c1_18, %c0_19] : memref<8x10x32xf32, #tpu.memory_space<vmem>>, vector<8x8x32xf32>
    %42 = arith.truncf %41 : vector<8x8x32xf32> to vector<8x8x32xbf16>
    %c0_20 = arith.constant 0 : index
    %c2 = arith.constant 2 : index
    %c0_21 = arith.constant 0 : index
    %43 = vector.load %arg13[%c0_20, %c2, %c0_21] : memref<8x10x32xf32, #tpu.memory_space<vmem>>, vector<8x8x32xf32>
    %44 = arith.truncf %43 : vector<8x8x32xf32> to vector<8x8x32xbf16>
    %45 = tpu.concatenate %40, %42, %44 in 2 : vector<8x8x32xbf16>, vector<8x8x32xbf16>, vector<8x8x32xbf16> -> vector<8x8x96xbf16>
    %46 = vector.shape_cast %45 : vector<8x8x96xbf16> to vector<64x96xbf16>
    %c0_22 = arith.constant 0 : index
    %c0_23 = arith.constant 0 : index
    %47 = vector.load %arg4[%c0_22, %c0_23] : memref<96x64xbf16, #tpu.memory_space<vmem>>, vector<96x64xbf16>
    %cst_24 = arith.constant dense<0.000000e+00> : vector<64x64xf32>
    %48 = tpu.matmul %46, %47, %cst_24 {dimension_numbers = #tpu.dot_dimension_numbers<[1], [0], [0], [1], [0, 0, 1, 1], [], []>} : vector<64x96xbf16>, vector<96x64xbf16>, vector<64x64xf32> -> vector<64x64xf32>
    %49 = vector.shape_cast %48 : vector<64x64xf32> to vector<8x8x64xf32>
    %c0_25 = arith.constant 0 : index
    %c0_26 = arith.constant 0 : index
    %50 = vector.load %arg5[%c0_25, %c0_26] : memref<1x64xf32, #tpu.memory_space<vmem>>, vector<1x64xf32>
    %51 = vector.shape_cast %50 : vector<1x64xf32> to vector<1x1x64xf32>
    %52 = vector.broadcast %51 : vector<1x1x64xf32> to vector<8x8x64xf32>
    %53 = arith.addf %49, %52 : vector<8x8x64xf32>
    %cst_27 = arith.constant 0.000000e+00 : f32
    %54 = vector.broadcast %cst_27 : f32 to vector<8x8x64xf32>
    %55 = arith.maximumf %53, %54 : vector<8x8x64xf32>
    %56 = vector.shape_cast %55 : vector<8x8x64xf32> to vector<8x4x2x64xf32>
    %57 = vector.extract_strided_slice %56 {offsets = [0, 0, 0, 0], sizes = [8, 4, 1, 64], strides = [1, 1, 1, 1]} : vector<8x4x2x64xf32> to vector<8x4x1x64xf32>
    %58 = vector.extract_strided_slice %56 {offsets = [0, 0, 1, 0], sizes = [8, 4, 1, 64], strides = [1, 1, 1, 1]} : vector<8x4x2x64xf32> to vector<8x4x1x64xf32>
    %59 = arith.maximumf %57, %58 : vector<8x4x1x64xf32>
    %60 = vector.shape_cast %59 : vector<8x4x1x64xf32> to vector<8x4x64xf32>
    %cst_28 = arith.constant 0.000000e+00 : f32
    %61 = vector.broadcast %cst_28 : f32 to vector<8x1x64xf32>
    %c0_29 = arith.constant 0 : index
    %c0_30 = arith.constant 0 : index
    %c0_31 = arith.constant 0 : index
    %62 = vector.load %arg14[%c0_29, %c0_30, %c0_31] : memref<8x6x64xf32, #tpu.memory_space<vmem>>, vector<8x1x64xf32>
    tpu.vector_store %arg14[%c0_29, %c0_30, %c0_31], %61 {strides = array<i32>} : memref<8x6x64xf32, #tpu.memory_space<vmem>>, vector<8x1x64xf32>,
    %cst_32 = arith.constant 0.000000e+00 : f32
    %63 = vector.broadcast %cst_32 : f32 to vector<8x1x64xf32>
    %c0_33 = arith.constant 0 : index
    %c5 = arith.constant 5 : index
    %c0_34 = arith.constant 0 : index
    %64 = vector.load %arg14[%c0_33, %c5, %c0_34] : memref<8x6x64xf32, #tpu.memory_space<vmem>>, vector<8x1x64xf32>
    tpu.vector_store %arg14[%c0_33, %c5, %c0_34], %63 {strides = array<i32>} : memref<8x6x64xf32, #tpu.memory_space<vmem>>, vector<8x1x64xf32>,
    %c0_35 = arith.constant 0 : index
    %c1_36 = arith.constant 1 : index
    %c0_37 = arith.constant 0 : index
    %65 = vector.load %arg14[%c0_35, %c1_36, %c0_37] : memref<8x6x64xf32, #tpu.memory_space<vmem>>, vector<8x4x64xf32>
    tpu.vector_store %arg14[%c0_35, %c1_36, %c0_37], %60 {strides = array<i32>} : memref<8x6x64xf32, #tpu.memory_space<vmem>>, vector<8x4x64xf32>,
    %c0_38 = arith.constant 0 : index
    %c0_39 = arith.constant 0 : index
    %c0_40 = arith.constant 0 : index
    %66 = vector.load %arg14[%c0_38, %c0_39, %c0_40] : memref<8x6x64xf32, #tpu.memory_space<vmem>>, vector<8x4x64xf32>
    %67 = arith.truncf %66 : vector<8x4x64xf32> to vector<8x4x64xbf16>
    %c0_41 = arith.constant 0 : index
    %c1_42 = arith.constant 1 : index
    %c0_43 = arith.constant 0 : index
    %68 = vector.load %arg14[%c0_41, %c1_42, %c0_43] : memref<8x6x64xf32, #tpu.memory_space<vmem>>, vector<8x4x64xf32>
    %69 = arith.truncf %68 : vector<8x4x64xf32> to vector<8x4x64xbf16>
    %c0_44 = arith.constant 0 : index
    %c2_45 = arith.constant 2 : index
    %c0_46 = arith.constant 0 : index
    %70 = vector.load %arg14[%c0_44, %c2_45, %c0_46] : memref<8x6x64xf32, #tpu.memory_space<vmem>>, vector<8x4x64xf32>
    %71 = arith.truncf %70 : vector<8x4x64xf32> to vector<8x4x64xbf16>
    %72 = tpu.concatenate %67, %69, %71 in 2 : vector<8x4x64xbf16>, vector<8x4x64xbf16>, vector<8x4x64xbf16> -> vector<8x4x192xbf16>
    %73 = vector.shape_cast %72 : vector<8x4x192xbf16> to vector<32x192xbf16>
    %c0_47 = arith.constant 0 : index
    %c0_48 = arith.constant 0 : index
    %74 = vector.load %arg6[%c0_47, %c0_48] : memref<192x128xbf16, #tpu.memory_space<vmem>>, vector<192x128xbf16>
    %cst_49 = arith.constant dense<0.000000e+00> : vector<32x128xf32>
    %75 = tpu.matmul %73, %74, %cst_49 {dimension_numbers = #tpu.dot_dimension_numbers<[1], [0], [0], [1], [0, 0, 1, 1], [], []>} : vector<32x192xbf16>, vector<192x128xbf16>, vector<32x128xf32> -> vector<32x128xf32>
    %76 = vector.shape_cast %75 : vector<32x128xf32> to vector<8x4x128xf32>
    %c0_50 = arith.constant 0 : index
    %c0_51 = arith.constant 0 : index
    %77 = vector.load %arg7[%c0_50, %c0_51] : memref<1x128xf32, #tpu.memory_space<vmem>>, vector<1x128xf32>
    %78 = vector.shape_cast %77 : vector<1x128xf32> to vector<1x1x128xf32>
    %79 = vector.broadcast %78 : vector<1x1x128xf32> to vector<8x4x128xf32>
    %80 = arith.addf %76, %79 : vector<8x4x128xf32>
    %cst_52 = arith.constant 0.000000e+00 : f32
    %81 = vector.broadcast %cst_52 : f32 to vector<8x4x128xf32>
    %82 = arith.maximumf %80, %81 : vector<8x4x128xf32>
    %83 = vector.shape_cast %82 : vector<8x4x128xf32> to vector<8x2x2x128xf32>
    %84 = vector.extract_strided_slice %83 {offsets = [0, 0, 0, 0], sizes = [8, 2, 1, 128], strides = [1, 1, 1, 1]} : vector<8x2x2x128xf32> to vector<8x2x1x128xf32>
    %85 = vector.extract_strided_slice %83 {offsets = [0, 0, 1, 0], sizes = [8, 2, 1, 128], strides = [1, 1, 1, 1]} : vector<8x2x2x128xf32> to vector<8x2x1x128xf32>
    %86 = arith.maximumf %84, %85 : vector<8x2x1x128xf32>
    %87 = vector.shape_cast %86 : vector<8x2x1x128xf32> to vector<8x2x128xf32>
    %c0_53 = arith.constant 0 : index
    %c0_54 = arith.constant 0 : index
    %88 = vector.load %arg9[%c0_53, %c0_54] : memref<1x64xf32, #tpu.memory_space<vmem>>, vector<1x64xf32>
    %89 = vector.shape_cast %88 : vector<1x64xf32> to vector<1x64xf32>
    %90 = vector.broadcast %89 : vector<1x64xf32> to vector<8x64xf32>
    %91 = vector.extract_strided_slice %87 {offsets = [0, 0, 0], sizes = [8, 1, 128], strides = [1, 1, 1]} : vector<8x2x128xf32> to vector<8x1x128xf32>
    %92 = vector.shape_cast %91 : vector<8x1x128xf32> to vector<8x128xf32>
    %93 = arith.truncf %92 : vector<8x128xf32> to vector<8x128xbf16>
    %c0_55 = arith.constant 0 : index
    %c0_56 = arith.constant 0 : index
    %c0_57 = arith.constant 0 : index
    %94 = vector.load %arg8[%c0_55, %c0_56, %c0_57] : memref<2x128x64xbf16, #tpu.memory_space<vmem>>, vector<1x128x64xbf16>
    %95 = vector.shape_cast %94 : vector<1x128x64xbf16> to vector<128x64xbf16>
    %cst_58 = arith.constant dense<0.000000e+00> : vector<8x64xf32>
    %96 = tpu.matmul %93, %95, %cst_58 {dimension_numbers = #tpu.dot_dimension_numbers<[1], [0], [0], [1], [0, 0, 1, 1], [], []>} : vector<8x128xbf16>, vector<128x64xbf16>, vector<8x64xf32> -> vector<8x64xf32>
    %97 = arith.addf %90, %96 : vector<8x64xf32>
    %98 = vector.extract_strided_slice %87 {offsets = [0, 1, 0], sizes = [8, 1, 128], strides = [1, 1, 1]} : vector<8x2x128xf32> to vector<8x1x128xf32>
    %99 = vector.shape_cast %98 : vector<8x1x128xf32> to vector<8x128xf32>
    %100 = arith.truncf %99 : vector<8x128xf32> to vector<8x128xbf16>
    %c1_59 = arith.constant 1 : index
    %c0_60 = arith.constant 0 : index
    %c0_61 = arith.constant 0 : index
    %101 = vector.load %arg8[%c1_59, %c0_60, %c0_61] : memref<2x128x64xbf16, #tpu.memory_space<vmem>>, vector<1x128x64xbf16>
    %102 = vector.shape_cast %101 : vector<1x128x64xbf16> to vector<128x64xbf16>
    %cst_62 = arith.constant dense<0.000000e+00> : vector<8x64xf32>
    %103 = tpu.matmul %100, %102, %cst_62 {dimension_numbers = #tpu.dot_dimension_numbers<[1], [0], [0], [1], [0, 0, 1, 1], [], []>} : vector<8x128xbf16>, vector<128x64xbf16>, vector<8x64xf32> -> vector<8x64xf32>
    %104 = arith.addf %97, %103 : vector<8x64xf32>
    %cst_63 = arith.constant 0.000000e+00 : f32
    %105 = vector.broadcast %cst_63 : f32 to vector<8x64xf32>
    %106 = arith.maximumf %104, %105 : vector<8x64xf32>
    %107 = arith.truncf %106 : vector<8x64xf32> to vector<8x64xbf16>
    %c0_64 = arith.constant 0 : index
    %c0_65 = arith.constant 0 : index
    %108 = vector.load %arg10[%c0_64, %c0_65] : memref<64x128xbf16, #tpu.memory_space<vmem>>, vector<64x128xbf16>
    %cst_66 = arith.constant dense<0.000000e+00> : vector<8x128xf32>
    %109 = tpu.matmul %107, %108, %cst_66 {dimension_numbers = #tpu.dot_dimension_numbers<[1], [0], [0], [1], [0, 0, 1, 1], [], []>} : vector<8x64xbf16>, vector<64x128xbf16>, vector<8x128xf32> -> vector<8x128xf32>
    %c0_67 = arith.constant 0 : index
    %c0_68 = arith.constant 0 : index
    %110 = vector.load %arg11[%c0_67, %c0_68] : memref<1x128xf32, #tpu.memory_space<vmem>>, vector<1x128xf32>
    %111 = vector.broadcast %110 : vector<1x128xf32> to vector<8x128xf32>
    %112 = arith.addf %109, %111 : vector<8x128xf32>
    %c0_69 = arith.constant 0 : index
    %c0_70 = arith.constant 0 : index
    %113 = vector.load %arg12[%c0_69, %c0_70] : memref<8x128xf32, #tpu.memory_space<vmem>>, vector<8x128xf32>
    tpu.vector_store %arg12[%c0_69, %c0_70], %112 {strides = array<i32>} : memref<8x128xf32, #tpu.memory_space<vmem>>, vector<8x128xf32>,
    return
  }
  func.func @transform_0(%arg0: i32) -> (i32, i32) {
    %c0_i32 = arith.constant 0 : i32
    %c0_i32_0 = arith.constant 0 : i32
    return %arg0, %c0_i32 : i32, i32
  }
  func.func @transform_1(%arg0: i32) -> (i32, i32) {
    %c0_i32 = arith.constant 0 : i32
    %c0_i32_0 = arith.constant 0 : i32
    %c0_i32_1 = arith.constant 0 : i32
    return %c0_i32, %c0_i32_0 : i32, i32
  }
  func.func @transform_2(%arg0: i32) -> (i32, i32) {
    %c0_i32 = arith.constant 0 : i32
    %c0_i32_0 = arith.constant 0 : i32
    %c0_i32_1 = arith.constant 0 : i32
    return %c0_i32, %c0_i32_0 : i32, i32
  }
  func.func @transform_3(%arg0: i32) -> (i32, i32) {
    %c0_i32 = arith.constant 0 : i32
    %c0_i32_0 = arith.constant 0 : i32
    %c0_i32_1 = arith.constant 0 : i32
    return %c0_i32, %c0_i32_0 : i32, i32
  }
  func.func @transform_4(%arg0: i32) -> (i32, i32) {
    %c0_i32 = arith.constant 0 : i32
    %c0_i32_0 = arith.constant 0 : i32
    %c0_i32_1 = arith.constant 0 : i32
    return %c0_i32, %c0_i32_0 : i32, i32
  }
  func.func @transform_5(%arg0: i32) -> (i32, i32) {
    %c0_i32 = arith.constant 0 : i32
    %c0_i32_0 = arith.constant 0 : i32
    %c0_i32_1 = arith.constant 0 : i32
    return %c0_i32, %c0_i32_0 : i32, i32
  }
  func.func @transform_6(%arg0: i32) -> (i32, i32) {
    %c0_i32 = arith.constant 0 : i32
    %c0_i32_0 = arith.constant 0 : i32
    %c0_i32_1 = arith.constant 0 : i32
    return %c0_i32, %c0_i32_0 : i32, i32
  }
  func.func @transform_7(%arg0: i32) -> (i32, i32, i32) {
    %c0_i32 = arith.constant 0 : i32
    %c0_i32_0 = arith.constant 0 : i32
    %c0_i32_1 = arith.constant 0 : i32
    %c0_i32_2 = arith.constant 0 : i32
    return %c0_i32, %c0_i32_0, %c0_i32_1 : i32, i32, i32
  }
  func.func @transform_8(%arg0: i32) -> (i32, i32) {
    %c0_i32 = arith.constant 0 : i32
    %c0_i32_0 = arith.constant 0 : i32
    %c0_i32_1 = arith.constant 0 : i32
    return %c0_i32, %c0_i32_0 : i32, i32
  }
  func.func @transform_9(%arg0: i32) -> (i32, i32) {
    %c0_i32 = arith.constant 0 : i32
    %c0_i32_0 = arith.constant 0 : i32
    %c0_i32_1 = arith.constant 0 : i32
    return %c0_i32, %c0_i32_0 : i32, i32
  }
  func.func @transform_10(%arg0: i32) -> (i32, i32) {
    %c0_i32 = arith.constant 0 : i32
    %c0_i32_0 = arith.constant 0 : i32
    %c0_i32_1 = arith.constant 0 : i32
    return %c0_i32, %c0_i32_0 : i32, i32
  }
  func.func @transform_11(%arg0: i32) -> (i32, i32) {
    %c0_i32 = arith.constant 0 : i32
    %c0_i32_0 = arith.constant 0 : i32
    return %arg0, %c0_i32 : i32, i32
  }
}

</mosaic_0001>

<llo_original>
// kernel: tpu_custom_call.1
$region0: #{tpu_custom_call.1}
  #allocation0 [shape = 'u32[]', space=smem, size = 0x4, offset = 0x4, fixed_abs, tag = 'smem constant byte address 0x4 - core index']
  #allocation1 [shape = 'u32[144,128]{1,0:T(1,128)}', space=vmem, size = 0x12000, scoped, tag = 'internal scratch']
  #allocation2 [shape = 'f32[8,10,32]{2,1,0:T(8,128)}', space=vmem, size = 0x10000, scoped, tag = 'scratch operand']
  #allocation3 [shape = 'f32[8,6,64]{2,1,0:T(8,128)}', space=vmem, size = 0x8000, scoped, tag = 'scratch operand']
  %s0 = inlined_call_operand.vmem [shape: f32[16,18], index: 0, kind: input, shape index: {}]
  %s1 = inlined_call_operand.vmem [shape: f32[3,32], index: 1, kind: input, shape index: {}]
  %s2 = inlined_call_operand.vmem [shape: f32[1,32], index: 2, kind: input, shape index: {}]
  %s3 = inlined_call_operand.vmem [shape: bf16[96,64], index: 3, kind: input, shape index: {}]
  %s4 = inlined_call_operand.vmem [shape: f32[1,64], index: 4, kind: input, shape index: {}]
  %s5 = inlined_call_operand.vmem [shape: bf16[192,128], index: 5, kind: input, shape index: {}]
  %s6 = inlined_call_operand.vmem [shape: f32[1,128], index: 6, kind: input, shape index: {}]
  %s7 = inlined_call_operand.vmem [shape: bf16[2,128,64], index: 7, kind: input, shape index: {}]
  %s8 = inlined_call_operand.vmem [shape: f32[1,64], index: 8, kind: input, shape index: {}]
  %s9 = inlined_call_operand.vmem [shape: bf16[64,128], index: 9, kind: input, shape index: {}]
  %s10 = inlined_call_operand.vmem [shape: f32[1,128], index: 10, kind: input, shape index: {}]
  %s11 = inlined_call_operand.hbm [shape: f32[16,128], index: 11, kind: output, shape index: {}]
  %s12 = sld [smem:[#allocation0]]
  $region77: #{tpu_custom_call.1} parent=0
    _
  %s14 = ssub.s32 1, %s12
  %s15 = scalar_select 0, %s14, %s12
  $region1: #{tpu_custom_call.1} parent=0
    #allocation4 [shape = 'u8[8192]{0}', space=vmem, size = 0x2000, scoped, tag = 'output window, operand 0']
    #allocation5 [shape = 's32[2]{0}', space=sflag, size = 0x8, scoped, tag = 'scoped memory for tpu_custom_call.1']
    %16 = vsyncpa [#allocation5], 0
    %s17 = scalar_lea.sflag [#allocation5], 1
    %18 = vsyncpa %s17, 0
    loop: start=0, step=1, limit=4
    $region2: #{tpu_custom_call.1} parent=1 // loop_pre_header
      _
    $region3: #{tpu_custom_call.1} parent=1 // loop_header
      %s20 = sphi 0, %s24
      %p21 = scmp.ge.s32.totalorder %s20, 4
      %s30 = sphi 0, %s32
      %s33 = sphi 0, %s30
      %s34 = sphi 0, %s33
      %s50 = sphi 0, %s34
      %s54 = sphi 0, %s54
      %s56 = sphi 0, %s54
      %s57 = sphi 0, %s56
      %s71 = sphi 0, %s57
      %s75 = sphi 0, %s75
      %s77 = sphi 0, %s75
      %s78 = sphi 0, %s77
      %s92 = sphi 0, %s78
      %s96 = sphi 0, %s96
      %s98 = sphi 0, %s96
      %s99 = sphi 0, %s98
      %s113 = sphi 0, %s99
      %s117 = sphi 0, %s117
      %s119 = sphi 0, %s117
      %s120 = sphi 0, %s119
      %s134 = sphi 0, %s120
      %s138 = sphi 0, %s138
      %s140 = sphi 0, %s138
      %s141 = sphi 0, %s140
      %s155 = sphi 0, %s141
      %s159 = sphi 0, %s159
      %s161 = sphi 0, %s159
      %s162 = sphi 0, %s161
      %s176 = sphi 0, %s162
      %s180 = sphi 0, %s180
      %s182 = sphi 0, %s180
      %s183 = sphi 0, %s182
      %s197 = sphi 0, %s183
      %s201 = sphi 0, %s201
      %s203 = sphi 0, %s201
      %s204 = sphi 0, %s203
      %s218 = sphi 0, %s204
      %s222 = sphi 0, %s222
      %s224 = sphi 0, %s222
      %s225 = sphi 0, %s224
      %s239 = sphi 0, %s225
      %s243 = sphi 0, %s243
      %s245 = sphi 0, %s243
      %s246 = sphi 0, %s245
      %s260 = sphi 0, %s246
      %s266 = sphi 0, %s268
      %s269 = sphi 0, %s266
      %s270 = sphi 0, %s269
      %s286 = sphi 0, %s270
    $region4: #{tpu_custom_call.1} parent=1 // loop_header_branch
      %23 = sbr.rel (%p21) target = $region8
    $region5: #{tpu_custom_call.1} parent=1 // loop_body
      %s25 = ssub.s32 %s20, 1
      %s26 = ssub.s32 %s20, 2
      %s27 = sadd.s32 %s20, 1
      %s28 = ssub.s32 %s20, %s27
      %p29 = scmp.eq.s32.totalorder %s28, 0
      %s31 = sadd.s32 %s30, 1
      %s32 = scalar_select %p29, %s30, %s31
      %p35 = pneg %p29
      %p36 = scmp.eq.s32.totalorder %s20, 1
      %p37 = por %p35, %p36
      %p38 = scmp.ne.s32.totalorder %s30, %s33
      %p39 = scmp.eq.s32.totalorder %s20, 0
      %p40 = por %p38, %p39
      %p41 = scmp.ne.s32.totalorder %s30, %s33
      %p42 = scmp.eq.s32.totalorder %s25, 1
      %p43 = por %p41, %p42
      %p44 = scmp.ne.s32.totalorder %s33, %s34
      %p45 = scmp.eq.s32.totalorder %s25, 0
      %p46 = por %p44, %p45
      %p47 = scmp.ne.s32.totalorder %s33, %s34
      %p48 = scmp.eq.s32.totalorder %s26, 1
      %p49 = por %p47, %p48
      %p51 = scmp.ne.s32.totalorder %s34, %s50
      %p52 = scmp.eq.s32.totalorder %s26, 0
      %p53 = por %p51, %p52
      %s55 = sadd.s32 %s54, 1
      %p58 = scmp.eq.s32.totalorder %s20, 1
      %p59 = scmp.ne.s32.totalorder %s54, %s56
      %p60 = scmp.eq.s32.totalorder %s20, 0
      %p61 = por %p59, %p60
      %p62 = scmp.ne.s32.totalorder %s54, %s56
      %p63 = scmp.eq.s32.totalorder %s25, 1
      %p64 = por %p62, %p63
      %p65 = scmp.ne.s32.totalorder %s56, %s57
      %p66 = scmp.eq.s32.totalorder %s25, 0
      %p67 = por %p65, %p66
      %p68 = scmp.ne.s32.totalorder %s56, %s57
      %p69 = scmp.eq.s32.totalorder %s26, 1
      %p70 = por %p68, %p69
      %p72 = scmp.ne.s32.totalorder %s57, %s71
      %p73 = scmp.eq.s32.totalorder %s26, 0
      %p74 = por %p72, %p73
      %s76 = sadd.s32 %s75, 1
      %p79 = scmp.eq.s32.totalorder %s20, 1
      %p80 = scmp.ne.s32.totalorder %s75, %s77
      %p81 = scmp.eq.s32.totalorder %s20, 0
      %p82 = por %p80, %p81
      %p83 = scmp.ne.s32.totalorder %s75, %s77
      %p84 = scmp.eq.s32.totalorder %s25, 1
      %p85 = por %p83, %p84
      %p86 = scmp.ne.s32.totalorder %s77, %s78
      %p87 = scmp.eq.s32.totalorder %s25, 0
      %p88 = por %p86, %p87
      %p89 = scmp.ne.s32.totalorder %s77, %s78
      %p90 = scmp.eq.s32.totalorder %s26, 1
      %p91 = por %p89, %p90
      %p93 = scmp.ne.s32.totalorder %s78, %s92
      %p94 = scmp.eq.s32.totalorder %s26, 0
      %p95 = por %p93, %p94
      %s97 = sadd.s32 %s96, 1
      %p100 = scmp.eq.s32.totalorder %s20, 1
      %p101 = scmp.ne.s32.totalorder %s96, %s98
      %p102 = scmp.eq.s32.totalorder %s20, 0
      %p103 = por %p101, %p102
      %p104 = scmp.ne.s32.totalorder %s96, %s98
      %p105 = scmp.eq.s32.totalorder %s25, 1
      %p106 = por %p104, %p105
      %p107 = scmp.ne.s32.totalorder %s98, %s99
      %p108 = scmp.eq.s32.totalorder %s25, 0
      %p109 = por %p107, %p108
      %p110 = scmp.ne.s32.totalorder %s98, %s99
      %p111 = scmp.eq.s32.totalorder %s26, 1
      %p112 = por %p110, %p111
      %p114 = scmp.ne.s32.totalorder %s99, %s113
      %p115 = scmp.eq.s32.totalorder %s26, 0
      %p116 = por %p114, %p115
      %s118 = sadd.s32 %s117, 1
      %p121 = scmp.eq.s32.totalorder %s20, 1
      %p122 = scmp.ne.s32.totalorder %s117, %s119
      %p123 = scmp.eq.s32.totalorder %s20, 0
      %p124 = por %p122, %p123
      %p125 = scmp.ne.s32.totalorder %s117, %s119
      %p126 = scmp.eq.s32.totalorder %s25, 1
      %p127 = por %p125, %p126
      %p128 = scmp.ne.s32.totalorder %s119, %s120
      %p129 = scmp.eq.s32.totalorder %s25, 0
      %p130 = por %p128, %p129
      %p131 = scmp.ne.s32.totalorder %s119, %s120
      %p132 = scmp.eq.s32.totalorder %s26, 1
      %p133 = por %p131, %p132
      %p135 = scmp.ne.s32.totalorder %s120, %s134
      %p136 = scmp.eq.s32.totalorder %s26, 0
      %p137 = por %p135, %p136
      %s139 = sadd.s32 %s138, 1
      %p142 = scmp.eq.s32.totalorder %s20, 1
      %p143 = scmp.ne.s32.totalorder %s138, %s140
      %p144 = scmp.eq.s32.totalorder %s20, 0
      %p145 = por %p143, %p144
      %p146 = scmp.ne.s32.totalorder %s138, %s140
      %p147 = scmp.eq.s32.totalorder %s25, 1
      %p148 = por %p146, %p147
      %p149 = scmp.ne.s32.totalorder %s140, %s141
      %p150 = scmp.eq.s32.totalorder %s25, 0
      %p151 = por %p149, %p150
      %p152 = scmp.ne.s32.totalorder %s140, %s141
      %p153 = scmp.eq.s32.totalorder %s26, 1
      %p154 = por %p152, %p153
      %p156 = scmp.ne.s32.totalorder %s141, %s155
      %p157 = scmp.eq.s32.totalorder %s26, 0
      %p158 = por %p156, %p157
      %s160 = sadd.s32 %s159, 1
      %p163 = scmp.eq.s32.totalorder %s20, 1
      %p164 = scmp.ne.s32.totalorder %s159, %s161
      %p165 = scmp.eq.s32.totalorder %s20, 0
      %p166 = por %p164, %p165
      %p167 = scmp.ne.s32.totalorder %s159, %s161
      %p168 = scmp.eq.s32.totalorder %s25, 1
      %p169 = por %p167, %p168
      %p170 = scmp.ne.s32.totalorder %s161, %s162
      %p171 = scmp.eq.s32.totalorder %s25, 0
      %p172 = por %p170, %p171
      %p173 = scmp.ne.s32.totalorder %s161, %s162
      %p174 = scmp.eq.s32.totalorder %s26, 1
      %p175 = por %p173, %p174
      %p177 = scmp.ne.s32.totalorder %s162, %s176
      %p178 = scmp.eq.s32.totalorder %s26, 0
      %p179 = por %p177, %p178
      %s181 = sadd.s32 %s180, 1
      %p184 = scmp.eq.s32.totalorder %s20, 1
      %p185 = scmp.ne.s32.totalorder %s180, %s182
      %p186 = scmp.eq.s32.totalorder %s20, 0
      %p187 = por %p185, %p186
      %p188 = scmp.ne.s32.totalorder %s180, %s182
      %p189 = scmp.eq.s32.totalorder %s25, 1
      %p190 = por %p188, %p189
      %p191 = scmp.ne.s32.totalorder %s182, %s183
      %p192 = scmp.eq.s32.totalorder %s25, 0
      %p193 = por %p191, %p192
      %p194 = scmp.ne.s32.totalorder %s182, %s183
      %p195 = scmp.eq.s32.totalorder %s26, 1
      %p196 = por %p194, %p195
      %p198 = scmp.ne.s32.totalorder %s183, %s197
      %p199 = scmp.eq.s32.totalorder %s26, 0
      %p200 = por %p198, %p199
      %s202 = sadd.s32 %s201, 1
      %p205 = scmp.eq.s32.totalorder %s20, 1
      %p206 = scmp.ne.s32.totalorder %s201, %s203
      %p207 = scmp.eq.s32.totalorder %s20, 0
      %p208 = por %p206, %p207
      %p209 = scmp.ne.s32.totalorder %s201, %s203
      %p210 = scmp.eq.s32.totalorder %s25, 1
      %p211 = por %p209, %p210
      %p212 = scmp.ne.s32.totalorder %s203, %s204
      %p213 = scmp.eq.s32.totalorder %s25, 0
      %p214 = por %p212, %p213
      %p215 = scmp.ne.s32.totalorder %s203, %s204
      %p216 = scmp.eq.s32.totalorder %s26, 1
      %p217 = por %p215, %p216
      %p219 = scmp.ne.s32.totalorder %s204, %s218
      %p220 = scmp.eq.s32.totalorder %s26, 0
      %p221 = por %p219, %p220
      %s223 = sadd.s32 %s222, 1
      %p226 = scmp.eq.s32.totalorder %s20, 1
      %p227 = scmp.ne.s32.totalorder %s222, %s224
      %p228 = scmp.eq.s32.totalorder %s20, 0
      %p229 = por %p227, %p228
      %p230 = scmp.ne.s32.totalorder %s222, %s224
      %p231 = scmp.eq.s32.totalorder %s25, 1
      %p232 = por %p230, %p231
      %p233 = scmp.ne.s32.totalorder %s224, %s225
      %p234 = scmp.eq.s32.totalorder %s25, 0
      %p235 = por %p233, %p234
      %p236 = scmp.ne.s32.totalorder %s224, %s225
      %p237 = scmp.eq.s32.totalorder %s26, 1
      %p238 = por %p236, %p237
      %p240 = scmp.ne.s32.totalorder %s225, %s239
      %p241 = scmp.eq.s32.totalorder %s26, 0
      %p242 = por %p240, %p241
      %s244 = sadd.s32 %s243, 1
      %p247 = scmp.eq.s32.totalorder %s20, 1
      %p248 = scmp.ne.s32.totalorder %s243, %s245
      %p249 = scmp.eq.s32.totalorder %s20, 0
      %p250 = por %p248, %p249
      %p251 = scmp.ne.s32.totalorder %s243, %s245
      %p252 = scmp.eq.s32.totalorder %s25, 1
      %p253 = por %p251, %p252
      %p254 = scmp.ne.s32.totalorder %s245, %s246
      %p255 = scmp.eq.s32.totalorder %s25, 0
      %p256 = por %p254, %p255
      %p257 = scmp.ne.s32.totalorder %s245, %s246
      %p258 = scmp.eq.s32.totalorder %s26, 1
      %p259 = por %p257, %p258
      %p261 = scmp.ne.s32.totalorder %s246, %s260
      %p262 = scmp.eq.s32.totalorder %s26, 0
      %p263 = por %p261, %p262
      %s264 = ssub.s32 %s20, %s27
      %p265 = scmp.eq.s32.totalorder %s264, 0
      %s267 = sadd.s32 %s266, 1
      %s268 = scalar_select %p265, %s266, %s267
      %p271 = pneg %p265
      %p272 = scmp.eq.s32.totalorder %s20, 1
      %p273 = por %p271, %p272
      %p274 = scmp.ne.s32.totalorder %s266, %s269
      %p275 = scmp.eq.s32.totalorder %s20, 0
      %p276 = por %p274, %p275
      %p277 = scmp.ne.s32.totalorder %s266, %s269
      %p278 = scmp.eq.s32.totalorder %s25, 1
      %p279 = por %p277, %p278
      %p280 = scmp.ne.s32.totalorder %s269, %s270
      %p281 = scmp.eq.s32.totalorder %s25, 0
      %p282 = por %p280, %p281
      %p283 = scmp.ne.s32.totalorder %s269, %s270
      %p284 = scmp.eq.s32.totalorder %s26, 1
      %p285 = por %p283, %p284
      %p287 = scmp.ne.s32.totalorder %s270, %s286
      %p288 = scmp.eq.s32.totalorder %s26, 0
      %p289 = por %p287, %p288
      %p290 = scmp.le.s32.totalorder 1, %s20
      %p291 = scmp.lt.s32.totalorder %s20, 3
      %p292 = pnand %p290, %p291
      %p293 = pneg %p292
      // Predicated region
      $region9: #{tpu_custom_call.1} parent=5 // pred_check
        _
      $region10: #{tpu_custom_call.1} parent=5 // pred_check_branch
        %295 = sbr.rel (%p292) target = $region12
      $region11: #{tpu_custom_call.1} parent=5 // pred_region
        %s296 = ssub.s32 %s20, 1
        // Predicated region
        $region13: #{tpu_custom_call.1} parent=11 // pred_check
          %p297 = pneg %p67
        $region14: #{tpu_custom_call.1} parent=11 // pred_check_branch
          %299 = sbr.rel (%p297) target = $region16
        $region15: #{tpu_custom_call.1} parent=11 // pred_region
          _
        $region16: #{tpu_custom_call.1} parent=11 // pred_fallthru
          _
        // Predicated region
        $region17: #{tpu_custom_call.1} parent=11 // pred_check
          %p300 = pneg %p88
        $region18: #{tpu_custom_call.1} parent=11 // pred_check_branch
          %302 = sbr.rel (%p300) target = $region20
        $region19: #{tpu_custom_call.1} parent=11 // pred_region
          _
        $region20: #{tpu_custom_call.1} parent=11 // pred_fallthru
          _
        // Predicated region
        $region21: #{tpu_custom_call.1} parent=11 // pred_check
          %p303 = pneg %p109
        $region22: #{tpu_custom_call.1} parent=11 // pred_check_branch
          %305 = sbr.rel (%p303) target = $region24
        $region23: #{tpu_custom_call.1} parent=11 // pred_region
          _
        $region24: #{tpu_custom_call.1} parent=11 // pred_fallthru
          _
        // Predicated region
        $region25: #{tpu_custom_call.1} parent=11 // pred_check
          %p306 = pneg %p130
        $region26: #{tpu_custom_call.1} parent=11 // pred_check_branch
          %308 = sbr.rel (%p306) target = $region28
        $region27: #{tpu_custom_call.1} parent=11 // pred_region
          _
        $region28: #{tpu_custom_call.1} parent=11 // pred_fallthru
          _
        // Predicated region
        $region29: #{tpu_custom_call.1} parent=11 // pred_check
          %p309 = pneg %p151
        $region30: #{tpu_custom_call.1} parent=11 // pred_check_branch
          %311 = sbr.rel (%p309) target = $region32
        $region31: #{tpu_custom_call.1} parent=11 // pred_region
          _
        $region32: #{tpu_custom_call.1} parent=11 // pred_fallthru
          _
        // Predicated region
        $region33: #{tpu_custom_call.1} parent=11 // pred_check
          %p312 = pneg %p172
        $region34: #{tpu_custom_call.1} parent=11 // pred_check_branch
          %314 = sbr.rel (%p312) target = $region36
        $region35: #{tpu_custom_call.1} parent=11 // pred_region
          _
        $region36: #{tpu_custom_call.1} parent=11 // pred_fallthru
          _
        // Predicated region
        $region37: #{tpu_custom_call.1} parent=11 // pred_check
          %p315 = pneg %p193
        $region38: #{tpu_custom_call.1} parent=11 // pred_check_branch
          %317 = sbr.rel (%p315) target = $region40
        $region39: #{tpu_custom_call.1} parent=11 // pred_region
          _
        $region40: #{tpu_custom_call.1} parent=11 // pred_fallthru
          _
        // Predicated region
        $region41: #{tpu_custom_call.1} parent=11 // pred_check
          %p318 = pneg %p214
        $region42: #{tpu_custom_call.1} parent=11 // pred_check_branch
          %320 = sbr.rel (%p318) target = $region44
        $region43: #{tpu_custom_call.1} parent=11 // pred_region
          _
        $region44: #{tpu_custom_call.1} parent=11 // pred_fallthru
          _
        // Predicated region
        $region45: #{tpu_custom_call.1} parent=11 // pred_check
          %p321 = pneg %p235
        $region46: #{tpu_custom_call.1} parent=11 // pred_check_branch
          %323 = sbr.rel (%p321) target = $region48
        $region47: #{tpu_custom_call.1} parent=11 // pred_region
          _
        $region48: #{tpu_custom_call.1} parent=11 // pred_fallthru
          _
        // Predicated region
        $region49: #{tpu_custom_call.1} parent=11 // pred_check
          %p324 = pneg %p256
        $region50: #{tpu_custom_call.1} parent=11 // pred_check_branch
          %326 = sbr.rel (%p324) target = $region52
        $region51: #{tpu_custom_call.1} parent=11 // pred_region
          _
        $region52: #{tpu_custom_call.1} parent=11 // pred_fallthru
          _
      $region12: #{tpu_custom_call.1} parent=5 // pred_fallthru
        _
      %p327 = scmp.lt.s32.totalorder %s20, 2
      // Predicated region
      $region53: #{tpu_custom_call.1} parent=5 // pred_check
        %p328 = pneg %p327
      $region54: #{tpu_custom_call.1} parent=5 // pred_check_branch
        %330 = sbr.rel (%p328) target = $region56
      $region55: #{tpu_custom_call.1} parent=5 // pred_region
        // Predicated region
        $region57: #{tpu_custom_call.1} parent=55 // pred_check
          %p331 = pneg %p40
        $region58: #{tpu_custom_call.1} parent=55 // pred_check_branch
          %333 = sbr.rel (%p331) target = $region60
        $region59: #{tpu_custom_call.1} parent=55 // pred_region
          %p334 = scmp.lt.s32.totalorder %s20, 1
          %s335 = scalar_select %p334, %s20, 1
          %s336 = smul.addr %s335, 8
          %s337 = scalar_lea.vmem %s0, %s336
        $region60: #{tpu_custom_call.1} parent=55 // pred_fallthru
          _
      $region56: #{tpu_custom_call.1} parent=5 // pred_fallthru
        _
      %p338 = scmp.le.s32.totalorder 1, %s20
      %p339 = scmp.lt.s32.totalorder %s20, 3
      %p340 = pnand %p338, %p339
      %p341 = pneg %p340
      // Predicated region
      $region61: #{tpu_custom_call.1} parent=5 // pred_check
        _
      $region62: #{tpu_custom_call.1} parent=5 // pred_check_branch
        %343 = sbr.rel (%p340) target = $region64
      $region63: #{tpu_custom_call.1} parent=5 // pred_region
        %s344 = ssub.s32 %s20, 1
        %p345 = scmp.lt.s32.totalorder %s25, 1
        %s346 = scalar_select %p345, %s25, 1
        %s347 = smul.addr %s346, 8
        %s348 = scalar_lea.vmem %s0, %s347
        %p349 = pneg %p46
        %p350 = pneg %p43
        %p351 = pneg %p67
        %p352 = pneg %p64
        %p353 = pneg %p88
        %p354 = pneg %p85
        %p355 = pneg %p109
        %p356 = pneg %p106
        %p357 = pneg %p130
        %p358 = pneg %p127
        %p359 = pneg %p151
        %p360 = pneg %p148
        %p361 = pneg %p172
        %p362 = pneg %p169
        %p363 = pneg %p193
        %p364 = pneg %p190
        %p365 = pneg %p214
        %p366 = pneg %p211
        %p367 = pneg %p235
        %p368 = pneg %p232
        %p369 = pneg %p256
        %p370 = pneg %p253
        %p371 = pneg %p282
        %p372 = pneg %p279
        %s373 = sand.u32 %s269, 1
        %s374 = scalar_lea.sflag [#allocation5], %s373
        %s375 = sand.u32 %s269, 1
        %s376 = smul.addr %s375, 8
        %s377 = scalar_lea.vmem [#allocation4], %s376
        %p378 = scmp.lt.s32.totalorder %s25, 1
        %s379 = scalar_select %p378, %s25, 1
        %s380 = smul.addr %s379, 8
        %s381 = scalar_lea.vmem %s0, %s380
        %v383 = vld [vmem:[%s381] sm:$0xff]
        %v384 = vlaneseq
        %v385 = vshrl.u32 %v384, 7
        %v386 = vsub.s32 0, %v385
        %v387 = vrot.slane %v383, %v386
        %389 = vbcast.lane.b32.xlu0 %v387, 256
        %v390 = vpop.permute.xlu0 %389
        %s392 = sor.u32 256, 8
        %393 = vbcast.lane.b32.xlu0 %v387, %s392
        %v394 = vpop.permute.xlu0 %393
        %s396 = sor.u32 256, 16
        %397 = vbcast.lane.b32.xlu0 %v387, %s396
        %v398 = vpop.permute.xlu0 %397
        %v399 = vlaneseq
        %v400 = vshrl.u32 %v399, 7
        %v401 = vsub.s32 1, %v400
        %v402 = vrot.slane %v383, %v401
        %404 = vbcast.lane.b32.xlu0 %v402, 256
        %v405 = vpop.permute.xlu0 %404
        %s407 = sor.u32 256, 8
        %408 = vbcast.lane.b32.xlu0 %v402, %s407
        %v409 = vpop.permute.xlu0 %408
        %s411 = sor.u32 256, 16
        %412 = vbcast.lane.b32.xlu0 %v402, %s411
        %v413 = vpop.permute.xlu0 %412
        %v414 = vlaneseq
        %v415 = vshrl.u32 %v414, 7
        %v416 = vsub.s32 2, %v415
        %v417 = vrot.slane %v383, %v416
        %419 = vbcast.lane.b32.xlu0 %v417, 256
        %v420 = vpop.permute.xlu0 %419
        %s422 = sor.u32 256, 8
        %423 = vbcast.lane.b32.xlu0 %v417, %s422
        %v424 = vpop.permute.xlu0 %423
        %s426 = sor.u32 256, 16
        %427 = vbcast.lane.b32.xlu0 %v417, %s426
        %v428 = vpop.permute.xlu0 %427
        %v429 = vlaneseq
        %v430 = vshrl.u32 %v429, 7
        %v431 = vsub.s32 3, %v430
        %v432 = vrot.slane %v383, %v431
        %434 = vbcast.lane.b32.xlu0 %v432, 256
        %v435 = vpop.permute.xlu0 %434
        %s437 = sor.u32 256, 8
        %438 = vbcast.lane.b32.xlu0 %v432, %s437
        %v439 = vpop.permute.xlu0 %438
        %s441 = sor.u32 256, 16
        %442 = vbcast.lane.b32.xlu0 %v432, %s441
        %v443 = vpop.permute.xlu0 %442
        %v444 = vlaneseq
        %v445 = vshrl.u32 %v444, 7
        %v446 = vsub.s32 4, %v445
        %v447 = vrot.slane %v383, %v446
        %449 = vbcast.lane.b32.xlu0 %v447, 256
        %v450 = vpop.permute.xlu0 %449
        %s452 = sor.u32 256, 8
        %453 = vbcast.lane.b32.xlu0 %v447, %s452
        %v454 = vpop.permute.xlu0 %453
        %s456 = sor.u32 256, 16
        %457 = vbcast.lane.b32.xlu0 %v447, %s456
        %v458 = vpop.permute.xlu0 %457
        %v459 = vlaneseq
        %v460 = vshrl.u32 %v459, 7
        %v461 = vsub.s32 5, %v460
        %v462 = vrot.slane %v383, %v461
        %464 = vbcast.lane.b32.xlu0 %v462, 256
        %v465 = vpop.permute.xlu0 %464
        %s467 = sor.u32 256, 8
        %468 = vbcast.lane.b32.xlu0 %v462, %s467
        %v469 = vpop.permute.xlu0 %468
        %s471 = sor.u32 256, 16
        %472 = vbcast.lane.b32.xlu0 %v462, %s471
        %v473 = vpop.permute.xlu0 %472
        %v474 = vlaneseq
        %v475 = vshrl.u32 %v474, 7
        %v476 = vsub.s32 6, %v475
        %v477 = vrot.slane %v383, %v476
        %479 = vbcast.lane.b32.xlu0 %v477, 256
        %v480 = vpop.permute.xlu0 %479
        %s482 = sor.u32 256, 8
        %483 = vbcast.lane.b32.xlu0 %v477, %s482
        %v484 = vpop.permute.xlu0 %483
        %s486 = sor.u32 256, 16
        %487 = vbcast.lane.b32.xlu0 %v477, %s486
        %v488 = vpop.permute.xlu0 %487
        %v489 = vlaneseq
        %v490 = vshrl.u32 %v489, 7
        %v491 = vsub.s32 7, %v490
        %v492 = vrot.slane %v383, %v491
        %494 = vbcast.lane.b32.xlu0 %v492, 256
        %v495 = vpop.permute.xlu0 %494
        %s497 = sor.u32 256, 8
        %498 = vbcast.lane.b32.xlu0 %v492, %s497
        %v499 = vpop.permute.xlu0 %498
        %s501 = sor.u32 256, 16
        %502 = vbcast.lane.b32.xlu0 %v492, %s501
        %v503 = vpop.permute.xlu0 %502
        %v504 = vld [vmem:[%s1] sm:$0x7]
        %v505 = vlaneseq
        %v506 = vshrl.u32 %v505, 7
        %v507 = vsub.s32 0, %v506
        %v508 = vrot.slane %v504, %v507
        %v509 = vmul.f32 %v390, %v508
        %v510 = vmul.f32 %v394, %v508
        %v511 = vmul.f32 %v405, %v508
        %v512 = vmul.f32 %v409, %v508
        %v513 = vmul.f32 %v420, %v508
        %v514 = vmul.f32 %v424, %v508
        %v515 = vmul.f32 %v435, %v508
        %v516 = vmul.f32 %v439, %v508
        %v517 = vmul.f32 %v450, %v508
        %v518 = vmul.f32 %v454, %v508
        %v519 = vmul.f32 %v465, %v508
        %v520 = vmul.f32 %v469, %v508
        %v521 = vmul.f32 %v480, %v508
        %v522 = vmul.f32 %v484, %v508
        %v523 = vmul.f32 %v495, %v508
        %v524 = vmul.f32 %v499, %v508
        %v525 = vlaneseq
        %v526 = vshrl.u32 %v525, 7
        %v527 = vsub.s32 1, %v526
        %v528 = vrot.slane %v504, %v527
        %v529 = vmul.f32 %v390, %v528
        %v530 = vmul.f32 %v394, %v528
        %v531 = vmul.f32 %v398, %v528
        %v532 = vmul.f32 %v405, %v528
        %v533 = vmul.f32 %v409, %v528
        %v534 = vmul.f32 %v413, %v528
        %v535 = vmul.f32 %v420, %v528
        %v536 = vmul.f32 %v424, %v528
        %v537 = vmul.f32 %v428, %v528
        %v538 = vmul.f32 %v435, %v528
        %v539 = vmul.f32 %v439, %v528
        %v540 = vmul.f32 %v443, %v528
        %v541 = vmul.f32 %v450, %v528
        %v542 = vmul.f32 %v454, %v528
        %v543 = vmul.f32 %v458, %v528
        %v544 = vmul.f32 %v465, %v528
        %v545 = vmul.f32 %v469, %v528
        %v546 = vmul.f32 %v473, %v528
        %v547 = vmul.f32 %v480, %v528
        %v548 = vmul.f32 %v484, %v528
        %v549 = vmul.f32 %v488, %v528
        %v550 = vmul.f32 %v495, %v528
        %v551 = vmul.f32 %v499, %v528
        %v552 = vmul.f32 %v503, %v528
        %vm577 = vcmask 1046528
        %v578 = vrot.slane %v529, 1
        %v579 = vrot.slane %v530, 1
        %v580 = vsel %vm577, %v578, %v579
        %v581 = vrot.slane %v531, 1
        %v582 = vsel %vm577, %v579, %v581
        %v583 = vrot.slane %v532, 1
        %v584 = vrot.slane %v533, 1
        %v585 = vsel %vm577, %v583, %v584
        %v586 = vrot.slane %v534, 1
        %v587 = vsel %vm577, %v584, %v586
        %v588 = vrot.slane %v535, 1
        %v589 = vrot.slane %v536, 1
        %v590 = vsel %vm577, %v588, %v589
        %v591 = vrot.slane %v537, 1
        %v592 = vsel %vm577, %v589, %v591
        %v593 = vrot.slane %v538, 1
        %v594 = vrot.slane %v539, 1
        %v595 = vsel %vm577, %v593, %v594
        %v596 = vrot.slane %v540, 1
        %v597 = vsel %vm577, %v594, %v596
        %v598 = vrot.slane %v541, 1
        %v599 = vrot.slane %v542, 1
        %v600 = vsel %vm577, %v598, %v599
        %v601 = vrot.slane %v543, 1
        %v602 = vsel %vm577, %v599, %v601
        %v603 = vrot.slane %v544, 1
        %v604 = vrot.slane %v545, 1
        %v605 = vsel %vm577, %v603, %v604
        %v606 = vrot.slane %v546, 1
        %v607 = vsel %vm577, %v604, %v606
        %v608 = vrot.slane %v547, 1
        %v609 = vrot.slane %v548, 1
        %v610 = vsel %vm577, %v608, %v609
        %v611 = vrot.slane %v549, 1
        %v612 = vsel %vm577, %v609, %v611
        %v613 = vrot.slane %v550, 1
        %v614 = vrot.slane %v551, 1
        %v615 = vsel %vm577, %v613, %v614
        %v616 = vrot.slane %v552, 1
        %v617 = vsel %vm577, %v614, %v616
        %v634 = vadd.f32 %v509, %v580
        %v635 = vadd.f32 %v510, %v582
        %v636 = vadd.f32 %v511, %v585
        %v637 = vadd.f32 %v512, %v587
        %v638 = vadd.f32 %v513, %v590
        %v639 = vadd.f32 %v514, %v592
        %v640 = vadd.f32 %v515, %v595
        %v641 = vadd.f32 %v516, %v597
        %v642 = vadd.f32 %v517, %v600
        %v643 = vadd.f32 %v518, %v602
        %v644 = vadd.f32 %v519, %v605
        %v645 = vadd.f32 %v520, %v607
        %v646 = vadd.f32 %v521, %v610
        %v647 = vadd.f32 %v522, %v612
        %v648 = vadd.f32 %v523, %v615
        %v649 = vadd.f32 %v524, %v617
        %v650 = vlaneseq
        %v651 = vshrl.u32 %v650, 7
        %v652 = vsub.s32 2, %v651
        %v653 = vrot.slane %v504, %v652
        %v654 = vmul.f32 %v390, %v653
        %v655 = vmul.f32 %v394, %v653
        %v656 = vmul.f32 %v398, %v653
        %v657 = vmul.f32 %v405, %v653
        %v658 = vmul.f32 %v409, %v653
        %v659 = vmul.f32 %v413, %v653
        %v660 = vmul.f32 %v420, %v653
        %v661 = vmul.f32 %v424, %v653
        %v662 = vmul.f32 %v428, %v653
        %v663 = vmul.f32 %v435, %v653
        %v664 = vmul.f32 %v439, %v653
        %v665 = vmul.f32 %v443, %v653
        %v666 = vmul.f32 %v450, %v653
        %v667 = vmul.f32 %v454, %v653
        %v668 = vmul.f32 %v458, %v653
        %v669 = vmul.f32 %v465, %v653
        %v670 = vmul.f32 %v469, %v653
        %v671 = vmul.f32 %v473, %v653
        %v672 = vmul.f32 %v480, %v653
        %v673 = vmul.f32 %v484, %v653
        %v674 = vmul.f32 %v488, %v653
        %v675 = vmul.f32 %v495, %v653
        %v676 = vmul.f32 %v499, %v653
        %v677 = vmul.f32 %v503, %v653
        %vm702 = vcmask 1045504
        %v703 = vrot.slane %v654, 2
        %v704 = vrot.slane %v655, 2
        %v705 = vsel %vm702, %v703, %v704
        %v706 = vrot.slane %v656, 2
        %v707 = vsel %vm702, %v704, %v706
        %v708 = vrot.slane %v657, 2
        %v709 = vrot.slane %v658, 2
        %v710 = vsel %vm702, %v708, %v709
        %v711 = vrot.slane %v659, 2
        %v712 = vsel %vm702, %v709, %v711
        %v713 = vrot.slane %v660, 2
        %v714 = vrot.slane %v661, 2
        %v715 = vsel %vm702, %v713, %v714
        %v716 = vrot.slane %v662, 2
        %v717 = vsel %vm702, %v714, %v716
        %v718 = vrot.slane %v663, 2
        %v719 = vrot.slane %v664, 2
        %v720 = vsel %vm702, %v718, %v719
        %v721 = vrot.slane %v665, 2
        %v722 = vsel %vm702, %v719, %v721
        %v723 = vrot.slane %v666, 2
        %v724 = vrot.slane %v667, 2
        %v725 = vsel %vm702, %v723, %v724
        %v726 = vrot.slane %v668, 2
        %v727 = vsel %vm702, %v724, %v726
        %v728 = vrot.slane %v669, 2
        %v729 = vrot.slane %v670, 2
        %v730 = vsel %vm702, %v728, %v729
        %v731 = vrot.slane %v671, 2
        %v732 = vsel %vm702, %v729, %v731
        %v733 = vrot.slane %v672, 2
        %v734 = vrot.slane %v673, 2
        %v735 = vsel %vm702, %v733, %v734
        %v736 = vrot.slane %v674, 2
        %v737 = vsel %vm702, %v734, %v736
        %v738 = vrot.slane %v675, 2
        %v739 = vrot.slane %v676, 2
        %v740 = vsel %vm702, %v738, %v739
        %v741 = vrot.slane %v677, 2
        %v742 = vsel %vm702, %v739, %v741
        %v759 = vadd.f32 %v634, %v705
        %v760 = vadd.f32 %v635, %v707
        %v761 = vadd.f32 %v636, %v710
        %v762 = vadd.f32 %v637, %v712
        %v763 = vadd.f32 %v638, %v715
        %v764 = vadd.f32 %v639, %v717
        %v765 = vadd.f32 %v640, %v720
        %v766 = vadd.f32 %v641, %v722
        %v767 = vadd.f32 %v642, %v725
        %v768 = vadd.f32 %v643, %v727
        %v769 = vadd.f32 %v644, %v730
        %v770 = vadd.f32 %v645, %v732
        %v771 = vadd.f32 %v646, %v735
        %v772 = vadd.f32 %v647, %v737
        %v773 = vadd.f32 %v648, %v740
        %v774 = vadd.f32 %v649, %v742
        %v775 = vld [vmem:[%s2] sm:$0x1]
        %v777 = vlaneseq
        %v778 = vshrl.u32 %v777, 7
        %v779 = vsub.s32 0, %v778
        %v780 = vrot.slane %v775, %v779
        %v782 = vadd.f32 %v759, %v780
        %v783 = vadd.f32 %v760, %v780
        %v784 = vadd.f32 %v761, %v780
        %v785 = vadd.f32 %v762, %v780
        %v786 = vadd.f32 %v763, %v780
        %v787 = vadd.f32 %v764, %v780
        %v788 = vadd.f32 %v765, %v780
        %v789 = vadd.f32 %v766, %v780
        %v790 = vadd.f32 %v767, %v780
        %v791 = vadd.f32 %v768, %v780
        %v792 = vadd.f32 %v769, %v780
        %v793 = vadd.f32 %v770, %v780
        %v794 = vadd.f32 %v771, %v780
        %v795 = vadd.f32 %v772, %v780
        %v796 = vadd.f32 %v773, %v780
        %v797 = vadd.f32 %v774, %v780
        %v798 = vmax.f32 %v782, 0.0
        %v799 = vmax.f32 %v783, 0.0
        %v800 = vmax.f32 %v784, 0.0
        %v801 = vmax.f32 %v785, 0.0
        %v802 = vmax.f32 %v786, 0.0
        %v803 = vmax.f32 %v787, 0.0
        %v804 = vmax.f32 %v788, 0.0
        %v805 = vmax.f32 %v789, 0.0
        %v806 = vmax.f32 %v790, 0.0
        %v807 = vmax.f32 %v791, 0.0
        %v808 = vmax.f32 %v792, 0.0
        %v809 = vmax.f32 %v793, 0.0
        %v810 = vmax.f32 %v794, 0.0
        %v811 = vmax.f32 %v795, 0.0
        %v812 = vmax.f32 %v796, 0.0
        %v813 = vmax.f32 %v797, 0.0
        %v830 = vcombine.high %v798, %v798
        %v832 = vunpack.c.l.s4 1983009808
        %v833 = vunpack.c.0.s8 %v832
        %v834 = vlaneseq
        %v835 = vshrl.u32 %v834, 7
        %v836 = vsub.s32 %v833, %v835
        %v837 = vrot.slane %v798, %v836
        %v839 = vunpack.c.l.s4 1983009808
        %v840 = vunpack.c.0.s8 %v839
        %v841 = vlaneseq
        %v842 = vshrl.u32 %v841, 7
        %v843 = vsub.s32 %v840, %v842
        %v844 = vrot.slane %v830, %v843
        %v845 = vcombine.high %v837, %v837
        %v846 = vcombine.high %v844, %v844
        %v847 = vcombine.high %v799, %v799
        %v849 = vunpack.c.l.s4 1983009808
        %v850 = vunpack.c.0.s8 %v849
        %v851 = vlaneseq
        %v852 = vshrl.u32 %v851, 7
        %v853 = vsub.s32 %v850, %v852
        %v854 = vrot.slane %v799, %v853
        %v856 = vunpack.c.l.s4 1983009808
        %v857 = vunpack.c.0.s8 %v856
        %v858 = vlaneseq
        %v859 = vshrl.u32 %v858, 7
        %v860 = vsub.s32 %v857, %v859
        %v861 = vrot.slane %v847, %v860
        %v862 = vcombine.high %v854, %v854
        %v863 = vcombine.high %v861, %v861
        %v864 = vcombine.high %v800, %v800
        %v866 = vunpack.c.l.s4 1983009808
        %v867 = vunpack.c.0.s8 %v866
        %v868 = vlaneseq
        %v869 = vshrl.u32 %v868, 7
        %v870 = vsub.s32 %v867, %v869
        %v871 = vrot.slane %v800, %v870
        %v873 = vunpack.c.l.s4 1983009808
        %v874 = vunpack.c.0.s8 %v873
        %v875 = vlaneseq
        %v876 = vshrl.u32 %v875, 7
        %v877 = vsub.s32 %v874, %v876
        %v878 = vrot.slane %v864, %v877
        %v879 = vcombine.high %v871, %v871
        %v880 = vcombine.high %v878, %v878
        %v881 = vcombine.high %v801, %v801
        %v883 = vunpack.c.l.s4 1983009808
        %v884 = vunpack.c.0.s8 %v883
        %v885 = vlaneseq
        %v886 = vshrl.u32 %v885, 7
        %v887 = vsub.s32 %v884, %v886
        %v888 = vrot.slane %v801, %v887
        %v890 = vunpack.c.l.s4 1983009808
        %v891 = vunpack.c.0.s8 %v890
        %v892 = vlaneseq
        %v893 = vshrl.u32 %v892, 7
        %v894 = vsub.s32 %v891, %v893
        %v895 = vrot.slane %v881, %v894
        %v896 = vcombine.high %v888, %v888
        %v897 = vcombine.high %v895, %v895
        %v898 = vcombine.high %v802, %v802
        %v900 = vunpack.c.l.s4 1983009808
        %v901 = vunpack.c.0.s8 %v900
        %v902 = vlaneseq
        %v903 = vshrl.u32 %v902, 7
        %v904 = vsub.s32 %v901, %v903
        %v905 = vrot.slane %v802, %v904
        %v907 = vunpack.c.l.s4 1983009808
        %v908 = vunpack.c.0.s8 %v907
        %v909 = vlaneseq
        %v910 = vshrl.u32 %v909, 7
        %v911 = vsub.s32 %v908, %v910
        %v912 = vrot.slane %v898, %v911
        %v913 = vcombine.high %v905, %v905
        %v914 = vcombine.high %v912, %v912
        %v915 = vcombine.high %v803, %v803
        %v917 = vunpack.c.l.s4 1983009808
        %v918 = vunpack.c.0.s8 %v917
        %v919 = vlaneseq
        %v920 = vshrl.u32 %v919, 7
        %v921 = vsub.s32 %v918, %v920
        %v922 = vrot.slane %v803, %v921
        %v924 = vunpack.c.l.s4 1983009808
        %v925 = vunpack.c.0.s8 %v924
        %v926 = vlaneseq
        %v927 = vshrl.u32 %v926, 7
        %v928 = vsub.s32 %v925, %v927
        %v929 = vrot.slane %v915, %v928
        %v930 = vcombine.high %v922, %v922
        %v931 = vcombine.high %v929, %v929
        %v932 = vcombine.high %v804, %v804
        %v934 = vunpack.c.l.s4 1983009808
        %v935 = vunpack.c.0.s8 %v934
        %v936 = vlaneseq
        %v937 = vshrl.u32 %v936, 7
        %v938 = vsub.s32 %v935, %v937
        %v939 = vrot.slane %v804, %v938
        %v941 = vunpack.c.l.s4 1983009808
        %v942 = vunpack.c.0.s8 %v941
        %v943 = vlaneseq
        %v944 = vshrl.u32 %v943, 7
        %v945 = vsub.s32 %v942, %v944
        %v946 = vrot.slane %v932, %v945
        %v947 = vcombine.high %v939, %v939
        %v948 = vcombine.high %v946, %v946
        %v949 = vcombine.high %v805, %v805
        %v951 = vunpack.c.l.s4 1983009808
        %v952 = vunpack.c.0.s8 %v951
        %v953 = vlaneseq
        %v954 = vshrl.u32 %v953, 7
        %v955 = vsub.s32 %v952, %v954
        %v956 = vrot.slane %v805, %v955
        %v958 = vunpack.c.l.s4 1983009808
        %v959 = vunpack.c.0.s8 %v958
        %v960 = vlaneseq
        %v961 = vshrl.u32 %v960, 7
        %v962 = vsub.s32 %v959, %v961
        %v963 = vrot.slane %v949, %v962
        %v964 = vcombine.high %v956, %v956
        %v965 = vcombine.high %v963, %v963
        %v966 = vcombine.high %v806, %v806
        %v968 = vunpack.c.l.s4 1983009808
        %v969 = vunpack.c.0.s8 %v968
        %v970 = vlaneseq
        %v971 = vshrl.u32 %v970, 7
        %v972 = vsub.s32 %v969, %v971
        %v973 = vrot.slane %v806, %v972
        %v975 = vunpack.c.l.s4 1983009808
        %v976 = vunpack.c.0.s8 %v975
        %v977 = vlaneseq
        %v978 = vshrl.u32 %v977, 7
        %v979 = vsub.s32 %v976, %v978
        %v980 = vrot.slane %v966, %v979
        %v981 = vcombine.high %v973, %v973
        %v982 = vcombine.high %v980, %v980
        %v983 = vcombine.high %v807, %v807
        %v985 = vunpack.c.l.s4 1983009808
        %v986 = vunpack.c.0.s8 %v985
        %v987 = vlaneseq
        %v988 = vshrl.u32 %v987, 7
        %v989 = vsub.s32 %v986, %v988
        %v990 = vrot.slane %v807, %v989
        %v992 = vunpack.c.l.s4 1983009808
        %v993 = vunpack.c.0.s8 %v992
        %v994 = vlaneseq
        %v995 = vshrl.u32 %v994, 7
        %v996 = vsub.s32 %v993, %v995
        %v997 = vrot.slane %v983, %v996
        %v998 = vcombine.high %v990, %v990
        %v999 = vcombine.high %v997, %v997
        %v1000 = vcombine.high %v808, %v808
        %v1002 = vunpack.c.l.s4 1983009808
        %v1003 = vunpack.c.0.s8 %v1002
        %v1004 = vlaneseq
        %v1005 = vshrl.u32 %v1004, 7
        %v1006 = vsub.s32 %v1003, %v1005
        %v1007 = vrot.slane %v808, %v1006
        %v1009 = vunpack.c.l.s4 1983009808
        %v1010 = vunpack.c.0.s8 %v1009
        %v1011 = vlaneseq
        %v1012 = vshrl.u32 %v1011, 7
        %v1013 = vsub.s32 %v1010, %v1012
        %v1014 = vrot.slane %v1000, %v1013
        %v1015 = vcombine.high %v1007, %v1007
        %v1016 = vcombine.high %v1014, %v1014
        %v1017 = vcombine.high %v809, %v809
        %v1019 = vunpack.c.l.s4 1983009808
        %v1020 = vunpack.c.0.s8 %v1019
        %v1021 = vlaneseq
        %v1022 = vshrl.u32 %v1021, 7
        %v1023 = vsub.s32 %v1020, %v1022
        %v1024 = vrot.slane %v809, %v1023
        %v1026 = vunpack.c.l.s4 1983009808
        %v1027 = vunpack.c.0.s8 %v1026
        %v1028 = vlaneseq
        %v1029 = vshrl.u32 %v1028, 7
        %v1030 = vsub.s32 %v1027, %v1029
        %v1031 = vrot.slane %v1017, %v1030
        %v1032 = vcombine.high %v1024, %v1024
        %v1033 = vcombine.high %v1031, %v1031
        %v1034 = vcombine.high %v810, %v810
        %v1036 = vunpack.c.l.s4 1983009808
        %v1037 = vunpack.c.0.s8 %v1036
        %v1038 = vlaneseq
        %v1039 = vshrl.u32 %v1038, 7
        %v1040 = vsub.s32 %v1037, %v1039
        %v1041 = vrot.slane %v810, %v1040
        %v1043 = vunpack.c.l.s4 1983009808
        %v1044 = vunpack.c.0.s8 %v1043
        %v1045 = vlaneseq
        %v1046 = vshrl.u32 %v1045, 7
        %v1047 = vsub.s32 %v1044, %v1046
        %v1048 = vrot.slane %v1034, %v1047
        %v1049 = vcombine.high %v1041, %v1041
        %v1050 = vcombine.high %v1048, %v1048
        %v1051 = vcombine.high %v811, %v811
        %v1053 = vunpack.c.l.s4 1983009808
        %v1054 = vunpack.c.0.s8 %v1053
        %v1055 = vlaneseq
        %v1056 = vshrl.u32 %v1055, 7
        %v1057 = vsub.s32 %v1054, %v1056
        %v1058 = vrot.slane %v811, %v1057
        %v1060 = vunpack.c.l.s4 1983009808
        %v1061 = vunpack.c.0.s8 %v1060
        %v1062 = vlaneseq
        %v1063 = vshrl.u32 %v1062, 7
        %v1064 = vsub.s32 %v1061, %v1063
        %v1065 = vrot.slane %v1051, %v1064
        %v1066 = vcombine.high %v1058, %v1058
        %v1067 = vcombine.high %v1065, %v1065
        %v1068 = vcombine.high %v812, %v812
        %v1070 = vunpack.c.l.s4 1983009808
        %v1071 = vunpack.c.0.s8 %v1070
        %v1072 = vlaneseq
        %v1073 = vshrl.u32 %v1072, 7
        %v1074 = vsub.s32 %v1071, %v1073
        %v1075 = vrot.slane %v812, %v1074
        %v1077 = vunpack.c.l.s4 1983009808
        %v1078 = vunpack.c.0.s8 %v1077
        %v1079 = vlaneseq
        %v1080 = vshrl.u32 %v1079, 7
        %v1081 = vsub.s32 %v1078, %v1080
        %v1082 = vrot.slane %v1068, %v1081
        %v1083 = vcombine.high %v1075, %v1075
        %v1084 = vcombine.high %v1082, %v1082
        %v1085 = vcombine.high %v813, %v813
        %v1087 = vunpack.c.l.s4 1983009808
        %v1088 = vunpack.c.0.s8 %v1087
        %v1089 = vlaneseq
        %v1090 = vshrl.u32 %v1089, 7
        %v1091 = vsub.s32 %v1088, %v1090
        %v1092 = vrot.slane %v813, %v1091
        %v1094 = vunpack.c.l.s4 1983009808
        %v1095 = vunpack.c.0.s8 %v1094
        %v1096 = vlaneseq
        %v1097 = vshrl.u32 %v1096, 7
        %v1098 = vsub.s32 %v1095, %v1097
        %v1099 = vrot.slane %v1085, %v1098
        %v1100 = vcombine.high %v1092, %v1092
        %v1101 = vcombine.high %v1099, %v1099
        %v1166 = vrot.slane %v837, 7
        %v1167 = vrot.slane %v1166, 2
        %v1168 = vrot.slane %v845, 7
        %v1169 = vrot.slane %v1168, 2
        %v1170 = vrot.slane %v844, 7
        %v1171 = vrot.slane %v1170, 2
        %v1172 = vrot.slane %v846, 7
        %v1173 = vrot.slane %v1172, 2
        %v1174 = vrot.slane %v854, 7
        %v1175 = vrot.slane %v1174, 2
        %v1176 = vrot.slane %v862, 7
        %v1177 = vrot.slane %v1176, 2
        %v1178 = vrot.slane %v861, 7
        %v1179 = vrot.slane %v1178, 2
        %v1180 = vrot.slane %v863, 7
        %v1181 = vrot.slane %v1180, 2
        %v1182 = vrot.slane %v871, 7
        %v1183 = vrot.slane %v1182, 2
        %v1184 = vrot.slane %v879, 7
        %v1185 = vrot.slane %v1184, 2
        %v1186 = vrot.slane %v878, 7
        %v1187 = vrot.slane %v1186, 2
        %v1188 = vrot.slane %v880, 7
        %v1189 = vrot.slane %v1188, 2
        %v1190 = vrot.slane %v888, 7
        %v1191 = vrot.slane %v1190, 2
        %v1192 = vrot.slane %v896, 7
        %v1193 = vrot.slane %v1192, 2
        %v1194 = vrot.slane %v895, 7
        %v1195 = vrot.slane %v1194, 2
        %v1196 = vrot.slane %v897, 7
        %v1197 = vrot.slane %v1196, 2
        %v1198 = vrot.slane %v905, 7
        %v1199 = vrot.slane %v1198, 2
        %v1200 = vrot.slane %v913, 7
        %v1201 = vrot.slane %v1200, 2
        %v1202 = vrot.slane %v912, 7
        %v1203 = vrot.slane %v1202, 2
        %v1204 = vrot.slane %v914, 7
        %v1205 = vrot.slane %v1204, 2
        %v1206 = vrot.slane %v922, 7
        %v1207 = vrot.slane %v1206, 2
        %v1208 = vrot.slane %v930, 7
        %v1209 = vrot.slane %v1208, 2
        %v1210 = vrot.slane %v929, 7
        %v1211 = vrot.slane %v1210, 2
        %v1212 = vrot.slane %v931, 7
        %v1213 = vrot.slane %v1212, 2
        %v1214 = vrot.slane %v939, 7
        %v1215 = vrot.slane %v1214, 2
        %v1216 = vrot.slane %v947, 7
        %v1217 = vrot.slane %v1216, 2
        %v1218 = vrot.slane %v946, 7
        %v1219 = vrot.slane %v1218, 2
        %v1220 = vrot.slane %v948, 7
        %v1221 = vrot.slane %v1220, 2
        %v1222 = vrot.slane %v956, 7
        %v1223 = vrot.slane %v1222, 2
        %v1224 = vrot.slane %v964, 7
        %v1225 = vrot.slane %v1224, 2
        %v1226 = vrot.slane %v963, 7
        %v1227 = vrot.slane %v1226, 2
        %v1228 = vrot.slane %v965, 7
        %v1229 = vrot.slane %v1228, 2
        %v1230 = vrot.slane %v973, 7
        %v1231 = vrot.slane %v1230, 2
        %v1232 = vrot.slane %v981, 7
        %v1233 = vrot.slane %v1232, 2
        %v1234 = vrot.slane %v980, 7
        %v1235 = vrot.slane %v1234, 2
        %v1236 = vrot.slane %v982, 7
        %v1237 = vrot.slane %v1236, 2
        %v1238 = vrot.slane %v990, 7
        %v1239 = vrot.slane %v1238, 2
        %v1240 = vrot.slane %v998, 7
        %v1241 = vrot.slane %v1240, 2
        %v1242 = vrot.slane %v997, 7
        %v1243 = vrot.slane %v1242, 2
        %v1244 = vrot.slane %v999, 7
        %v1245 = vrot.slane %v1244, 2
        %v1246 = vrot.slane %v1007, 7
        %v1247 = vrot.slane %v1246, 2
        %v1248 = vrot.slane %v1015, 7
        %v1249 = vrot.slane %v1248, 2
        %v1250 = vrot.slane %v1014, 7
        %v1251 = vrot.slane %v1250, 2
        %v1252 = vrot.slane %v1016, 7
        %v1253 = vrot.slane %v1252, 2
        %v1254 = vrot.slane %v1024, 7
        %v1255 = vrot.slane %v1254, 2
        %v1256 = vrot.slane %v1032, 7
        %v1257 = vrot.slane %v1256, 2
        %v1258 = vrot.slane %v1031, 7
        %v1259 = vrot.slane %v1258, 2
        %v1260 = vrot.slane %v1033, 7
        %v1261 = vrot.slane %v1260, 2
        %v1262 = vrot.slane %v1041, 7
        %v1263 = vrot.slane %v1262, 2
        %v1264 = vrot.slane %v1049, 7
        %v1265 = vrot.slane %v1264, 2
        %v1266 = vrot.slane %v1048, 7
        %v1267 = vrot.slane %v1266, 2
        %v1268 = vrot.slane %v1050, 7
        %v1269 = vrot.slane %v1268, 2
        %v1270 = vrot.slane %v1058, 7
        %v1271 = vrot.slane %v1270, 2
        %v1272 = vrot.slane %v1066, 7
        %v1273 = vrot.slane %v1272, 2
        %v1274 = vrot.slane %v1065, 7
        %v1275 = vrot.slane %v1274, 2
        %v1276 = vrot.slane %v1067, 7
        %v1277 = vrot.slane %v1276, 2
        %v1278 = vrot.slane %v1075, 7
        %v1279 = vrot.slane %v1278, 2
        %v1280 = vrot.slane %v1083, 7
        %v1281 = vrot.slane %v1280, 2
        %v1282 = vrot.slane %v1082, 7
        %v1283 = vrot.slane %v1282, 2
        %v1284 = vrot.slane %v1084, 7
        %v1285 = vrot.slane %v1284, 2
        %v1286 = vrot.slane %v1092, 7
        %v1287 = vrot.slane %v1286, 2
        %v1288 = vrot.slane %v1100, 7
        %v1289 = vrot.slane %v1288, 2
        %v1290 = vrot.slane %v1099, 7
        %v1291 = vrot.slane %v1290, 2
        %v1292 = vrot.slane %v1101, 7
        %v1293 = vrot.slane %v1292, 2
        %v1358 = vmax.f32 %v837, %v1167
        %v1359 = vmax.f32 %v845, %v1169
        %v1360 = vmax.f32 %v844, %v1171
        %v1361 = vmax.f32 %v846, %v1173
        %v1362 = vmax.f32 %v854, %v1175
        %v1363 = vmax.f32 %v862, %v1177
        %v1364 = vmax.f32 %v861, %v1179
        %v1365 = vmax.f32 %v863, %v1181
        %v1366 = vmax.f32 %v871, %v1183
        %v1367 = vmax.f32 %v879, %v1185
        %v1368 = vmax.f32 %v878, %v1187
        %v1369 = vmax.f32 %v880, %v1189
        %v1370 = vmax.f32 %v888, %v1191
        %v1371 = vmax.f32 %v896, %v1193
        %v1372 = vmax.f32 %v895, %v1195
        %v1373 = vmax.f32 %v897, %v1197
        %v1374 = vmax.f32 %v905, %v1199
        %v1375 = vmax.f32 %v913, %v1201
        %v1376 = vmax.f32 %v912, %v1203
        %v1377 = vmax.f32 %v914, %v1205
        %v1378 = vmax.f32 %v922, %v1207
        %v1379 = vmax.f32 %v930, %v1209
        %v1380 = vmax.f32 %v929, %v1211
        %v1381 = vmax.f32 %v931, %v1213
        %v1382 = vmax.f32 %v939, %v1215
        %v1383 = vmax.f32 %v947, %v1217
        %v1384 = vmax.f32 %v946, %v1219
        %v1385 = vmax.f32 %v948, %v1221
        %v1386 = vmax.f32 %v956, %v1223
        %v1387 = vmax.f32 %v964, %v1225
        %v1388 = vmax.f32 %v963, %v1227
        %v1389 = vmax.f32 %v965, %v1229
        %v1390 = vmax.f32 %v973, %v1231
        %v1391 = vmax.f32 %v981, %v1233
        %v1392 = vmax.f32 %v980, %v1235
        %v1393 = vmax.f32 %v982, %v1237
        %v1394 = vmax.f32 %v990, %v1239
        %v1395 = vmax.f32 %v998, %v1241
        %v1396 = vmax.f32 %v997, %v1243
        %v1397 = vmax.f32 %v999, %v1245
        %v1398 = vmax.f32 %v1007, %v1247
        %v1399 = vmax.f32 %v1015, %v1249
        %v1400 = vmax.f32 %v1014, %v1251
        %v1401 = vmax.f32 %v1016, %v1253
        %v1402 = vmax.f32 %v1024, %v1255
        %v1403 = vmax.f32 %v1032, %v1257
        %v1404 = vmax.f32 %v1031, %v1259
        %v1405 = vmax.f32 %v1033, %v1261
        %v1406 = vmax.f32 %v1041, %v1263
        %v1407 = vmax.f32 %v1049, %v1265
        %v1408 = vmax.f32 %v1048, %v1267
        %v1409 = vmax.f32 %v1050, %v1269
        %v1410 = vmax.f32 %v1058, %v1271
        %v1411 = vmax.f32 %v1066, %v1273
        %v1412 = vmax.f32 %v1065, %v1275
        %v1413 = vmax.f32 %v1067, %v1277
        %v1414 = vmax.f32 %v1075, %v1279
        %v1415 = vmax.f32 %v1083, %v1281
        %v1416 = vmax.f32 %v1082, %v1283
        %v1417 = vmax.f32 %v1084, %v1285
        %v1418 = vmax.f32 %v1092, %v1287
        %v1419 = vmax.f32 %v1100, %v1289
        %v1420 = vmax.f32 %v1099, %v1291
        %v1421 = vmax.f32 %v1101, %v1293
        %vm1422 = vcmask 253952
        %1423 = vst.msk [vmem:[#allocation2] sm:$0x1] %vm1422, 0.0
        %1424 = vst.msk [vmem:[#allocation2 + $0x10] sm:$0x1] %vm1422, 0.0
        %1425 = vst.msk [vmem:[#allocation2 + $0x20] sm:$0x1] %vm1422, 0.0
        %1426 = vst.msk [vmem:[#allocation2 + $0x30] sm:$0x1] %vm1422, 0.0
        %1427 = vst.msk [vmem:[#allocation2 + $0x40] sm:$0x1] %vm1422, 0.0
        %1428 = vst.msk [vmem:[#allocation2 + $0x50] sm:$0x1] %vm1422, 0.0
        %1429 = vst.msk [vmem:[#allocation2 + $0x60] sm:$0x1] %vm1422, 0.0
        %1430 = vst.msk [vmem:[#allocation2 + $0x70] sm:$0x1] %vm1422, 0.0
        %1431 = vst.msk [vmem:[#allocation2 + $0x9] sm:$0x1] %vm1422, 0.0
        %1432 = vst.msk [vmem:[#allocation2 + $0x19] sm:$0x1] %vm1422, 0.0
        %1433 = vst.msk [vmem:[#allocation2 + $0x29] sm:$0x1] %vm1422, 0.0
        %1434 = vst.msk [vmem:[#allocation2 + $0x39] sm:$0x1] %vm1422, 0.0
        %1435 = vst.msk [vmem:[#allocation2 + $0x49] sm:$0x1] %vm1422, 0.0
        %1436 = vst.msk [vmem:[#allocation2 + $0x59] sm:$0x1] %vm1422, 0.0
        %1437 = vst.msk [vmem:[#allocation2 + $0x69] sm:$0x1] %vm1422, 0.0
        %1438 = vst.msk [vmem:[#allocation2 + $0x79] sm:$0x1] %vm1422, 0.0
        %v1503 = vlaneseq
        %v1504 = vshrl.u32 %v1503, 7
        %v1505 = vsub.s32 0, %v1504
        %v1506 = vrot.slane %v1358, %v1505
        %v1507 = vlaneseq
        %v1508 = vshrl.u32 %v1507, 7
        %v1509 = vsub.s32 0, %v1508
        %v1510 = vrot.slane %v1359, %v1509
        %v1511 = vlaneseq
        %v1512 = vshrl.u32 %v1511, 7
        %v1513 = vsub.s32 0, %v1512
        %v1514 = vrot.slane %v1360, %v1513
        %v1515 = vlaneseq
        %v1516 = vshrl.u32 %v1515, 7
        %v1517 = vsub.s32 0, %v1516
        %v1518 = vrot.slane %v1361, %v1517
        %v1519 = vlaneseq
        %v1520 = vshrl.u32 %v1519, 7
        %v1521 = vsub.s32 0, %v1520
        %v1522 = vrot.slane %v1362, %v1521
        %v1523 = vlaneseq
        %v1524 = vshrl.u32 %v1523, 7
        %v1525 = vsub.s32 0, %v1524
        %v1526 = vrot.slane %v1363, %v1525
        %v1527 = vlaneseq
        %v1528 = vshrl.u32 %v1527, 7
        %v1529 = vsub.s32 0, %v1528
        %v1530 = vrot.slane %v1364, %v1529
        %v1531 = vlaneseq
        %v1532 = vshrl.u32 %v1531, 7
        %v1533 = vsub.s32 0, %v1532
        %v1534 = vrot.slane %v1365, %v1533
        %v1535 = vlaneseq
        %v1536 = vshrl.u32 %v1535, 7
        %v1537 = vsub.s32 0, %v1536
        %v1538 = vrot.slane %v1366, %v1537
        %v1539 = vlaneseq
        %v1540 = vshrl.u32 %v1539, 7
        %v1541 = vsub.s32 0, %v1540
        %v1542 = vrot.slane %v1367, %v1541
        %v1543 = vlaneseq
        %v1544 = vshrl.u32 %v1543, 7
        %v1545 = vsub.s32 0, %v1544
        %v1546 = vrot.slane %v1368, %v1545
        %v1547 = vlaneseq
        %v1548 = vshrl.u32 %v1547, 7
        %v1549 = vsub.s32 0, %v1548
        %v1550 = vrot.slane %v1369, %v1549
        %v1551 = vlaneseq
        %v1552 = vshrl.u32 %v1551, 7
        %v1553 = vsub.s32 0, %v1552
        %v1554 = vrot.slane %v1370, %v1553
        %v1555 = vlaneseq
        %v1556 = vshrl.u32 %v1555, 7
        %v1557 = vsub.s32 0, %v1556
        %v1558 = vrot.slane %v1371, %v1557
        %v1559 = vlaneseq
        %v1560 = vshrl.u32 %v1559, 7
        %v1561 = vsub.s32 0, %v1560
        %v1562 = vrot.slane %v1372, %v1561
        %v1563 = vlaneseq
        %v1564 = vshrl.u32 %v1563, 7
        %v1565 = vsub.s32 0, %v1564
        %v1566 = vrot.slane %v1373, %v1565
        %v1567 = vlaneseq
        %v1568 = vshrl.u32 %v1567, 7
        %v1569 = vsub.s32 0, %v1568
        %v1570 = vrot.slane %v1374, %v1569
        %v1571 = vlaneseq
        %v1572 = vshrl.u32 %v1571, 7
        %v1573 = vsub.s32 0, %v1572
        %v1574 = vrot.slane %v1375, %v1573
        %v1575 = vlaneseq
        %v1576 = vshrl.u32 %v1575, 7
        %v1577 = vsub.s32 0, %v1576
        %v1578 = vrot.slane %v1376, %v1577
        %v1579 = vlaneseq
        %v1580 = vshrl.u32 %v1579, 7
        %v1581 = vsub.s32 0, %v1580
        %v1582 = vrot.slane %v1377, %v1581
        %v1583 = vlaneseq
        %v1584 = vshrl.u32 %v1583, 7
        %v1585 = vsub.s32 0, %v1584
        %v1586 = vrot.slane %v1378, %v1585
        %v1587 = vlaneseq
        %v1588 = vshrl.u32 %v1587, 7
        %v1589 = vsub.s32 0, %v1588
        %v1590 = vrot.slane %v1379, %v1589
        %v1591 = vlaneseq
        %v1592 = vshrl.u32 %v1591, 7
        %v1593 = vsub.s32 0, %v1592
        %v1594 = vrot.slane %v1380, %v1593
        %v1595 = vlaneseq
        %v1596 = vshrl.u32 %v1595, 7
        %v1597 = vsub.s32 0, %v1596
        %v1598 = vrot.slane %v1381, %v1597
        %v1599 = vlaneseq
        %v1600 = vshrl.u32 %v1599, 7
        %v1601 = vsub.s32 0, %v1600
        %v1602 = vrot.slane %v1382, %v1601
        %v1603 = vlaneseq
        %v1604 = vshrl.u32 %v1603, 7
        %v1605 = vsub.s32 0, %v1604
        %v1606 = vrot.slane %v1383, %v1605
        %v1607 = vlaneseq
        %v1608 = vshrl.u32 %v1607, 7
        %v1609 = vsub.s32 0, %v1608
        %v1610 = vrot.slane %v1384, %v1609
        %v1611 = vlaneseq
        %v1612 = vshrl.u32 %v1611, 7
        %v1613 = vsub.s32 0, %v1612
        %v1614 = vrot.slane %v1385, %v1613
        %v1615 = vlaneseq
        %v1616 = vshrl.u32 %v1615, 7
        %v1617 = vsub.s32 0, %v1616
        %v1618 = vrot.slane %v1386, %v1617
        %v1619 = vlaneseq
        %v1620 = vshrl.u32 %v1619, 7
        %v1621 = vsub.s32 0, %v1620
        %v1622 = vrot.slane %v1387, %v1621
        %v1623 = vlaneseq
        %v1624 = vshrl.u32 %v1623, 7
        %v1625 = vsub.s32 0, %v1624
        %v1626 = vrot.slane %v1388, %v1625
        %v1627 = vlaneseq
        %v1628 = vshrl.u32 %v1627, 7
        %v1629 = vsub.s32 0, %v1628
        %v1630 = vrot.slane %v1389, %v1629
        %v1631 = vlaneseq
        %v1632 = vshrl.u32 %v1631, 7
        %v1633 = vsub.s32 0, %v1632
        %v1634 = vrot.slane %v1390, %v1633
        %v1635 = vlaneseq
        %v1636 = vshrl.u32 %v1635, 7
        %v1637 = vsub.s32 0, %v1636
        %v1638 = vrot.slane %v1391, %v1637
        %v1639 = vlaneseq
        %v1640 = vshrl.u32 %v1639, 7
        %v1641 = vsub.s32 0, %v1640
        %v1642 = vrot.slane %v1392, %v1641
        %v1643 = vlaneseq
        %v1644 = vshrl.u32 %v1643, 7
        %v1645 = vsub.s32 0, %v1644
        %v1646 = vrot.slane %v1393, %v1645
        %v1647 = vlaneseq
        %v1648 = vshrl.u32 %v1647, 7
        %v1649 = vsub.s32 0, %v1648
        %v1650 = vrot.slane %v1394, %v1649
        %v1651 = vlaneseq
        %v1652 = vshrl.u32 %v1651, 7
        %v1653 = vsub.s32 0, %v1652
        %v1654 = vrot.slane %v1395, %v1653
        %v1655 = vlaneseq
        %v1656 = vshrl.u32 %v1655, 7
        %v1657 = vsub.s32 0, %v1656
        %v1658 = vrot.slane %v1396, %v1657
        %v1659 = vlaneseq
        %v1660 = vshrl.u32 %v1659, 7
        %v1661 = vsub.s32 0, %v1660
        %v1662 = vrot.slane %v1397, %v1661
        %v1663 = vlaneseq
        %v1664 = vshrl.u32 %v1663, 7
        %v1665 = vsub.s32 0, %v1664
        %v1666 = vrot.slane %v1398, %v1665
        %v1667 = vlaneseq
        %v1668 = vshrl.u32 %v1667, 7
        %v1669 = vsub.s32 0, %v1668
        %v1670 = vrot.slane %v1399, %v1669
        %v1671 = vlaneseq
        %v1672 = vshrl.u32 %v1671, 7
        %v1673 = vsub.s32 0, %v1672
        %v1674 = vrot.slane %v1400, %v1673
        %v1675 = vlaneseq
        %v1676 = vshrl.u32 %v1675, 7
        %v1677 = vsub.s32 0, %v1676
        %v1678 = vrot.slane %v1401, %v1677
        %v1679 = vlaneseq
        %v1680 = vshrl.u32 %v1679, 7
        %v1681 = vsub.s32 0, %v1680
        %v1682 = vrot.slane %v1402, %v1681
        %v1683 = vlaneseq
        %v1684 = vshrl.u32 %v1683, 7
        %v1685 = vsub.s32 0, %v1684
        %v1686 = vrot.slane %v1403, %v1685
        %v1687 = vlaneseq
        %v1688 = vshrl.u32 %v1687, 7
        %v1689 = vsub.s32 0, %v1688
        %v1690 = vrot.slane %v1404, %v1689
        %v1691 = vlaneseq
        %v1692 = vshrl.u32 %v1691, 7
        %v1693 = vsub.s32 0, %v1692
        %v1694 = vrot.slane %v1405, %v1693
        %v1695 = vlaneseq
        %v1696 = vshrl.u32 %v1695, 7
        %v1697 = vsub.s32 0, %v1696
        %v1698 = vrot.slane %v1406, %v1697
        %v1699 = vlaneseq
        %v1700 = vshrl.u32 %v1699, 7
        %v1701 = vsub.s32 0, %v1700
        %v1702 = vrot.slane %v1407, %v1701
        %v1703 = vlaneseq
        %v1704 = vshrl.u32 %v1703, 7
        %v1705 = vsub.s32 0, %v1704
        %v1706 = vrot.slane %v1408, %v1705
        %v1707 = vlaneseq
        %v1708 = vshrl.u32 %v1707, 7
        %v1709 = vsub.s32 0, %v1708
        %v1710 = vrot.slane %v1409, %v1709
        %v1711 = vlaneseq
        %v1712 = vshrl.u32 %v1711, 7
        %v1713 = vsub.s32 0, %v1712
        %v1714 = vrot.slane %v1410, %v1713
        %v1715 = vlaneseq
        %v1716 = vshrl.u32 %v1715, 7
        %v1717 = vsub.s32 0, %v1716
        %v1718 = vrot.slane %v1411, %v1717
        %v1719 = vlaneseq
        %v1720 = vshrl.u32 %v1719, 7
        %v1721 = vsub.s32 0, %v1720
        %v1722 = vrot.slane %v1412, %v1721
        %v1723 = vlaneseq
        %v1724 = vshrl.u32 %v1723, 7
        %v1725 = vsub.s32 0, %v1724
        %v1726 = vrot.slane %v1413, %v1725
        %v1727 = vlaneseq
        %v1728 = vshrl.u32 %v1727, 7
        %v1729 = vsub.s32 0, %v1728
        %v1730 = vrot.slane %v1414, %v1729
        %v1731 = vlaneseq
        %v1732 = vshrl.u32 %v1731, 7
        %v1733 = vsub.s32 0, %v1732
        %v1734 = vrot.slane %v1415, %v1733
        %v1735 = vlaneseq
        %v1736 = vshrl.u32 %v1735, 7
        %v1737 = vsub.s32 0, %v1736
        %v1738 = vrot.slane %v1416, %v1737
        %v1739 = vlaneseq
        %v1740 = vshrl.u32 %v1739, 7
        %v1741 = vsub.s32 0, %v1740
        %v1742 = vrot.slane %v1417, %v1741
        %v1743 = vlaneseq
        %v1744 = vshrl.u32 %v1743, 7
        %v1745 = vsub.s32 0, %v1744
        %v1746 = vrot.slane %v1418, %v1745
        %v1747 = vlaneseq
        %v1748 = vshrl.u32 %v1747, 7
        %v1749 = vsub.s32 0, %v1748
        %v1750 = vrot.slane %v1419, %v1749
        %v1751 = vlaneseq
        %v1752 = vshrl.u32 %v1751, 7
        %v1753 = vsub.s32 0, %v1752
        %v1754 = vrot.slane %v1420, %v1753
        %v1755 = vlaneseq
        %v1756 = vshrl.u32 %v1755, 7
        %v1757 = vsub.s32 0, %v1756
        %v1758 = vrot.slane %v1421, %v1757
        %vm1759 = vcmask 1041409
        %v1760 = vsel %vm1759, %v1510, %v1506
        %vm1761 = vcmask 1042434
        %v1762 = vsel %vm1761, %v1514, %v1760
        %vm1763 = vcmask 1043459
        %v1764 = vsel %vm1763, %v1518, %v1762
        %vm1765 = vcmask 1044484
        %v1766 = vsel %vm1765, %v1522, %v1764
        %vm1767 = vcmask 1045509
        %v1768 = vsel %vm1767, %v1526, %v1766
        %vm1769 = vcmask 1046534
        %v1770 = vsel %vm1769, %v1530, %v1768
        %vm1771 = vcmask 1047559
        %v1772 = vsel %vm1771, %v1534, %v1770
        %v1773 = vsel %vm1759, %v1542, %v1538
        %v1774 = vsel %vm1761, %v1546, %v1773
        %v1775 = vsel %vm1763, %v1550, %v1774
        %v1776 = vsel %vm1765, %v1554, %v1775
        %v1777 = vsel %vm1767, %v1558, %v1776
        %v1778 = vsel %vm1769, %v1562, %v1777
        %v1779 = vsel %vm1771, %v1566, %v1778
        %v1780 = vsel %vm1759, %v1574, %v1570
        %v1781 = vsel %vm1761, %v1578, %v1780
        %v1782 = vsel %vm1763, %v1582, %v1781
        %v1783 = vsel %vm1765, %v1586, %v1782
        %v1784 = vsel %vm1767, %v1590, %v1783
        %v1785 = vsel %vm1769, %v1594, %v1784
        %v1786 = vsel %vm1771, %v1598, %v1785
        %v1787 = vsel %vm1759, %v1606, %v1602
        %v1788 = vsel %vm1761, %v1610, %v1787
        %v1789 = vsel %vm1763, %v1614, %v1788
        %v1790 = vsel %vm1765, %v1618, %v1789
        %v1791 = vsel %vm1767, %v1622, %v1790
        %v1792 = vsel %vm1769, %v1626, %v1791
        %v1793 = vsel %vm1771, %v1630, %v1792
        %v1794 = vsel %vm1759, %v1638, %v1634
        %v1795 = vsel %vm1761, %v1642, %v1794
        %v1796 = vsel %vm1763, %v1646, %v1795
        %v1797 = vsel %vm1765, %v1650, %v1796
        %v1798 = vsel %vm1767, %v1654, %v1797
        %v1799 = vsel %vm1769, %v1658, %v1798
        %v1800 = vsel %vm1771, %v1662, %v1799
        %v1801 = vsel %vm1759, %v1670, %v1666
        %v1802 = vsel %vm1761, %v1674, %v1801
        %v1803 = vsel %vm1763, %v1678, %v1802
        %v1804 = vsel %vm1765, %v1682, %v1803
        %v1805 = vsel %vm1767, %v1686, %v1804
        %v1806 = vsel %vm1769, %v1690, %v1805
        %v1807 = vsel %vm1771, %v1694, %v1806
        %v1808 = vsel %vm1759, %v1702, %v1698
        %v1809 = vsel %vm1761, %v1706, %v1808
        %v1810 = vsel %vm1763, %v1710, %v1809
        %v1811 = vsel %vm1765, %v1714, %v1810
        %v1812 = vsel %vm1767, %v1718, %v1811
        %v1813 = vsel %vm1769, %v1722, %v1812
        %v1814 = vsel %vm1771, %v1726, %v1813
        %v1815 = vsel %vm1759, %v1734, %v1730
        %v1816 = vsel %vm1761, %v1738, %v1815
        %v1817 = vsel %vm1763, %v1742, %v1816
        %v1818 = vsel %vm1765, %v1746, %v1817
        %v1819 = vsel %vm1767, %v1750, %v1818
        %v1820 = vsel %vm1769, %v1754, %v1819
        %v1821 = vsel %vm1771, %v1758, %v1820
        %vm1830 = vcmask 261120
        %1831 = vst.msk [vmem:[#allocation2 + $0x1] sm:$0xff] %vm1830, %v1772
        %1832 = vst.msk [vmem:[#allocation2 + $0x11] sm:$0xff] %vm1830, %v1779
        %1833 = vst.msk [vmem:[#allocation2 + $0x21] sm:$0xff] %vm1830, %v1786
        %1834 = vst.msk [vmem:[#allocation2 + $0x31] sm:$0xff] %vm1830, %v1793
        %1835 = vst.msk [vmem:[#allocation2 + $0x41] sm:$0xff] %vm1830, %v1800
        %1836 = vst.msk [vmem:[#allocation2 + $0x51] sm:$0xff] %vm1830, %v1807
        %1837 = vst.msk [vmem:[#allocation2 + $0x61] sm:$0xff] %vm1830, %v1814
        %1838 = vst.msk [vmem:[#allocation2 + $0x71] sm:$0xff] %vm1830, %v1821
        %v1839 = vld [vmem:[#allocation2] sm:$0xff]
        %v1840 = vld [vmem:[#allocation2 + $0x10] sm:$0xff]
        %v1841 = vld [vmem:[#allocation2 + $0x20] sm:$0xff]
        %v1842 = vld [vmem:[#allocation2 + $0x30] sm:$0xff]
        %v1843 = vld [vmem:[#allocation2 + $0x40] sm:$0xff]
        %v1844 = vld [vmem:[#allocation2 + $0x50] sm:$0xff]
        %v1845 = vld [vmem:[#allocation2 + $0x60] sm:$0xff]
        %v1846 = vld [vmem:[#allocation2 + $0x70] sm:$0xff]
        %v1847 = vpack.c.bf16 %v1839, %v1839
        %v1848 = vpack.c.bf16 %v1840, %v1840
        %v1849 = vpack.c.bf16 %v1841, %v1841
        %v1850 = vpack.c.bf16 %v1842, %v1842
        %v1851 = vpack.c.bf16 %v1843, %v1843
        %v1852 = vpack.c.bf16 %v1844, %v1844
        %v1853 = vpack.c.bf16 %v1845, %v1845
        %v1854 = vpack.c.bf16 %v1846, %v1846
        %v1855 = vld [vmem:[#allocation2 + $0x1] sm:$0xff]
        %v1856 = vld [vmem:[#allocation2 + $0x11] sm:$0xff]
        %v1857 = vld [vmem:[#allocation2 + $0x21] sm:$0xff]
        %v1858 = vld [vmem:[#allocation2 + $0x31] sm:$0xff]
        %v1859 = vld [vmem:[#allocation2 + $0x41] sm:$0xff]
        %v1860 = vld [vmem:[#allocation2 + $0x51] sm:$0xff]
        %v1861 = vld [vmem:[#allocation2 + $0x61] sm:$0xff]
        %v1862 = vld [vmem:[#allocation2 + $0x71] sm:$0xff]
        %v1863 = vpack.c.bf16 %v1855, %v1855
        %v1864 = vpack.c.bf16 %v1856, %v1856
        %v1865 = vpack.c.bf16 %v1857, %v1857
        %v1866 = vpack.c.bf16 %v1858, %v1858
        %v1867 = vpack.c.bf16 %v1859, %v1859
        %v1868 = vpack.c.bf16 %v1860, %v1860
        %v1869 = vpack.c.bf16 %v1861, %v1861
        %v1870 = vpack.c.bf16 %v1862, %v1862
        %v1871 = vld [vmem:[#allocation2 + $0x2] sm:$0xff]
        %v1872 = vld [vmem:[#allocation2 + $0x12] sm:$0xff]
        %v1873 = vld [vmem:[#allocation2 + $0x22] sm:$0xff]
        %v1874 = vld [vmem:[#allocation2 + $0x32] sm:$0xff]
        %v1875 = vld [vmem:[#allocation2 + $0x42] sm:$0xff]
        %v1876 = vld [vmem:[#allocation2 + $0x52] sm:$0xff]
        %v1877 = vld [vmem:[#allocation2 + $0x62] sm:$0xff]
        %v1878 = vld [vmem:[#allocation2 + $0x72] sm:$0xff]
        %v1879 = vpack.c.bf16 %v1871, %v1871
        %v1880 = vpack.c.bf16 %v1872, %v1872
        %v1881 = vpack.c.bf16 %v1873, %v1873
        %v1882 = vpack.c.bf16 %v1874, %v1874
        %v1883 = vpack.c.bf16 %v1875, %v1875
        %v1884 = vpack.c.bf16 %v1876, %v1876
        %v1885 = vpack.c.bf16 %v1877, %v1877
        %v1886 = vpack.c.bf16 %v1878, %v1878
        %1895 = vrot.lane.b32.xlu0 %v1863, 32
        %v1896 = vpop.permute.xlu0 %1895
        %1897 = vrot.lane.b32.xlu0 %v1864, 32
        %v1898 = vpop.permute.xlu0 %1897
        %1899 = vrot.lane.b32.xlu0 %v1865, 32
        %v1900 = vpop.permute.xlu0 %1899
        %1901 = vrot.lane.b32.xlu0 %v1866, 32
        %v1902 = vpop.permute.xlu0 %1901
        %1903 = vrot.lane.b32.xlu0 %v1867, 32
        %v1904 = vpop.permute.xlu0 %1903
        %1905 = vrot.lane.b32.xlu0 %v1868, 32
        %v1906 = vpop.permute.xlu0 %1905
        %1907 = vrot.lane.b32.xlu0 %v1869, 32
        %v1908 = vpop.permute.xlu0 %1907
        %1909 = vrot.lane.b32.xlu0 %v1870, 32
        %v1910 = vpop.permute.xlu0 %1909
        %1919 = vrot.lane.b32.xlu0 %v1879, 64
        %v1920 = vpop.permute.xlu0 %1919
        %1921 = vrot.lane.b32.xlu0 %v1880, 64
        %v1922 = vpop.permute.xlu0 %1921
        %1923 = vrot.lane.b32.xlu0 %v1881, 64
        %v1924 = vpop.permute.xlu0 %1923
        %1925 = vrot.lane.b32.xlu0 %v1882, 64
        %v1926 = vpop.permute.xlu0 %1925
        %1927 = vrot.lane.b32.xlu0 %v1883, 64
        %v1928 = vpop.permute.xlu0 %1927
        %1929 = vrot.lane.b32.xlu0 %v1884, 64
        %v1930 = vpop.permute.xlu0 %1929
        %1931 = vrot.lane.b32.xlu0 %v1885, 64
        %v1932 = vpop.permute.xlu0 %1931
        %1933 = vrot.lane.b32.xlu0 %v1886, 64
        %v1934 = vpop.permute.xlu0 %1933
        %v1937 = vsel %vm1830, %v1847, %v1896
        %v1940 = vsel %vm1830, %v1848, %v1898
        %v1943 = vsel %vm1830, %v1849, %v1900
        %v1946 = vsel %vm1830, %v1850, %v1902
        %v1949 = vsel %vm1830, %v1851, %v1904
        %v1952 = vsel %vm1830, %v1852, %v1906
        %v1955 = vsel %vm1830, %v1853, %v1908
        %v1958 = vsel %vm1830, %v1854, %v1910
        %vm1959 = vcmask 523264
        %v1961 = vsel %vm1959, %v1937, %v1920
        %v1963 = vsel %vm1959, %v1940, %v1922
        %v1965 = vsel %vm1959, %v1943, %v1924
        %v1967 = vsel %vm1959, %v1946, %v1926
        %v1969 = vsel %vm1959, %v1949, %v1928
        %v1971 = vsel %vm1959, %v1952, %v1930
        %v1973 = vsel %vm1959, %v1955, %v1932
        %v1975 = vsel %vm1959, %v1958, %v1934
        %v1976 = vld [vmem:[%s3] sm:$0xf]
        %v1977 = vld [vmem:[%s3 + $0x4] sm:$0xf]
        %v1978 = vld [vmem:[%s3 + $0x8] sm:$0xf]
        %v1979 = vld [vmem:[%s3 + $0xc] sm:$0xf]
        %v1980 = vld [vmem:[%s3 + $0x10] sm:$0xf]
        %v1981 = vld [vmem:[%s3 + $0x14] sm:$0xf]
        %v1982 = vld [vmem:[%s3 + $0x18] sm:$0xf]
        %v1983 = vld [vmem:[%s3 + $0x1c] sm:$0xf]
        %v1984 = vld [vmem:[%s3 + $0x20] sm:$0xf]
        %v1985 = vld [vmem:[%s3 + $0x24] sm:$0xf]
        %v1986 = vld [vmem:[%s3 + $0x28] sm:$0xf]
        %v1987 = vld [vmem:[%s3 + $0x2c] sm:$0xf]
        %v1996 = vunpack.c.l.b16 %v1961
        %v1997 = vunpack.c.l.b16 %v1963
        %v1998 = vunpack.c.l.b16 %v1965
        %v1999 = vunpack.c.l.b16 %v1967
        %v2000 = vunpack.c.l.b16 %v1969
        %v2001 = vunpack.c.l.b16 %v1971
        %v2002 = vunpack.c.l.b16 %v1973
        %v2003 = vunpack.c.l.b16 %v1975
        %v2004 = vpack.c.b16 %v1997, %v1996
        %v2005 = vpack.c.b16 %v1999, %v1998
        %v2006 = vpack.c.b16 %v2001, %v2000
        %v2007 = vpack.c.b16 %v2003, %v2002
        %v2020 = vunpack.c.l.b16 %v1976
        %v2021 = vunpack.c.l.b16 %v1977
        %v2022 = vunpack.c.l.b16 %v1978
        %v2023 = vunpack.c.l.b16 %v1979
        %v2024 = vunpack.c.l.b16 %v1980
        %v2025 = vunpack.c.l.b16 %v1981
        %v2026 = vunpack.c.l.b16 %v1982
        %v2027 = vunpack.c.l.b16 %v1983
        %v2028 = vunpack.c.l.b16 %v1984
        %v2029 = vunpack.c.l.b16 %v1985
        %v2030 = vunpack.c.l.b16 %v1986
        %v2031 = vunpack.c.l.b16 %v1987
        %v2032 = vpack.c.b16 %v2021, %v2020
        %v2033 = vpack.c.b16 %v2023, %v2022
        %v2034 = vpack.c.b16 %v2025, %v2024
        %v2035 = vpack.c.b16 %v2027, %v2026
        %v2036 = vpack.c.b16 %v2029, %v2028
        %v2037 = vpack.c.b16 %v2031, %v2030
        %vm2044 = vcmask 785408
        %v2046 = vsel %vm2044, %v2004, 0
        %v2049 = vsel %vm2044, %v2005, 0
        %v2052 = vsel %vm2044, %v2006, 0
        %v2055 = vsel %vm2044, %v2007, 0
        %2057 = vmatprep.subr.bf16.mxu0 0
        %2058 = vmatpush1.bf16.msra.mxu0 %v2032
        %2059 = vmatprep.subr.bf16.mxu0 0
        %2060 = vmatpush1.bf16.msra.mxu0 %v2033
        %2061 = vmatprep.subr.bf16.mxu0 0
        %2062 = vmatpush1.bf16.msra.mxu0 %v2034
        %2063 = vmatprep.subr.bf16.mxu0 0
        %2064 = vmatpush1.bf16.msra.mxu0 %v2035
        %2065 = vmatprep.subr.bf16.mxu0 0
        %2066 = vmatpush1.bf16.msra.mxu0 %v2036
        %2067 = vmatprep.subr.bf16.mxu0 0
        %2068 = vmatpush1.bf16.msra.mxu0 %v2037
        %2069 = vmatprep.subr.bf16.mxu0 0
        %2070 = vmatpush1.bf16.msra.mxu0 0
        %2071 = vmatprep.subr.bf16.mxu0 0
        %2072 = vmatpush1.bf16.msra.mxu0 0
        %2073 = vmatprep.subr.bf16.mxu0 0
        %2074 = vmatpush1.bf16.msra.mxu0 0
        %2075 = vmatprep.subr.bf16.mxu0 0
        %2076 = vmatpush1.bf16.msra.mxu0 0
        %2077 = vmatprep.subr.bf16.mxu0 0
        %2078 = vmatpush1.bf16.msra.mxu0 0
        %2079 = vmatprep.subr.bf16.mxu0 0
        %2080 = vmatpush1.bf16.msra.mxu0 0
        %2081 = vmatprep.subr.bf16.mxu0 0
        %2082 = vmatpush1.bf16.msra.mxu0 0
        %2083 = vmatprep.subr.bf16.mxu0 0
        %2084 = vmatpush1.bf16.msra.mxu0 0
        %2085 = vmatprep.subr.bf16.mxu0 0
        %2086 = vmatpush1.bf16.msra.mxu0 0
        %2087 = vmatprep.subr.bf16.mxu0 0
        %2088 = vmatpush1.bf16.msra.mxu0 0
        %2089 = vmatprep.mubr.bf16.mxu0 0
        %2090 = vmatmul.mubr.bf16.gmra.mrb[0].mxu0 %v2046
        %v2091 = vpop.f32.mrb[0].mxu0
        %v2092 = vadd.f32 0.0, %v2091
        %v2093 = vpop.f32.mrb[0].mxu0
        %v2094 = vpop.f32.mrb[0].mxu0
        %v2095 = vadd.f32 0.0, %v2094
        %v2096 = vpop.f32.mrb[0].mxu0
        %2097 = vmatprep.mubr.bf16.mxu0 0
        %2098 = vmatmul.mubr.bf16.gmra.mrb[0].mxu0 %v2049
        %v2099 = vpop.f32.mrb[0].mxu0
        %v2100 = vadd.f32 0.0, %v2099
        %v2101 = vpop.f32.mrb[0].mxu0
        %v2102 = vpop.f32.mrb[0].mxu0
        %v2103 = vadd.f32 0.0, %v2102
        %v2104 = vpop.f32.mrb[0].mxu0
        %2105 = vmatprep.mubr.bf16.mxu0 0
        %2106 = vmatmul.mubr.bf16.gmra.mrb[0].mxu0 %v2052
        %v2107 = vpop.f32.mrb[0].mxu0
        %v2108 = vadd.f32 0.0, %v2107
        %v2109 = vpop.f32.mrb[0].mxu0
        %v2110 = vpop.f32.mrb[0].mxu0
        %v2111 = vadd.f32 0.0, %v2110
        %v2112 = vpop.f32.mrb[0].mxu0
        %2113 = vmatprep.mubr.bf16.mxu0 0
        %2114 = vmatmul.mubr.bf16.gmra.mrb[0].mxu0 %v2055
        %v2115 = vpop.f32.mrb[0].mxu0
        %v2116 = vadd.f32 0.0, %v2115
        %v2117 = vpop.f32.mrb[0].mxu0
        %v2118 = vpop.f32.mrb[0].mxu0
        %v2119 = vadd.f32 0.0, %v2118
        %v2120 = vpop.f32.mrb[0].mxu0
        %2121 = vdwg.mxu0
        %v2122 = vld [vmem:[%s4] sm:$0x1]
        %v2124 = vlaneseq
        %v2125 = vshrl.u32 %v2124, 7
        %v2126 = vsub.s32 0, %v2125
        %v2127 = vrot.slane %v2122, %v2126
        %v2129 = vadd.f32 %v2092, %v2127
        %v2130 = vadd.f32 %v2095, %v2127
        %v2131 = vadd.f32 %v2100, %v2127
        %v2132 = vadd.f32 %v2103, %v2127
        %v2133 = vadd.f32 %v2108, %v2127
        %v2134 = vadd.f32 %v2111, %v2127
        %v2135 = vadd.f32 %v2116, %v2127
        %v2136 = vadd.f32 %v2119, %v2127
        %v2137 = vmax.f32 %v2129, 0.0
        %v2138 = vmax.f32 %v2130, 0.0
        %v2139 = vmax.f32 %v2131, 0.0
        %v2140 = vmax.f32 %v2132, 0.0
        %v2141 = vmax.f32 %v2133, 0.0
        %v2142 = vmax.f32 %v2134, 0.0
        %v2143 = vmax.f32 %v2135, 0.0
        %v2144 = vmax.f32 %v2136, 0.0
        %v2153 = vcombine.high %v2137, %v2137
        %v2155 = vunpack.c.l.s4 1983009808
        %v2156 = vunpack.c.0.s8 %v2155
        %v2157 = vlaneseq
        %v2158 = vshrl.u32 %v2157, 7
        %v2159 = vsub.s32 %v2156, %v2158
        %v2160 = vrot.slane %v2137, %v2159
        %v2162 = vunpack.c.l.s4 1983009808
        %v2163 = vunpack.c.0.s8 %v2162
        %v2164 = vlaneseq
        %v2165 = vshrl.u32 %v2164, 7
        %v2166 = vsub.s32 %v2163, %v2165
        %v2167 = vrot.slane %v2153, %v2166
        %v2168 = vcombine.high %v2160, %v2160
        %v2169 = vcombine.high %v2167, %v2167
        %v2170 = vcombine.high %v2138, %v2138
        %v2172 = vunpack.c.l.s4 1983009808
        %v2173 = vunpack.c.0.s8 %v2172
        %v2174 = vlaneseq
        %v2175 = vshrl.u32 %v2174, 7
        %v2176 = vsub.s32 %v2173, %v2175
        %v2177 = vrot.slane %v2138, %v2176
        %v2179 = vunpack.c.l.s4 1983009808
        %v2180 = vunpack.c.0.s8 %v2179
        %v2181 = vlaneseq
        %v2182 = vshrl.u32 %v2181, 7
        %v2183 = vsub.s32 %v2180, %v2182
        %v2184 = vrot.slane %v2170, %v2183
        %v2185 = vcombine.high %v2177, %v2177
        %v2186 = vcombine.high %v2184, %v2184
        %v2187 = vcombine.high %v2139, %v2139
        %v2189 = vunpack.c.l.s4 1983009808
        %v2190 = vunpack.c.0.s8 %v2189
        %v2191 = vlaneseq
        %v2192 = vshrl.u32 %v2191, 7
        %v2193 = vsub.s32 %v2190, %v2192
        %v2194 = vrot.slane %v2139, %v2193
        %v2196 = vunpack.c.l.s4 1983009808
        %v2197 = vunpack.c.0.s8 %v2196
        %v2198 = vlaneseq
        %v2199 = vshrl.u32 %v2198, 7
        %v2200 = vsub.s32 %v2197, %v2199
        %v2201 = vrot.slane %v2187, %v2200
        %v2202 = vcombine.high %v2194, %v2194
        %v2203 = vcombine.high %v2201, %v2201
        %v2204 = vcombine.high %v2140, %v2140
        %v2206 = vunpack.c.l.s4 1983009808
        %v2207 = vunpack.c.0.s8 %v2206
        %v2208 = vlaneseq
        %v2209 = vshrl.u32 %v2208, 7
        %v2210 = vsub.s32 %v2207, %v2209
        %v2211 = vrot.slane %v2140, %v2210
        %v2213 = vunpack.c.l.s4 1983009808
        %v2214 = vunpack.c.0.s8 %v2213
        %v2215 = vlaneseq
        %v2216 = vshrl.u32 %v2215, 7
        %v2217 = vsub.s32 %v2214, %v2216
        %v2218 = vrot.slane %v2204, %v2217
        %v2219 = vcombine.high %v2211, %v2211
        %v2220 = vcombine.high %v2218, %v2218
        %v2221 = vcombine.high %v2141, %v2141
        %v2223 = vunpack.c.l.s4 1983009808
        %v2224 = vunpack.c.0.s8 %v2223
        %v2225 = vlaneseq
        %v2226 = vshrl.u32 %v2225, 7
        %v2227 = vsub.s32 %v2224, %v2226
        %v2228 = vrot.slane %v2141, %v2227
        %v2230 = vunpack.c.l.s4 1983009808
        %v2231 = vunpack.c.0.s8 %v2230
        %v2232 = vlaneseq
        %v2233 = vshrl.u32 %v2232, 7
        %v2234 = vsub.s32 %v2231, %v2233
        %v2235 = vrot.slane %v2221, %v2234
        %v2236 = vcombine.high %v2228, %v2228
        %v2237 = vcombine.high %v2235, %v2235
        %v2238 = vcombine.high %v2142, %v2142
        %v2240 = vunpack.c.l.s4 1983009808
        %v2241 = vunpack.c.0.s8 %v2240
        %v2242 = vlaneseq
        %v2243 = vshrl.u32 %v2242, 7
        %v2244 = vsub.s32 %v2241, %v2243
        %v2245 = vrot.slane %v2142, %v2244
        %v2247 = vunpack.c.l.s4 1983009808
        %v2248 = vunpack.c.0.s8 %v2247
        %v2249 = vlaneseq
        %v2250 = vshrl.u32 %v2249, 7
        %v2251 = vsub.s32 %v2248, %v2250
        %v2252 = vrot.slane %v2238, %v2251
        %v2253 = vcombine.high %v2245, %v2245
        %v2254 = vcombine.high %v2252, %v2252
        %v2255 = vcombine.high %v2143, %v2143
        %v2257 = vunpack.c.l.s4 1983009808
        %v2258 = vunpack.c.0.s8 %v2257
        %v2259 = vlaneseq
        %v2260 = vshrl.u32 %v2259, 7
        %v2261 = vsub.s32 %v2258, %v2260
        %v2262 = vrot.slane %v2143, %v2261
        %v2264 = vunpack.c.l.s4 1983009808
        %v2265 = vunpack.c.0.s8 %v2264
        %v2266 = vlaneseq
        %v2267 = vshrl.u32 %v2266, 7
        %v2268 = vsub.s32 %v2265, %v2267
        %v2269 = vrot.slane %v2255, %v2268
        %v2270 = vcombine.high %v2262, %v2262
        %v2271 = vcombine.high %v2269, %v2269
        %v2272 = vcombine.high %v2144, %v2144
        %v2274 = vunpack.c.l.s4 1983009808
        %v2275 = vunpack.c.0.s8 %v2274
        %v2276 = vlaneseq
        %v2277 = vshrl.u32 %v2276, 7
        %v2278 = vsub.s32 %v2275, %v2277
        %v2279 = vrot.slane %v2144, %v2278
        %v2281 = vunpack.c.l.s4 1983009808
        %v2282 = vunpack.c.0.s8 %v2281
        %v2283 = vlaneseq
        %v2284 = vshrl.u32 %v2283, 7
        %v2285 = vsub.s32 %v2282, %v2284
        %v2286 = vrot.slane %v2272, %v2285
        %v2287 = vcombine.high %v2279, %v2279
        %v2288 = vcombine.high %v2286, %v2286
        %v2321 = vrot.slane %v2160, 7
        %v2322 = vrot.slane %v2321, 2
        %v2323 = vrot.slane %v2168, 7
        %v2324 = vrot.slane %v2323, 2
        %v2325 = vrot.slane %v2167, 7
        %v2326 = vrot.slane %v2325, 2
        %v2327 = vrot.slane %v2169, 7
        %v2328 = vrot.slane %v2327, 2
        %v2329 = vrot.slane %v2177, 7
        %v2330 = vrot.slane %v2329, 2
        %v2331 = vrot.slane %v2185, 7
        %v2332 = vrot.slane %v2331, 2
        %v2333 = vrot.slane %v2184, 7
        %v2334 = vrot.slane %v2333, 2
        %v2335 = vrot.slane %v2186, 7
        %v2336 = vrot.slane %v2335, 2
        %v2337 = vrot.slane %v2194, 7
        %v2338 = vrot.slane %v2337, 2
        %v2339 = vrot.slane %v2202, 7
        %v2340 = vrot.slane %v2339, 2
        %v2341 = vrot.slane %v2201, 7
        %v2342 = vrot.slane %v2341, 2
        %v2343 = vrot.slane %v2203, 7
        %v2344 = vrot.slane %v2343, 2
        %v2345 = vrot.slane %v2211, 7
        %v2346 = vrot.slane %v2345, 2
        %v2347 = vrot.slane %v2219, 7
        %v2348 = vrot.slane %v2347, 2
        %v2349 = vrot.slane %v2218, 7
        %v2350 = vrot.slane %v2349, 2
        %v2351 = vrot.slane %v2220, 7
        %v2352 = vrot.slane %v2351, 2
        %v2353 = vrot.slane %v2228, 7
        %v2354 = vrot.slane %v2353, 2
        %v2355 = vrot.slane %v2236, 7
        %v2356 = vrot.slane %v2355, 2
        %v2357 = vrot.slane %v2235, 7
        %v2358 = vrot.slane %v2357, 2
        %v2359 = vrot.slane %v2237, 7
        %v2360 = vrot.slane %v2359, 2
        %v2361 = vrot.slane %v2245, 7
        %v2362 = vrot.slane %v2361, 2
        %v2363 = vrot.slane %v2253, 7
        %v2364 = vrot.slane %v2363, 2
        %v2365 = vrot.slane %v2252, 7
        %v2366 = vrot.slane %v2365, 2
        %v2367 = vrot.slane %v2254, 7
        %v2368 = vrot.slane %v2367, 2
        %v2369 = vrot.slane %v2262, 7
        %v2370 = vrot.slane %v2369, 2
        %v2371 = vrot.slane %v2270, 7
        %v2372 = vrot.slane %v2371, 2
        %v2373 = vrot.slane %v2269, 7
        %v2374 = vrot.slane %v2373, 2
        %v2375 = vrot.slane %v2271, 7
        %v2376 = vrot.slane %v2375, 2
        %v2377 = vrot.slane %v2279, 7
        %v2378 = vrot.slane %v2377, 2
        %v2379 = vrot.slane %v2287, 7
        %v2380 = vrot.slane %v2379, 2
        %v2381 = vrot.slane %v2286, 7
        %v2382 = vrot.slane %v2381, 2
        %v2383 = vrot.slane %v2288, 7
        %v2384 = vrot.slane %v2383, 2
        %v2417 = vmax.f32 %v2160, %v2322
        %v2418 = vmax.f32 %v2168, %v2324
        %v2419 = vmax.f32 %v2167, %v2326
        %v2420 = vmax.f32 %v2169, %v2328
        %v2421 = vmax.f32 %v2177, %v2330
        %v2422 = vmax.f32 %v2185, %v2332
        %v2423 = vmax.f32 %v2184, %v2334
        %v2424 = vmax.f32 %v2186, %v2336
        %v2425 = vmax.f32 %v2194, %v2338
        %v2426 = vmax.f32 %v2202, %v2340
        %v2427 = vmax.f32 %v2201, %v2342
        %v2428 = vmax.f32 %v2203, %v2344
        %v2429 = vmax.f32 %v2211, %v2346
        %v2430 = vmax.f32 %v2219, %v2348
        %v2431 = vmax.f32 %v2218, %v2350
        %v2432 = vmax.f32 %v2220, %v2352
        %v2433 = vmax.f32 %v2228, %v2354
        %v2434 = vmax.f32 %v2236, %v2356
        %v2435 = vmax.f32 %v2235, %v2358
        %v2436 = vmax.f32 %v2237, %v2360
        %v2437 = vmax.f32 %v2245, %v2362
        %v2438 = vmax.f32 %v2253, %v2364
        %v2439 = vmax.f32 %v2252, %v2366
        %v2440 = vmax.f32 %v2254, %v2368
        %v2441 = vmax.f32 %v2262, %v2370
        %v2442 = vmax.f32 %v2270, %v2372
        %v2443 = vmax.f32 %v2269, %v2374
        %v2444 = vmax.f32 %v2271, %v2376
        %v2445 = vmax.f32 %v2279, %v2378
        %v2446 = vmax.f32 %v2287, %v2380
        %v2447 = vmax.f32 %v2286, %v2382
        %v2448 = vmax.f32 %v2288, %v2384
        %vm2449 = vcmask 516096
        %2450 = vst.msk [vmem:[#allocation3] sm:$0x1] %vm2449, 0.0
        %2451 = vst.msk [vmem:[#allocation3 + $0x8] sm:$0x1] %vm2449, 0.0
        %2452 = vst.msk [vmem:[#allocation3 + $0x10] sm:$0x1] %vm2449, 0.0
        %2453 = vst.msk [vmem:[#allocation3 + $0x18] sm:$0x1] %vm2449, 0.0
        %2454 = vst.msk [vmem:[#allocation3 + $0x20] sm:$0x1] %vm2449, 0.0
        %2455 = vst.msk [vmem:[#allocation3 + $0x28] sm:$0x1] %vm2449, 0.0
        %2456 = vst.msk [vmem:[#allocation3 + $0x30] sm:$0x1] %vm2449, 0.0
        %2457 = vst.msk [vmem:[#allocation3 + $0x38] sm:$0x1] %vm2449, 0.0
        %2458 = vst.msk [vmem:[#allocation3 + $0x5] sm:$0x1] %vm2449, 0.0
        %2459 = vst.msk [vmem:[#allocation3 + $0xd] sm:$0x1] %vm2449, 0.0
        %2460 = vst.msk [vmem:[#allocation3 + $0x15] sm:$0x1] %vm2449, 0.0
        %2461 = vst.msk [vmem:[#allocation3 + $0x1d] sm:$0x1] %vm2449, 0.0
        %2462 = vst.msk [vmem:[#allocation3 + $0x25] sm:$0x1] %vm2449, 0.0
        %2463 = vst.msk [vmem:[#allocation3 + $0x2d] sm:$0x1] %vm2449, 0.0
        %2464 = vst.msk [vmem:[#allocation3 + $0x35] sm:$0x1] %vm2449, 0.0
        %2465 = vst.msk [vmem:[#allocation3 + $0x3d] sm:$0x1] %vm2449, 0.0
        %v2498 = vlaneseq
        %v2499 = vshrl.u32 %v2498, 7
        %v2500 = vsub.s32 0, %v2499
        %v2501 = vrot.slane %v2417, %v2500
        %v2502 = vlaneseq
        %v2503 = vshrl.u32 %v2502, 7
        %v2504 = vsub.s32 0, %v2503
        %v2505 = vrot.slane %v2418, %v2504
        %v2506 = vlaneseq
        %v2507 = vshrl.u32 %v2506, 7
        %v2508 = vsub.s32 0, %v2507
        %v2509 = vrot.slane %v2419, %v2508
        %v2510 = vlaneseq
        %v2511 = vshrl.u32 %v2510, 7
        %v2512 = vsub.s32 0, %v2511
        %v2513 = vrot.slane %v2420, %v2512
        %v2514 = vlaneseq
        %v2515 = vshrl.u32 %v2514, 7
        %v2516 = vsub.s32 0, %v2515
        %v2517 = vrot.slane %v2421, %v2516
        %v2518 = vlaneseq
        %v2519 = vshrl.u32 %v2518, 7
        %v2520 = vsub.s32 0, %v2519
        %v2521 = vrot.slane %v2422, %v2520
        %v2522 = vlaneseq
        %v2523 = vshrl.u32 %v2522, 7
        %v2524 = vsub.s32 0, %v2523
        %v2525 = vrot.slane %v2423, %v2524
        %v2526 = vlaneseq
        %v2527 = vshrl.u32 %v2526, 7
        %v2528 = vsub.s32 0, %v2527
        %v2529 = vrot.slane %v2424, %v2528
        %v2530 = vlaneseq
        %v2531 = vshrl.u32 %v2530, 7
        %v2532 = vsub.s32 0, %v2531
        %v2533 = vrot.slane %v2425, %v2532
        %v2534 = vlaneseq
        %v2535 = vshrl.u32 %v2534, 7
        %v2536 = vsub.s32 0, %v2535
        %v2537 = vrot.slane %v2426, %v2536
        %v2538 = vlaneseq
        %v2539 = vshrl.u32 %v2538, 7
        %v2540 = vsub.s32 0, %v2539
        %v2541 = vrot.slane %v2427, %v2540
        %v2542 = vlaneseq
        %v2543 = vshrl.u32 %v2542, 7
        %v2544 = vsub.s32 0, %v2543
        %v2545 = vrot.slane %v2428, %v2544
        %v2546 = vlaneseq
        %v2547 = vshrl.u32 %v2546, 7
        %v2548 = vsub.s32 0, %v2547
        %v2549 = vrot.slane %v2429, %v2548
        %v2550 = vlaneseq
        %v2551 = vshrl.u32 %v2550, 7
        %v2552 = vsub.s32 0, %v2551
        %v2553 = vrot.slane %v2430, %v2552
        %v2554 = vlaneseq
        %v2555 = vshrl.u32 %v2554, 7
        %v2556 = vsub.s32 0, %v2555
        %v2557 = vrot.slane %v2431, %v2556
        %v2558 = vlaneseq
        %v2559 = vshrl.u32 %v2558, 7
        %v2560 = vsub.s32 0, %v2559
        %v2561 = vrot.slane %v2432, %v2560
        %v2562 = vlaneseq
        %v2563 = vshrl.u32 %v2562, 7
        %v2564 = vsub.s32 0, %v2563
        %v2565 = vrot.slane %v2433, %v2564
        %v2566 = vlaneseq
        %v2567 = vshrl.u32 %v2566, 7
        %v2568 = vsub.s32 0, %v2567
        %v2569 = vrot.slane %v2434, %v2568
        %v2570 = vlaneseq
        %v2571 = vshrl.u32 %v2570, 7
        %v2572 = vsub.s32 0, %v2571
        %v2573 = vrot.slane %v2435, %v2572
        %v2574 = vlaneseq
        %v2575 = vshrl.u32 %v2574, 7
        %v2576 = vsub.s32 0, %v2575
        %v2577 = vrot.slane %v2436, %v2576
        %v2578 = vlaneseq
        %v2579 = vshrl.u32 %v2578, 7
        %v2580 = vsub.s32 0, %v2579
        %v2581 = vrot.slane %v2437, %v2580
        %v2582 = vlaneseq
        %v2583 = vshrl.u32 %v2582, 7
        %v2584 = vsub.s32 0, %v2583
        %v2585 = vrot.slane %v2438, %v2584
        %v2586 = vlaneseq
        %v2587 = vshrl.u32 %v2586, 7
        %v2588 = vsub.s32 0, %v2587
        %v2589 = vrot.slane %v2439, %v2588
        %v2590 = vlaneseq
        %v2591 = vshrl.u32 %v2590, 7
        %v2592 = vsub.s32 0, %v2591
        %v2593 = vrot.slane %v2440, %v2592
        %v2594 = vlaneseq
        %v2595 = vshrl.u32 %v2594, 7
        %v2596 = vsub.s32 0, %v2595
        %v2597 = vrot.slane %v2441, %v2596
        %v2598 = vlaneseq
        %v2599 = vshrl.u32 %v2598, 7
        %v2600 = vsub.s32 0, %v2599
        %v2601 = vrot.slane %v2442, %v2600
        %v2602 = vlaneseq
        %v2603 = vshrl.u32 %v2602, 7
        %v2604 = vsub.s32 0, %v2603
        %v2605 = vrot.slane %v2443, %v2604
        %v2606 = vlaneseq
        %v2607 = vshrl.u32 %v2606, 7
        %v2608 = vsub.s32 0, %v2607
        %v2609 = vrot.slane %v2444, %v2608
        %v2610 = vlaneseq
        %v2611 = vshrl.u32 %v2610, 7
        %v2612 = vsub.s32 0, %v2611
        %v2613 = vrot.slane %v2445, %v2612
        %v2614 = vlaneseq
        %v2615 = vshrl.u32 %v2614, 7
        %v2616 = vsub.s32 0, %v2615
        %v2617 = vrot.slane %v2446, %v2616
        %v2618 = vlaneseq
        %v2619 = vshrl.u32 %v2618, 7
        %v2620 = vsub.s32 0, %v2619
        %v2621 = vrot.slane %v2447, %v2620
        %v2622 = vlaneseq
        %v2623 = vshrl.u32 %v2622, 7
        %v2624 = vsub.s32 0, %v2623
        %v2625 = vrot.slane %v2448, %v2624
        %v2626 = vsel %vm1759, %v2505, %v2501
        %v2627 = vsel %vm1761, %v2509, %v2626
        %v2628 = vsel %vm1763, %v2513, %v2627
        %v2629 = vsel %vm1759, %v2521, %v2517
        %v2630 = vsel %vm1761, %v2525, %v2629
        %v2631 = vsel %vm1763, %v2529, %v2630
        %v2632 = vsel %vm1759, %v2537, %v2533
        %v2633 = vsel %vm1761, %v2541, %v2632
        %v2634 = vsel %vm1763, %v2545, %v2633
        %v2635 = vsel %vm1759, %v2553, %v2549
        %v2636 = vsel %vm1761, %v2557, %v2635
        %v2637 = vsel %vm1763, %v2561, %v2636
        %v2638 = vsel %vm1759, %v2569, %v2565
        %v2639 = vsel %vm1761, %v2573, %v2638
        %v2640 = vsel %vm1763, %v2577, %v2639
        %v2641 = vsel %vm1759, %v2585, %v2581
        %v2642 = vsel %vm1761, %v2589, %v2641
        %v2643 = vsel %vm1763, %v2593, %v2642
        %v2644 = vsel %vm1759, %v2601, %v2597
        %v2645 = vsel %vm1761, %v2605, %v2644
        %v2646 = vsel %vm1763, %v2609, %v2645
        %v2647 = vsel %vm1759, %v2617, %v2613
        %v2648 = vsel %vm1761, %v2621, %v2647
        %v2649 = vsel %vm1763, %v2625, %v2648
        %vm2658 = vcmask 519168
        %2659 = vst.msk [vmem:[#allocation3 + $0x1] sm:$0xf] %vm2658, %v2628
        %2660 = vst.msk [vmem:[#allocation3 + $0x9] sm:$0xf] %vm2658, %v2631
        %2661 = vst.msk [vmem:[#allocation3 + $0x11] sm:$0xf] %vm2658, %v2634
        %2662 = vst.msk [vmem:[#allocation3 + $0x19] sm:$0xf] %vm2658, %v2637
        %2663 = vst.msk [vmem:[#allocation3 + $0x21] sm:$0xf] %vm2658, %v2640
        %2664 = vst.msk [vmem:[#allocation3 + $0x29] sm:$0xf] %vm2658, %v2643
        %2665 = vst.msk [vmem:[#allocation3 + $0x31] sm:$0xf] %vm2658, %v2646
        %2666 = vst.msk [vmem:[#allocation3 + $0x39] sm:$0xf] %vm2658, %v2649
        %v2667 = vld [vmem:[#allocation3] sm:$0xf]
        %v2668 = vld [vmem:[#allocation3 + $0x8] sm:$0xf]
        %v2669 = vld [vmem:[#allocation3 + $0x10] sm:$0xf]
        %v2670 = vld [vmem:[#allocation3 + $0x18] sm:$0xf]
        %v2671 = vld [vmem:[#allocation3 + $0x20] sm:$0xf]
        %v2672 = vld [vmem:[#allocation3 + $0x28] sm:$0xf]
        %v2673 = vld [vmem:[#allocation3 + $0x30] sm:$0xf]
        %v2674 = vld [vmem:[#allocation3 + $0x38] sm:$0xf]
        %v2675 = vpack.c.bf16 %v2667, %v2667
        %v2676 = vpack.c.bf16 %v2668, %v2668
        %v2677 = vpack.c.bf16 %v2669, %v2669
        %v2678 = vpack.c.bf16 %v2670, %v2670
        %v2679 = vpack.c.bf16 %v2671, %v2671
        %v2680 = vpack.c.bf16 %v2672, %v2672
        %v2681 = vpack.c.bf16 %v2673, %v2673
        %v2682 = vpack.c.bf16 %v2674, %v2674
        %v2683 = vld [vmem:[#allocation3 + $0x1] sm:$0xf]
        %v2684 = vld [vmem:[#allocation3 + $0x9] sm:$0xf]
        %v2685 = vld [vmem:[#allocation3 + $0x11] sm:$0xf]
        %v2686 = vld [vmem:[#allocation3 + $0x19] sm:$0xf]
        %v2687 = vld [vmem:[#allocation3 + $0x21] sm:$0xf]
        %v2688 = vld [vmem:[#allocation3 + $0x29] sm:$0xf]
        %v2689 = vld [vmem:[#allocation3 + $0x31] sm:$0xf]
        %v2690 = vld [vmem:[#allocation3 + $0x39] sm:$0xf]
        %v2691 = vpack.c.bf16 %v2683, %v2683
        %v2692 = vpack.c.bf16 %v2684, %v2684
        %v2693 = vpack.c.bf16 %v2685, %v2685
        %v2694 = vpack.c.bf16 %v2686, %v2686
        %v2695 = vpack.c.bf16 %v2687, %v2687
        %v2696 = vpack.c.bf16 %v2688, %v2688
        %v2697 = vpack.c.bf16 %v2689, %v2689
        %v2698 = vpack.c.bf16 %v2690, %v2690
        %v2699 = vld [vmem:[#allocation3 + $0x2] sm:$0xf]
        %v2700 = vld [vmem:[#allocation3 + $0xa] sm:$0xf]
        %v2701 = vld [vmem:[#allocation3 + $0x12] sm:$0xf]
        %v2702 = vld [vmem:[#allocation3 + $0x1a] sm:$0xf]
        %v2703 = vld [vmem:[#allocation3 + $0x22] sm:$0xf]
        %v2704 = vld [vmem:[#allocation3 + $0x2a] sm:$0xf]
        %v2705 = vld [vmem:[#allocation3 + $0x32] sm:$0xf]
        %v2706 = vld [vmem:[#allocation3 + $0x3a] sm:$0xf]
        %v2707 = vpack.c.bf16 %v2699, %v2699
        %v2708 = vpack.c.bf16 %v2700, %v2700
        %v2709 = vpack.c.bf16 %v2701, %v2701
        %v2710 = vpack.c.bf16 %v2702, %v2702
        %v2711 = vpack.c.bf16 %v2703, %v2703
        %v2712 = vpack.c.bf16 %v2704, %v2704
        %v2713 = vpack.c.bf16 %v2705, %v2705
        %v2714 = vpack.c.bf16 %v2706, %v2706
        %2723 = vrot.lane.b32.xlu0 %v2691, 64
        %v2724 = vpop.permute.xlu0 %2723
        %2725 = vrot.lane.b32.xlu0 %v2692, 64
        %v2726 = vpop.permute.xlu0 %2725
        %2727 = vrot.lane.b32.xlu0 %v2693, 64
        %v2728 = vpop.permute.xlu0 %2727
        %2729 = vrot.lane.b32.xlu0 %v2694, 64
        %v2730 = vpop.permute.xlu0 %2729
        %2731 = vrot.lane.b32.xlu0 %v2695, 64
        %v2732 = vpop.permute.xlu0 %2731
        %2733 = vrot.lane.b32.xlu0 %v2696, 64
        %v2734 = vpop.permute.xlu0 %2733
        %2735 = vrot.lane.b32.xlu0 %v2697, 64
        %v2736 = vpop.permute.xlu0 %2735
        %2737 = vrot.lane.b32.xlu0 %v2698, 64
        %v2738 = vpop.permute.xlu0 %2737
        %v2741 = vsel %vm1959, %v2675, %v2724
        %v2744 = vsel %vm1959, %v2676, %v2726
        %v2747 = vsel %vm1959, %v2677, %v2728
        %v2750 = vsel %vm1959, %v2678, %v2730
        %v2753 = vsel %vm1959, %v2679, %v2732
        %v2756 = vsel %vm1959, %v2680, %v2734
        %v2759 = vsel %vm1959, %v2681, %v2736
        %v2762 = vsel %vm1959, %v2682, %v2738
        %v2779 = vcombine.low %v2741, %v2707
        %v2781 = vunpack.c.l.s4 1983009808
        %v2782 = vunpack.c.0.s8 %v2781
        %v2783 = vlaneseq
        %v2784 = vshrl.u32 %v2783, 7
        %v2785 = vsub.s32 %v2782, %v2784
        %v2786 = vrot.slane %v2779, %v2785
        %v2787 = vcombine.low %v2744, %v2708
        %v2789 = vunpack.c.l.s4 1983009808
        %v2790 = vunpack.c.0.s8 %v2789
        %v2791 = vlaneseq
        %v2792 = vshrl.u32 %v2791, 7
        %v2793 = vsub.s32 %v2790, %v2792
        %v2794 = vrot.slane %v2787, %v2793
        %v2795 = vcombine.low %v2747, %v2709
        %v2797 = vunpack.c.l.s4 1983009808
        %v2798 = vunpack.c.0.s8 %v2797
        %v2799 = vlaneseq
        %v2800 = vshrl.u32 %v2799, 7
        %v2801 = vsub.s32 %v2798, %v2800
        %v2802 = vrot.slane %v2795, %v2801
        %v2803 = vcombine.low %v2750, %v2710
        %v2805 = vunpack.c.l.s4 1983009808
        %v2806 = vunpack.c.0.s8 %v2805
        %v2807 = vlaneseq
        %v2808 = vshrl.u32 %v2807, 7
        %v2809 = vsub.s32 %v2806, %v2808
        %v2810 = vrot.slane %v2803, %v2809
        %v2811 = vcombine.low %v2753, %v2711
        %v2813 = vunpack.c.l.s4 1983009808
        %v2814 = vunpack.c.0.s8 %v2813
        %v2815 = vlaneseq
        %v2816 = vshrl.u32 %v2815, 7
        %v2817 = vsub.s32 %v2814, %v2816
        %v2818 = vrot.slane %v2811, %v2817
        %v2819 = vcombine.low %v2756, %v2712
        %v2821 = vunpack.c.l.s4 1983009808
        %v2822 = vunpack.c.0.s8 %v2821
        %v2823 = vlaneseq
        %v2824 = vshrl.u32 %v2823, 7
        %v2825 = vsub.s32 %v2822, %v2824
        %v2826 = vrot.slane %v2819, %v2825
        %v2827 = vcombine.low %v2759, %v2713
        %v2829 = vunpack.c.l.s4 1983009808
        %v2830 = vunpack.c.0.s8 %v2829
        %v2831 = vlaneseq
        %v2832 = vshrl.u32 %v2831, 7
        %v2833 = vsub.s32 %v2830, %v2832
        %v2834 = vrot.slane %v2827, %v2833
        %v2835 = vcombine.low %v2762, %v2714
        %v2837 = vunpack.c.l.s4 1983009808
        %v2838 = vunpack.c.0.s8 %v2837
        %v2839 = vlaneseq
        %v2840 = vshrl.u32 %v2839, 7
        %v2841 = vsub.s32 %v2838, %v2840
        %v2842 = vrot.slane %v2835, %v2841
        %v2843 = vld [vmem:[%s5] sm:$0xf]
        %v2844 = vld [vmem:[%s5 + $0x4] sm:$0xf]
        %v2845 = vld [vmem:[%s5 + $0x8] sm:$0xf]
        %v2846 = vld [vmem:[%s5 + $0xc] sm:$0xf]
        %v2847 = vld [vmem:[%s5 + $0x10] sm:$0xf]
        %v2848 = vld [vmem:[%s5 + $0x14] sm:$0xf]
        %v2849 = vld [vmem:[%s5 + $0x18] sm:$0xf]
        %v2850 = vld [vmem:[%s5 + $0x1c] sm:$0xf]
        %v2851 = vld [vmem:[%s5 + $0x20] sm:$0xf]
        %v2852 = vld [vmem:[%s5 + $0x24] sm:$0xf]
        %v2853 = vld [vmem:[%s5 + $0x28] sm:$0xf]
        %v2854 = vld [vmem:[%s5 + $0x2c] sm:$0xf]
        %v2855 = vld [vmem:[%s5 + $0x30] sm:$0xf]
        %v2856 = vld [vmem:[%s5 + $0x34] sm:$0xf]
        %v2857 = vld [vmem:[%s5 + $0x38] sm:$0xf]
        %v2858 = vld [vmem:[%s5 + $0x3c] sm:$0xf]
        %v2859 = vld [vmem:[%s5 + $0x40] sm:$0xf]
        %v2860 = vld [vmem:[%s5 + $0x44] sm:$0xf]
        %v2861 = vld [vmem:[%s5 + $0x48] sm:$0xf]
        %v2862 = vld [vmem:[%s5 + $0x4c] sm:$0xf]
        %v2863 = vld [vmem:[%s5 + $0x50] sm:$0xf]
        %v2864 = vld [vmem:[%s5 + $0x54] sm:$0xf]
        %v2865 = vld [vmem:[%s5 + $0x58] sm:$0xf]
        %v2866 = vld [vmem:[%s5 + $0x5c] sm:$0xf]
        %v2867 = vcombine.low %v2786, %v2794
        %v2868 = vcombine.low %v2802, %v2810
        %v2870 = vunpack.c.l.s4 1983009808
        %v2871 = vunpack.c.0.s8 %v2870
        %v2872 = vlaneseq
        %v2873 = vshrl.u32 %v2872, 7
        %v2874 = vsub.s32 %v2871, %v2873
        %v2875 = vrot.slane %v2867, %v2874
        %v2877 = vunpack.c.l.s4 1983009808
        %v2878 = vunpack.c.0.s8 %v2877
        %v2879 = vlaneseq
        %v2880 = vshrl.u32 %v2879, 7
        %v2881 = vsub.s32 %v2878, %v2880
        %v2882 = vrot.slane %v2868, %v2881
        %v2883 = vcombine.low %v2875, %v2882
        %v2884 = vcombine.high %v2875, %v2882
        %v2885 = vcombine.low %v2818, %v2826
        %v2886 = vcombine.low %v2834, %v2842
        %v2888 = vunpack.c.l.s4 1983009808
        %v2889 = vunpack.c.0.s8 %v2888
        %v2890 = vlaneseq
        %v2891 = vshrl.u32 %v2890, 7
        %v2892 = vsub.s32 %v2889, %v2891
        %v2893 = vrot.slane %v2885, %v2892
        %v2895 = vunpack.c.l.s4 1983009808
        %v2896 = vunpack.c.0.s8 %v2895
        %v2897 = vlaneseq
        %v2898 = vshrl.u32 %v2897, 7
        %v2899 = vsub.s32 %v2896, %v2898
        %v2900 = vrot.slane %v2886, %v2899
        %v2901 = vcombine.low %v2893, %v2900
        %v2902 = vcombine.high %v2893, %v2900
        %v2929 = vunpack.c.l.b16 %v2843
        %v2930 = vunpack.c.l.b16 %v2844
        %v2931 = vunpack.c.l.b16 %v2845
        %v2932 = vunpack.c.l.b16 %v2846
        %v2933 = vunpack.c.l.b16 %v2847
        %v2934 = vunpack.c.l.b16 %v2848
        %v2935 = vunpack.c.l.b16 %v2849
        %v2936 = vunpack.c.l.b16 %v2850
        %v2937 = vunpack.c.l.b16 %v2851
        %v2938 = vunpack.c.l.b16 %v2852
        %v2939 = vunpack.c.l.b16 %v2853
        %v2940 = vunpack.c.l.b16 %v2854
        %v2941 = vunpack.c.l.b16 %v2855
        %v2942 = vunpack.c.l.b16 %v2856
        %v2943 = vunpack.c.l.b16 %v2857
        %v2944 = vunpack.c.l.b16 %v2858
        %v2945 = vunpack.c.l.b16 %v2859
        %v2946 = vunpack.c.l.b16 %v2860
        %v2947 = vunpack.c.l.b16 %v2861
        %v2948 = vunpack.c.l.b16 %v2862
        %v2949 = vunpack.c.l.b16 %v2863
        %v2950 = vunpack.c.l.b16 %v2864
        %v2951 = vunpack.c.l.b16 %v2865
        %v2952 = vunpack.c.l.b16 %v2866
        %v2953 = vpack.c.b16 %v2930, %v2929
        %v2954 = vpack.c.b16 %v2932, %v2931
        %v2955 = vpack.c.b16 %v2934, %v2933
        %v2956 = vpack.c.b16 %v2936, %v2935
        %v2957 = vpack.c.b16 %v2938, %v2937
        %v2958 = vpack.c.b16 %v2940, %v2939
        %v2959 = vpack.c.b16 %v2942, %v2941
        %v2960 = vpack.c.b16 %v2944, %v2943
        %v2961 = vpack.c.b16 %v2946, %v2945
        %v2962 = vpack.c.b16 %v2948, %v2947
        %v2963 = vpack.c.b16 %v2950, %v2949
        %v2964 = vpack.c.b16 %v2952, %v2951
        %v2978 = vsel %vm1959, %v2884, 0
        %v2981 = vsel %vm1959, %v2902, 0
        %2983 = vmatprep.subr.bf16.mxu0 0
        %2984 = vmatpush1.bf16.msra.mxu0 %v2953
        %2985 = vmatprep.subr.bf16.mxu0 0
        %2986 = vmatpush1.bf16.msra.mxu0 %v2954
        %2987 = vmatprep.subr.bf16.mxu0 0
        %2988 = vmatpush1.bf16.msra.mxu0 %v2955
        %2989 = vmatprep.subr.bf16.mxu0 0
        %2990 = vmatpush1.bf16.msra.mxu0 %v2956
        %2991 = vmatprep.subr.bf16.mxu0 0
        %2992 = vmatpush1.bf16.msra.mxu0 %v2957
        %2993 = vmatprep.subr.bf16.mxu0 0
        %2994 = vmatpush1.bf16.msra.mxu0 %v2958
        %2995 = vmatprep.subr.bf16.mxu0 0
        %2996 = vmatpush1.bf16.msra.mxu0 %v2959
        %2997 = vmatprep.subr.bf16.mxu0 0
        %2998 = vmatpush1.bf16.msra.mxu0 %v2960
        %2999 = vmatprep.subr.bf16.mxu0 0
        %3000 = vmatpush1.bf16.msra.mxu0 %v2961
        %3001 = vmatprep.subr.bf16.mxu0 0
        %3002 = vmatpush1.bf16.msra.mxu0 %v2962
        %3003 = vmatprep.subr.bf16.mxu0 0
        %3004 = vmatpush1.bf16.msra.mxu0 %v2963
        %3005 = vmatprep.subr.bf16.mxu0 0
        %3006 = vmatpush1.bf16.msra.mxu0 %v2964
        %3007 = vmatprep.subr.bf16.mxu0 0
        %3008 = vmatpush1.bf16.msra.mxu0 0
        %3009 = vmatprep.subr.bf16.mxu0 0
        %3010 = vmatpush1.bf16.msra.mxu0 0
        %3011 = vmatprep.subr.bf16.mxu0 0
        %3012 = vmatpush1.bf16.msra.mxu0 0
        %3013 = vmatprep.subr.bf16.mxu0 0
        %3014 = vmatpush1.bf16.msra.mxu0 0
        %3015 = vmatprep.mubr.bf16.mxu0 %v2978
        %3016 = vmatmul.mubr.bf16.gmra.mrb[0].mxu0 %v2883
        %v3017 = vpop.f32.mrb[0].mxu0
        %v3018 = vadd.f32 0.0, %v3017
        %v3019 = vpop.f32.mrb[0].mxu0
        %v3020 = vpop.f32.mrb[0].mxu0
        %v3021 = vadd.f32 0.0, %v3020
        %v3022 = vpop.f32.mrb[0].mxu0
        %3023 = vmatprep.mubr.bf16.mxu0 %v2981
        %3024 = vmatmul.mubr.bf16.gmra.mrb[0].mxu0 %v2901
        %v3025 = vpop.f32.mrb[0].mxu0
        %v3026 = vadd.f32 0.0, %v3025
        %v3027 = vpop.f32.mrb[0].mxu0
        %v3028 = vpop.f32.mrb[0].mxu0
        %v3029 = vadd.f32 0.0, %v3028
        %v3030 = vpop.f32.mrb[0].mxu0
        %3031 = vdwg.mxu0
        %v3036 = vcombine.high %v3018, %v3018
        %v3037 = vcombine.high %v3021, %v3021
        %v3038 = vcombine.high %v3026, %v3026
        %v3039 = vcombine.high %v3029, %v3029
        %v3044 = vld [vmem:[%s6] sm:$0x1]
        %v3046 = vlaneseq
        %v3047 = vshrl.u32 %v3046, 7
        %v3048 = vsub.s32 0, %v3047
        %v3049 = vrot.slane %v3044, %v3048
        %v3051 = vadd.f32 %v3018, %v3049
        %v3052 = vadd.f32 %v3036, %v3049
        %v3053 = vadd.f32 %v3021, %v3049
        %v3054 = vadd.f32 %v3037, %v3049
        %v3055 = vadd.f32 %v3026, %v3049
        %v3056 = vadd.f32 %v3038, %v3049
        %v3057 = vadd.f32 %v3029, %v3049
        %v3058 = vadd.f32 %v3039, %v3049
        %v3059 = vmax.f32 %v3051, 0.0
        %v3060 = vmax.f32 %v3052, 0.0
        %v3061 = vmax.f32 %v3053, 0.0
        %v3062 = vmax.f32 %v3054, 0.0
        %v3063 = vmax.f32 %v3055, 0.0
        %v3064 = vmax.f32 %v3056, 0.0
        %v3065 = vmax.f32 %v3057, 0.0
        %v3066 = vmax.f32 %v3058, 0.0
        %v3076 = vunpack.c.l.s4 1983009808
        %v3077 = vunpack.c.0.s8 %v3076
        %v3078 = vlaneseq
        %v3079 = vshrl.u32 %v3078, 7
        %v3080 = vsub.s32 %v3077, %v3079
        %v3081 = vrot.slane %v3059, %v3080
        %v3082 = vcombine.high %v3081, %v3081
        %v3084 = vunpack.c.l.s4 1983009808
        %v3085 = vunpack.c.0.s8 %v3084
        %v3086 = vlaneseq
        %v3087 = vshrl.u32 %v3086, 7
        %v3088 = vsub.s32 %v3085, %v3087
        %v3089 = vrot.slane %v3060, %v3088
        %v3090 = vcombine.high %v3089, %v3089
        %v3092 = vunpack.c.l.s4 1983009808
        %v3093 = vunpack.c.0.s8 %v3092
        %v3094 = vlaneseq
        %v3095 = vshrl.u32 %v3094, 7
        %v3096 = vsub.s32 %v3093, %v3095
        %v3097 = vrot.slane %v3061, %v3096
        %v3098 = vcombine.high %v3097, %v3097
        %v3100 = vunpack.c.l.s4 1983009808
        %v3101 = vunpack.c.0.s8 %v3100
        %v3102 = vlaneseq
        %v3103 = vshrl.u32 %v3102, 7
        %v3104 = vsub.s32 %v3101, %v3103
        %v3105 = vrot.slane %v3062, %v3104
        %v3106 = vcombine.high %v3105, %v3105
        %v3108 = vunpack.c.l.s4 1983009808
        %v3109 = vunpack.c.0.s8 %v3108
        %v3110 = vlaneseq
        %v3111 = vshrl.u32 %v3110, 7
        %v3112 = vsub.s32 %v3109, %v3111
        %v3113 = vrot.slane %v3063, %v3112
        %v3114 = vcombine.high %v3113, %v3113
        %v3116 = vunpack.c.l.s4 1983009808
        %v3117 = vunpack.c.0.s8 %v3116
        %v3118 = vlaneseq
        %v3119 = vshrl.u32 %v3118, 7
        %v3120 = vsub.s32 %v3117, %v3119
        %v3121 = vrot.slane %v3064, %v3120
        %v3122 = vcombine.high %v3121, %v3121
        %v3124 = vunpack.c.l.s4 1983009808
        %v3125 = vunpack.c.0.s8 %v3124
        %v3126 = vlaneseq
        %v3127 = vshrl.u32 %v3126, 7
        %v3128 = vsub.s32 %v3125, %v3127
        %v3129 = vrot.slane %v3065, %v3128
        %v3130 = vcombine.high %v3129, %v3129
        %v3132 = vunpack.c.l.s4 1983009808
        %v3133 = vunpack.c.0.s8 %v3132
        %v3134 = vlaneseq
        %v3135 = vshrl.u32 %v3134, 7
        %v3136 = vsub.s32 %v3133, %v3135
        %v3137 = vrot.slane %v3066, %v3136
        %v3138 = vcombine.high %v3137, %v3137
        %v3155 = vrot.slane %v3081, 7
        %v3156 = vrot.slane %v3155, 2
        %v3157 = vrot.slane %v3082, 7
        %v3158 = vrot.slane %v3157, 2
        %v3159 = vrot.slane %v3089, 7
        %v3160 = vrot.slane %v3159, 2
        %v3161 = vrot.slane %v3090, 7
        %v3162 = vrot.slane %v3161, 2
        %v3163 = vrot.slane %v3097, 7
        %v3164 = vrot.slane %v3163, 2
        %v3165 = vrot.slane %v3098, 7
        %v3166 = vrot.slane %v3165, 2
        %v3167 = vrot.slane %v3105, 7
        %v3168 = vrot.slane %v3167, 2
        %v3169 = vrot.slane %v3106, 7
        %v3170 = vrot.slane %v3169, 2
        %v3171 = vrot.slane %v3113, 7
        %v3172 = vrot.slane %v3171, 2
        %v3173 = vrot.slane %v3114, 7
        %v3174 = vrot.slane %v3173, 2
        %v3175 = vrot.slane %v3121, 7
        %v3176 = vrot.slane %v3175, 2
        %v3177 = vrot.slane %v3122, 7
        %v3178 = vrot.slane %v3177, 2
        %v3179 = vrot.slane %v3129, 7
        %v3180 = vrot.slane %v3179, 2
        %v3181 = vrot.slane %v3130, 7
        %v3182 = vrot.slane %v3181, 2
        %v3183 = vrot.slane %v3137, 7
        %v3184 = vrot.slane %v3183, 2
        %v3185 = vrot.slane %v3138, 7
        %v3186 = vrot.slane %v3185, 2
        %v3203 = vmax.f32 %v3081, %v3156
        %v3204 = vmax.f32 %v3082, %v3158
        %v3205 = vmax.f32 %v3089, %v3160
        %v3206 = vmax.f32 %v3090, %v3162
        %v3207 = vmax.f32 %v3097, %v3164
        %v3208 = vmax.f32 %v3098, %v3166
        %v3209 = vmax.f32 %v3105, %v3168
        %v3210 = vmax.f32 %v3106, %v3170
        %v3211 = vmax.f32 %v3113, %v3172
        %v3212 = vmax.f32 %v3114, %v3174
        %v3213 = vmax.f32 %v3121, %v3176
        %v3214 = vmax.f32 %v3122, %v3178
        %v3215 = vmax.f32 %v3129, %v3180
        %v3216 = vmax.f32 %v3130, %v3182
        %v3217 = vmax.f32 %v3137, %v3184
        %v3218 = vmax.f32 %v3138, %v3186
        %v3219 = vld [vmem:[%s8] sm:$0x1]
        %v3221 = vlaneseq
        %v3222 = vshrl.u32 %v3221, 7
        %v3223 = vsub.s32 0, %v3222
        %v3224 = vrot.slane %v3219, %v3223
        %v3226 = vpack.c.bf16 %v3203, %v3203
        %v3227 = vpack.c.bf16 %v3205, %v3205
        %v3228 = vpack.c.bf16 %v3207, %v3207
        %v3229 = vpack.c.bf16 %v3209, %v3209
        %v3230 = vpack.c.bf16 %v3211, %v3211
        %v3231 = vpack.c.bf16 %v3213, %v3213
        %v3232 = vpack.c.bf16 %v3215, %v3215
        %v3233 = vpack.c.bf16 %v3217, %v3217
        %v3234 = vld [vmem:[%s7] sm:$0xf]
        %v3235 = vld [vmem:[%s7 + $0x4] sm:$0xf]
        %v3236 = vld [vmem:[%s7 + $0x8] sm:$0xf]
        %v3237 = vld [vmem:[%s7 + $0xc] sm:$0xf]
        %v3238 = vld [vmem:[%s7 + $0x10] sm:$0xf]
        %v3239 = vld [vmem:[%s7 + $0x14] sm:$0xf]
        %v3240 = vld [vmem:[%s7 + $0x18] sm:$0xf]
        %v3241 = vld [vmem:[%s7 + $0x1c] sm:$0xf]
        %v3242 = vld [vmem:[%s7 + $0x20] sm:$0xf]
        %v3243 = vld [vmem:[%s7 + $0x24] sm:$0xf]
        %v3244 = vld [vmem:[%s7 + $0x28] sm:$0xf]
        %v3245 = vld [vmem:[%s7 + $0x2c] sm:$0xf]
        %v3246 = vld [vmem:[%s7 + $0x30] sm:$0xf]
        %v3247 = vld [vmem:[%s7 + $0x34] sm:$0xf]
        %v3248 = vld [vmem:[%s7 + $0x38] sm:$0xf]
        %v3249 = vld [vmem:[%s7 + $0x3c] sm:$0xf]
        %v3258 = vunpack.c.l.b16 %v3226
        %v3259 = vunpack.c.l.b16 %v3227
        %v3260 = vunpack.c.l.b16 %v3228
        %v3261 = vunpack.c.l.b16 %v3229
        %v3262 = vunpack.c.l.b16 %v3230
        %v3263 = vunpack.c.l.b16 %v3231
        %v3264 = vunpack.c.l.b16 %v3232
        %v3265 = vunpack.c.l.b16 %v3233
        %v3266 = vrot.slane %v3259, 7
        %v3267 = vsel %vm1759, %v3266, %v3258
        %v3268 = vrot.slane %v3260, 6
        %v3269 = vsel %vm1761, %v3268, %v3267
        %v3270 = vrot.slane %v3261, 5
        %v3271 = vsel %vm1763, %v3270, %v3269
        %v3272 = vrot.slane %v3262, 4
        %v3273 = vsel %vm1765, %v3272, %v3271
        %v3274 = vrot.slane %v3263, 3
        %v3275 = vsel %vm1767, %v3274, %v3273
        %v3276 = vrot.slane %v3264, 2
        %v3277 = vsel %vm1769, %v3276, %v3275
        %v3278 = vrot.slane %v3265, 1
        %v3279 = vsel %vm1771, %v3278, %v3277
        %v3280 = vpack.c.b16 %v3279, %v3279
        %v3298 = vunpack.c.l.b16 %v3234
        %v3299 = vunpack.c.l.b16 %v3235
        %v3300 = vunpack.c.l.b16 %v3236
        %v3301 = vunpack.c.l.b16 %v3237
        %v3302 = vunpack.c.l.b16 %v3238
        %v3303 = vunpack.c.l.b16 %v3239
        %v3304 = vunpack.c.l.b16 %v3240
        %v3305 = vunpack.c.l.b16 %v3241
        %v3306 = vunpack.c.l.b16 %v3242
        %v3307 = vunpack.c.l.b16 %v3243
        %v3308 = vunpack.c.l.b16 %v3244
        %v3309 = vunpack.c.l.b16 %v3245
        %v3310 = vunpack.c.l.b16 %v3246
        %v3311 = vunpack.c.l.b16 %v3247
        %v3312 = vunpack.c.l.b16 %v3248
        %v3313 = vunpack.c.l.b16 %v3249
        %v3314 = vpack.c.b16 %v3299, %v3298
        %v3315 = vpack.c.b16 %v3301, %v3300
        %v3316 = vpack.c.b16 %v3303, %v3302
        %v3317 = vpack.c.b16 %v3305, %v3304
        %v3318 = vpack.c.b16 %v3307, %v3306
        %v3319 = vpack.c.b16 %v3309, %v3308
        %v3320 = vpack.c.b16 %v3311, %v3310
        %v3321 = vpack.c.b16 %v3313, %v3312
        %3330 = vmatprep.subr.bf16.mxu0 0
        %3331 = vmatpush1.bf16.msra.mxu0 %v3314
        %3332 = vmatprep.subr.bf16.mxu0 0
        %3333 = vmatpush1.bf16.msra.mxu0 %v3315
        %3334 = vmatprep.subr.bf16.mxu0 0
        %3335 = vmatpush1.bf16.msra.mxu0 %v3316
        %3336 = vmatprep.subr.bf16.mxu0 0
        %3337 = vmatpush1.bf16.msra.mxu0 %v3317
        %3338 = vmatprep.subr.bf16.mxu0 0
        %3339 = vmatpush1.bf16.msra.mxu0 %v3318
        %3340 = vmatprep.subr.bf16.mxu0 0
        %3341 = vmatpush1.bf16.msra.mxu0 %v3319
        %3342 = vmatprep.subr.bf16.mxu0 0
        %3343 = vmatpush1.bf16.msra.mxu0 %v3320
        %3344 = vmatprep.subr.bf16.mxu0 0
        %3345 = vmatpush1.bf16.msra.mxu0 %v3321
        %3346 = vmatprep.subr.bf16.mxu0 0
        %3347 = vmatpush1.bf16.msra.mxu0 0
        %3348 = vmatprep.subr.bf16.mxu0 0
        %3349 = vmatpush1.bf16.msra.mxu0 0
        %3350 = vmatprep.subr.bf16.mxu0 0
        %3351 = vmatpush1.bf16.msra.mxu0 0
        %3352 = vmatprep.subr.bf16.mxu0 0
        %3353 = vmatpush1.bf16.msra.mxu0 0
        %3354 = vmatprep.subr.bf16.mxu0 0
        %3355 = vmatpush1.bf16.msra.mxu0 0
        %3356 = vmatprep.subr.bf16.mxu0 0
        %3357 = vmatpush1.bf16.msra.mxu0 0
        %3358 = vmatprep.subr.bf16.mxu0 0
        %3359 = vmatpush1.bf16.msra.mxu0 0
        %3360 = vmatprep.subr.bf16.mxu0 0
        %3361 = vmatpush1.bf16.msra.mxu0 0
        %3362 = vmatprep.mubr.bf16.mxu0 0
        %3363 = vmatmul.mubr.bf16.gmra.mrb[0].mxu0 %v3280
        %v3364 = vpop.f32.mrb[0].mxu0
        %v3365 = vadd.f32 0.0, %v3364
        %v3366 = vpop.f32.mrb[0].mxu0
        %v3367 = vpop.f32.mrb[0].mxu0
        %v3368 = vpop.f32.mrb[0].mxu0
        %3369 = vdwg.mxu0
        %v3370 = vadd.f32 %v3224, %v3365
        %v3371 = vpack.c.bf16 %v3204, %v3204
        %v3372 = vpack.c.bf16 %v3206, %v3206
        %v3373 = vpack.c.bf16 %v3208, %v3208
        %v3374 = vpack.c.bf16 %v3210, %v3210
        %v3375 = vpack.c.bf16 %v3212, %v3212
        %v3376 = vpack.c.bf16 %v3214, %v3214
        %v3377 = vpack.c.bf16 %v3216, %v3216
        %v3378 = vpack.c.bf16 %v3218, %v3218
        %s3379 = scalar_lea.vmem %s7, 64
        %v3380 = vld [vmem:[%s3379] sm:$0xf]
        %v3381 = vld [vmem:[%s3379 + $0x4] sm:$0xf]
        %v3382 = vld [vmem:[%s3379 + $0x8] sm:$0xf]
        %v3383 = vld [vmem:[%s3379 + $0xc] sm:$0xf]
        %v3384 = vld [vmem:[%s3379 + $0x10] sm:$0xf]
        %v3385 = vld [vmem:[%s3379 + $0x14] sm:$0xf]
        %v3386 = vld [vmem:[%s3379 + $0x18] sm:$0xf]
        %v3387 = vld [vmem:[%s3379 + $0x1c] sm:$0xf]
        %v3388 = vld [vmem:[%s3379 + $0x20] sm:$0xf]
        %v3389 = vld [vmem:[%s3379 + $0x24] sm:$0xf]
        %v3390 = vld [vmem:[%s3379 + $0x28] sm:$0xf]
        %v3391 = vld [vmem:[%s3379 + $0x2c] sm:$0xf]
        %v3392 = vld [vmem:[%s3379 + $0x30] sm:$0xf]
        %v3393 = vld [vmem:[%s3379 + $0x34] sm:$0xf]
        %v3394 = vld [vmem:[%s3379 + $0x38] sm:$0xf]
        %v3395 = vld [vmem:[%s3379 + $0x3c] sm:$0xf]
        %v3404 = vunpack.c.l.b16 %v3371
        %v3405 = vunpack.c.l.b16 %v3372
        %v3406 = vunpack.c.l.b16 %v3373
        %v3407 = vunpack.c.l.b16 %v3374
        %v3408 = vunpack.c.l.b16 %v3375
        %v3409 = vunpack.c.l.b16 %v3376
        %v3410 = vunpack.c.l.b16 %v3377
        %v3411 = vunpack.c.l.b16 %v3378
        %v3412 = vrot.slane %v3405, 7
        %v3413 = vsel %vm1759, %v3412, %v3404
        %v3414 = vrot.slane %v3406, 6
        %v3415 = vsel %vm1761, %v3414, %v3413
        %v3416 = vrot.slane %v3407, 5
        %v3417 = vsel %vm1763, %v3416, %v3415
        %v3418 = vrot.slane %v3408, 4
        %v3419 = vsel %vm1765, %v3418, %v3417
        %v3420 = vrot.slane %v3409, 3
        %v3421 = vsel %vm1767, %v3420, %v3419
        %v3422 = vrot.slane %v3410, 2
        %v3423 = vsel %vm1769, %v3422, %v3421
        %v3424 = vrot.slane %v3411, 1
        %v3425 = vsel %vm1771, %v3424, %v3423
        %v3426 = vpack.c.b16 %v3425, %v3425
        %v3444 = vunpack.c.l.b16 %v3380
        %v3445 = vunpack.c.l.b16 %v3381
        %v3446 = vunpack.c.l.b16 %v3382
        %v3447 = vunpack.c.l.b16 %v3383
        %v3448 = vunpack.c.l.b16 %v3384
        %v3449 = vunpack.c.l.b16 %v3385
        %v3450 = vunpack.c.l.b16 %v3386
        %v3451 = vunpack.c.l.b16 %v3387
        %v3452 = vunpack.c.l.b16 %v3388
        %v3453 = vunpack.c.l.b16 %v3389
        %v3454 = vunpack.c.l.b16 %v3390
        %v3455 = vunpack.c.l.b16 %v3391
        %v3456 = vunpack.c.l.b16 %v3392
        %v3457 = vunpack.c.l.b16 %v3393
        %v3458 = vunpack.c.l.b16 %v3394
        %v3459 = vunpack.c.l.b16 %v3395
        %v3460 = vpack.c.b16 %v3445, %v3444
        %v3461 = vpack.c.b16 %v3447, %v3446
        %v3462 = vpack.c.b16 %v3449, %v3448
        %v3463 = vpack.c.b16 %v3451, %v3450
        %v3464 = vpack.c.b16 %v3453, %v3452
        %v3465 = vpack.c.b16 %v3455, %v3454
        %v3466 = vpack.c.b16 %v3457, %v3456
        %v3467 = vpack.c.b16 %v3459, %v3458
        %3476 = vmatprep.subr.bf16.mxu0 0
        %3477 = vmatpush1.bf16.msra.mxu0 %v3460
        %3478 = vmatprep.subr.bf16.mxu0 0
        %3479 = vmatpush1.bf16.msra.mxu0 %v3461
        %3480 = vmatprep.subr.bf16.mxu0 0
        %3481 = vmatpush1.bf16.msra.mxu0 %v3462
        %3482 = vmatprep.subr.bf16.mxu0 0
        %3483 = vmatpush1.bf16.msra.mxu0 %v3463
        %3484 = vmatprep.subr.bf16.mxu0 0
        %3485 = vmatpush1.bf16.msra.mxu0 %v3464
        %3486 = vmatprep.subr.bf16.mxu0 0
        %3487 = vmatpush1.bf16.msra.mxu0 %v3465
        %3488 = vmatprep.subr.bf16.mxu0 0
        %3489 = vmatpush1.bf16.msra.mxu0 %v3466
        %3490 = vmatprep.subr.bf16.mxu0 0
        %3491 = vmatpush1.bf16.msra.mxu0 %v3467
        %3492 = vmatprep.subr.bf16.mxu0 0
        %3493 = vmatpush1.bf16.msra.mxu0 0
        %3494 = vmatprep.subr.bf16.mxu0 0
        %3495 = vmatpush1.bf16.msra.mxu0 0
        %3496 = vmatprep.subr.bf16.mxu0 0
        %3497 = vmatpush1.bf16.msra.mxu0 0
        %3498 = vmatprep.subr.bf16.mxu0 0
        %3499 = vmatpush1.bf16.msra.mxu0 0
        %3500 = vmatprep.subr.bf16.mxu0 0
        %3501 = vmatpush1.bf16.msra.mxu0 0
        %3502 = vmatprep.subr.bf16.mxu0 0
        %3503 = vmatpush1.bf16.msra.mxu0 0
        %3504 = vmatprep.subr.bf16.mxu0 0
        %3505 = vmatpush1.bf16.msra.mxu0 0
        %3506 = vmatprep.subr.bf16.mxu0 0
        %3507 = vmatpush1.bf16.msra.mxu0 0
        %3508 = vmatprep.mubr.bf16.mxu0 0
        %3509 = vmatmul.mubr.bf16.gmra.mrb[0].mxu0 %v3426
        %v3510 = vpop.f32.mrb[0].mxu0
        %v3511 = vadd.f32 0.0, %v3510
        %v3512 = vpop.f32.mrb[0].mxu0
        %v3513 = vpop.f32.mrb[0].mxu0
        %v3514 = vpop.f32.mrb[0].mxu0
        %3515 = vdwg.mxu0
        %v3516 = vadd.f32 %v3370, %v3511
        %v3517 = vmax.f32 %v3516, 0.0
        %v3518 = vpack.c.bf16 %v3517, %v3517
        %v3519 = vld [vmem:[%s9] sm:$0xf]
        %v3520 = vld [vmem:[%s9 + $0x4] sm:$0xf]
        %v3521 = vld [vmem:[%s9 + $0x8] sm:$0xf]
        %v3522 = vld [vmem:[%s9 + $0xc] sm:$0xf]
        %v3523 = vld [vmem:[%s9 + $0x10] sm:$0xf]
        %v3524 = vld [vmem:[%s9 + $0x14] sm:$0xf]
        %v3525 = vld [vmem:[%s9 + $0x18] sm:$0xf]
        %v3526 = vld [vmem:[%s9 + $0x1c] sm:$0xf]
        %v3527 = vld [vmem:[%s10] sm:$0x1]
        %v3529 = vlaneseq
        %v3530 = vshrl.u32 %v3529, 7
        %v3531 = vsub.s32 0, %v3530
        %v3532 = vrot.slane %v3527, %v3531
        %v3542 = vunpack.c.l.b16 %v3519
        %v3543 = vunpack.c.l.b16 %v3520
        %v3544 = vunpack.c.l.b16 %v3521
        %v3545 = vunpack.c.l.b16 %v3522
        %v3546 = vunpack.c.l.b16 %v3523
        %v3547 = vunpack.c.l.b16 %v3524
        %v3548 = vunpack.c.l.b16 %v3525
        %v3549 = vunpack.c.l.b16 %v3526
        %v3550 = vpack.c.b16 %v3543, %v3542
        %v3551 = vpack.c.b16 %v3545, %v3544
        %v3552 = vpack.c.b16 %v3547, %v3546
        %v3553 = vpack.c.b16 %v3549, %v3548
        %v3559 = vsel %vm1959, %v3518, 0
        %3561 = vmatprep.subr.bf16.mxu0 0
        %3562 = vmatpush1.bf16.msra.mxu0 %v3550
        %3563 = vmatprep.subr.bf16.mxu0 0
        %3564 = vmatpush1.bf16.msra.mxu0 %v3551
        %3565 = vmatprep.subr.bf16.mxu0 0
        %3566 = vmatpush1.bf16.msra.mxu0 %v3552
        %3567 = vmatprep.subr.bf16.mxu0 0
        %3568 = vmatpush1.bf16.msra.mxu0 %v3553
        %3569 = vmatprep.subr.bf16.mxu0 0
        %3570 = vmatpush1.bf16.msra.mxu0 0
        %3571 = vmatprep.subr.bf16.mxu0 0
        %3572 = vmatpush1.bf16.msra.mxu0 0
        %3573 = vmatprep.subr.bf16.mxu0 0
        %3574 = vmatpush1.bf16.msra.mxu0 0
        %3575 = vmatprep.subr.bf16.mxu0 0
        %3576 = vmatpush1.bf16.msra.mxu0 0
        %3577 = vmatprep.subr.bf16.mxu0 0
        %3578 = vmatpush1.bf16.msra.mxu0 0
        %3579 = vmatprep.subr.bf16.mxu0 0
        %3580 = vmatpush1.bf16.msra.mxu0 0
        %3581 = vmatprep.subr.bf16.mxu0 0
        %3582 = vmatpush1.bf16.msra.mxu0 0
        %3583 = vmatprep.subr.bf16.mxu0 0
        %3584 = vmatpush1.bf16.msra.mxu0 0
        %3585 = vmatprep.subr.bf16.mxu0 0
        %3586 = vmatpush1.bf16.msra.mxu0 0
        %3587 = vmatprep.subr.bf16.mxu0 0
        %3588 = vmatpush1.bf16.msra.mxu0 0
        %3589 = vmatprep.subr.bf16.mxu0 0
        %3590 = vmatpush1.bf16.msra.mxu0 0
        %3591 = vmatprep.subr.bf16.mxu0 0
        %3592 = vmatpush1.bf16.msra.mxu0 0
        %3593 = vmatprep.mubr.bf16.mxu0 0
        %3594 = vmatmul.mubr.bf16.gmra.mrb[0].mxu0 %v3559
        %v3595 = vpop.f32.mrb[0].mxu0
        %v3596 = vadd.f32 %v3532, %v3595
        %v3597 = vpop.f32.mrb[0].mxu0
        %v3598 = vpop.f32.mrb[0].mxu0
        %v3599 = vpop.f32.mrb[0].mxu0
        %3600 = vdwg.mxu0
        %3601 = vst [vmem:[%s377] sm:$0xff] %v3596
        %s3602 = sand.u32 %s269, 1
        %s3603 = scalar_lea.sflag [#allocation5], %s3602
        %s3604 = sand.u32 %s269, 1
        %s3605 = smul.addr %s3604, 8
        %s3606 = scalar_lea.vmem [#allocation4], %s3605
        // Predicated region
        $region65: #{tpu_custom_call.1} parent=63 // pred_check
          %p3607 = pneg %p279
        $region66: #{tpu_custom_call.1} parent=63 // pred_check_branch
          %3609 = sbr.rel (%p3607) target = $region68
        $region67: #{tpu_custom_call.1} parent=63 // pred_region
          %s3611 = ssub.s32 128, 128
          %3612 = vsyncadd %s3603, %s3611
          %s3613 = smul.addr %s25, 128
          %s3614 = scalar_lea.hbm %s11, %s3613
          %s3616 = sshll.u32 %s3606, 4
          %s3617 = int_to_ptr.vmem [resolvable:$true] %s3616
          %3619 = dma.vmem_to_hbm [thread:$0]  %s3617, 128, %s3614, %s3603
        $region68: #{tpu_custom_call.1} parent=63 // pred_fallthru
          _
      $region64: #{tpu_custom_call.1} parent=5 // pred_fallthru
        _
      %p3620 = scmp.le.s32.totalorder 2, %s20
      // Predicated region
      $region69: #{tpu_custom_call.1} parent=5 // pred_check
        %p3621 = pneg %p3620
      $region70: #{tpu_custom_call.1} parent=5 // pred_check_branch
        %3623 = sbr.rel (%p3621) target = $region72
      $region71: #{tpu_custom_call.1} parent=5 // pred_region
        %s3624 = ssub.s32 %s20, 2
        // Predicated region
        $region73: #{tpu_custom_call.1} parent=71 // pred_check
          %p3625 = pneg %p285
        $region74: #{tpu_custom_call.1} parent=71 // pred_check_branch
          %3627 = sbr.rel (%p3625) target = $region76
        $region75: #{tpu_custom_call.1} parent=71 // pred_region
          %s3628 = sand.u32 %s270, 1
          %s3629 = scalar_lea.sflag [#allocation5], %s3628
          %s3630 = sand.u32 %s270, 1
          %s3631 = smul.addr %s3630, 8
          %s3632 = scalar_lea.vmem [#allocation4], %s3631
          %3633 = dma.done %s3629, 128
        $region76: #{tpu_custom_call.1} parent=71 // pred_fallthru
          _
      $region72: #{tpu_custom_call.1} parent=5 // pred_fallthru
        _
    $region6: #{tpu_custom_call.1} parent=1 // loop_footer
      %s24 = sadd.s32 1, %s20
    $region7: #{tpu_custom_call.1} parent=1 // loop_footer_branch
      %19 = sbr.rel target = $region3
    $region8: #{tpu_custom_call.1} parent=1 // loop_exit
      _
    %3634 = vsyncpa [#allocation5], 1
    %s3635 = scalar_lea.sflag [#allocation5], 1
    %3636 = vsyncpa %s3635, 1

</llo_original>
